<compile_context>
chip_gen: v7x
topology: tpu7x:2x2x1
jax: 0.10.0
libtpu: 0.0.40
codegen_flags: <defaults>
</compile_context>

<pallas_src>
import jax
import jax.numpy as jnp
from jax.experimental import pallas as pl
from jax.experimental.pallas import tpu as pltpu

L = 768            # input sequence length (forced by fc1 in_features = 32 * 768 / 2)
C = 32             # conv output channels
LP = L // 2        # 384, length after MaxPool1d(2, 2)
FLAT = C * LP      # 12288 = fc1 in_features
HID = 512
OUT = 6
OUTP = 128         # lane-padded fc2 width (sliced back to OUT in the wrapper)
CH = 8             # conv channels computed per K-step
TK = CH * LP       # 3072, fc1 K-tile
KT = C // CH       # 4 grid steps
BN_EPS = 1e-5


# ---------------------------------------------------------------------------
# Fused kernel: per K-step recompute CH channels of conv+bn+relu+pool, then
# accumulate their contribution to fc1; last step applies bias+ReLU and fc2.
# ---------------------------------------------------------------------------
def fused_kernel(x_tm1_ref, x_t0_ref, x_t1_ref, x_t2_ref,
                 wt_ref, sc_ref, sh_ref,
                 w1_ref, b1_ref, w2_ref, b2_ref,
                 o_ref, acc_ref):
    k = pl.program_id(0)

    @pl.when(k == 0)
    def _():
        acc_ref[...] = jnp.zeros_like(acc_ref)

    x_tm1 = x_tm1_ref[...]     # (B, LP): x[2j-1] (0 at j==0, conv padding=1)
    x_t0 = x_t0_ref[...]       # (B, LP): x[2j]
    x_t1 = x_t1_ref[...]       # (B, LP): x[2j+1]
    x_t2 = x_t2_ref[...]       # (B, LP): x[2j+2] (0 at j==LP-1, conv padding=1)

    # Recompute this K-tile's CH channels of conv+bn+relu+maxpool on the VPU.
    ys = []
    for cl in range(CH):                       # static unroll
        c = k * CH + cl                        # global channel index
        w0 = wt_ref[c, 0]                      # tap for x[t-1]
        w1t = wt_ref[c, 1]                     # tap for x[t]
        w2t = wt_ref[c, 2]                     # tap for x[t+1]
        s_c = sc_ref[c]                        # folded BN scale
        t_c = sh_ref[c]                        # folded BN shift (conv bias included)
        u = (w0 * x_tm1 + w1t * x_t0 + w2t * x_t1) * s_c + t_c   # bn(conv) at t=2j
        v = (w0 * x_t0 + w1t * x_t1 + w2t * x_t2) * s_c + t_c    # bn(conv) at t=2j+1
        ys.append(jnp.maximum(jnp.maximum(u, v), 0.0))           # maxpool o relu (order-equiv)

    # Channel-major concat matches PyTorch flatten(1) of the (B, C, LP) tensor.
    h_blk = jnp.concatenate(ys, axis=1).astype(jnp.bfloat16)     # (B, TK)

    acc_ref[...] += jnp.dot(h_blk, w1_ref[...],
                            preferred_element_type=jnp.float32)

    @pl.when(k == pl.num_programs(0) - 1)
    def _():
        hid = jnp.maximum(acc_ref[...] + b1_ref[...], 0.0)       # fc1 bias + ReLU
        o_ref[...] = (jnp.dot(hid, w2_ref[...],
                              preferred_element_type=jnp.float32)
                      + b2_ref[...]).astype(o_ref.dtype)         # fc2 (lane-padded)


# ---------------------------------------------------------------------------
# Full forward
# ---------------------------------------------------------------------------
def emotion_cnn_forward(x, p):
    """x: (B, 1, L) float32 -> (B, OUT) float32."""
    B = x.shape[0]

    # Fold BatchNorm running stats and the conv bias into per-channel scale/shift.
    scale = p["gamma"] / jnp.sqrt(p["var"] + BN_EPS)                 # (C,)
    shift = p["b_conv"] * scale + (p["beta"] - p["mean"] * scale)    # (C,)
    wt = p["w_conv"].reshape(C, 3)                                   # (C, 3)

    # Deinterleave the zero-padded signal into the four conv taps needed at the
    # even / odd output positions that MaxPool1d(2,2) pairs up.
    xp = jnp.pad(x[:, 0, :], ((0, 0), (1, 1)))                       # (B, L+2)
    x_tm1 = xp[:, 0:L:2]          # x[2j-1]
    x_t0 = xp[:, 1:L + 1:2]       # x[2j]
    x_t1 = xp[:, 2:L + 2:2]       # x[2j+1]
    x_t2 = xp[:, 3:L + 2:2]       # x[2j+2]

    w1_bf16 = p["w_fc1"].astype(jnp.bfloat16)                        # bf16 weight stream
    w2_pad = jnp.pad(p["w_fc2"], ((0, 0), (0, OUTP - OUT)))          # lane-dense fc2
    b2_pad = jnp.pad(p["b_fc2"], ((0, 0), (0, OUTP - OUT)))

    out = pl.pallas_call(
        fused_kernel,
        out_shape=jax.ShapeDtypeStruct((B, OUTP), jnp.float32),
        grid_spec=pltpu.PrefetchScalarGridSpec(
            num_scalar_prefetch=0,
            grid=(KT,),
            in_specs=[
                pl.BlockSpec((B, LP), lambda k: (0, 0)),                # x[2j-1]
                pl.BlockSpec((B, LP), lambda k: (0, 0)),                # x[2j]
                pl.BlockSpec((B, LP), lambda k: (0, 0)),                # x[2j+1]
                pl.BlockSpec((B, LP), lambda k: (0, 0)),                # x[2j+2]
                pl.BlockSpec(memory_space=pltpu.MemorySpace.SMEM),      # conv taps (C,3)
                pl.BlockSpec(memory_space=pltpu.MemorySpace.SMEM),      # bn scale (C,)
                pl.BlockSpec(memory_space=pltpu.MemorySpace.SMEM),      # bn shift (C,)
                pl.BlockSpec((TK, HID), lambda k: (k, 0)),              # w_fc1 (bf16)
                pl.BlockSpec((1, HID), lambda k: (0, 0)),               # b_fc1
                pl.BlockSpec((HID, OUTP), lambda k: (0, 0)),            # w_fc2 (padded)
                pl.BlockSpec((1, OUTP), lambda k: (0, 0)),              # b_fc2 (padded)
            ],
            out_specs=pl.BlockSpec((B, OUTP), lambda k: (0, 0)),
            scratch_shapes=[pltpu.VMEM((B, HID), jnp.float32)],
        ),
        compiler_params=pltpu.CompilerParams(
            dimension_semantics=("arbitrary",)),
    )(x_tm1, x_t0, x_t1, x_t2, wt, scale, shift,
      w1_bf16, p["b_fc1"], w2_pad, b2_pad)

    return out[:, :OUT]


# ---------------------------------------------------------------------------
# Pure-JAX float32 reference for validation
# ---------------------------------------------------------------------------
def reference_forward(x, p):
    B = x.shape[0]
    xp = jnp.pad(x, ((0, 0), (0, 0), (1, 1)))                        # conv padding=1
    win = jnp.stack([xp[:, 0, 0:L], xp[:, 0, 1:L + 1], xp[:, 0, 2:L + 2]], axis=-1)
    conv = jnp.einsum("blk,ck->bcl", win, p["w_conv"][:, 0, :]) + p["b_conv"][None, :, None]
    scale = p["gamma"] / jnp.sqrt(p["var"] + BN_EPS)
    shift = p["beta"] - p["mean"] * scale
    y = jnp.maximum(conv * scale[None, :, None] + shift[None, :, None], 0.0)
    y = y.reshape(B, C, LP, 2).max(axis=-1)                          # MaxPool1d(2,2)
    h = y.reshape(B, FLAT)                                           # flatten(1)
    h = jnp.maximum(h @ p["w_fc1"] + p["b_fc1"][0], 0.0)
    return h @ p["w_fc2"] + p["b_fc2"][0]


def init_params(key):
    ks = jax.random.split(key, 10)
    return {
        "w_conv": 0.1 * jax.random.normal(ks[0], (C, 1, 3), jnp.float32),
        "b_conv": 0.1 * jax.random.normal(ks[1], (C,), jnp.float32),
        "gamma": 1.0 + 0.1 * jax.random.normal(ks[2], (C,), jnp.float32),
        "beta": 0.1 * jax.random.normal(ks[3], (C,), jnp.float32),
        "mean": 0.1 * jax.random.normal(ks[4], (C,), jnp.float32),
        "var": jnp.abs(1.0 + 0.1 * jax.random.normal(ks[5], (C,), jnp.float32)),
        # stored transposed vs PyTorch: (in, out) so the kernel does h @ W
        "w_fc1": 0.01 * jax.random.normal(ks[6], (FLAT, HID), jnp.float32),
        "b_fc1": 0.01 * jax.random.normal(ks[7], (1, HID), jnp.float32),
        "w_fc2": 0.01 * jax.random.normal(ks[8], (HID, OUT), jnp.float32),
        "b_fc2": 0.01 * jax.random.normal(ks[9], (1, OUT), jnp.float32),
    }


if __name__ == "__main__":
    key = jax.random.PRNGKey(0)
    pkey, xkey = jax.random.split(key)
    params = init_params(pkey)

    B = 2
    x = jax.random.normal(xkey, (B, 1, L), jnp.float32)              # NCL like PyTorch

    out = emotion_cnn_forward(x, params)
    out = jax.block_until_ready(out)
    assert out.shape == (B, OUT), out.shape

    ref = jax.block_until_ready(reference_forward(x, params))
    # Looser tolerance because fc1 is evaluated with a bf16 weight/activation stream
    # (f32 accumulation); everything else is f32.
    assert jnp.allclose(out, ref, rtol=2e-2, atol=1e-2), (out, ref)

    print("KERNEL_OK")
</pallas_src>

<mosaic_0001>
module attributes {stable_mosaic.version = 11 : i64} {
  func.func @fused_kernel(%arg0: i32, %arg1: memref<2x384xf32, #tpu.memory_space<vmem>>, %arg2: memref<2x384xf32, #tpu.memory_space<vmem>>, %arg3: memref<2x384xf32, #tpu.memory_space<vmem>>, %arg4: memref<2x384xf32, #tpu.memory_space<vmem>>, %arg5: memref<32x3xf32, #tpu.memory_space<smem>>, %arg6: memref<32xf32, #tpu.memory_space<smem>>, %arg7: memref<32xf32, #tpu.memory_space<smem>>, %arg8: memref<3072x512xbf16, #tpu.memory_space<vmem>>, %arg9: memref<1x512xf32, #tpu.memory_space<vmem>>, %arg10: memref<512x128xf32, #tpu.memory_space<vmem>>, %arg11: memref<1x128xf32, #tpu.memory_space<vmem>>, %arg12: memref<2x128xf32, #tpu.memory_space<vmem>>, %arg13: memref<2x512xf32, #tpu.memory_space<vmem>>) attributes {dimension_semantics = [#tpu.dimension_semantics<arbitrary>], iteration_bounds = array<i64: 4>, scalar_prefetch = 0 : i64, scratch_operands = 1 : i64, tpu.core_type = #tpu.core_type<tc>, window_params = [{pipeline_mode = #tpu.pipeline_mode<synchronous>, transform_indices = @transform_0, window_bounds = array<i64: 2, 384>}, {pipeline_mode = #tpu.pipeline_mode<synchronous>, transform_indices = @transform_1, window_bounds = array<i64: 2, 384>}, {pipeline_mode = #tpu.pipeline_mode<synchronous>, transform_indices = @transform_2, window_bounds = array<i64: 2, 384>}, {pipeline_mode = #tpu.pipeline_mode<synchronous>, transform_indices = @transform_3, window_bounds = array<i64: 2, 384>}, {transform_indices = @transform_4, window_bounds = array<i64: 32, 3>}, {transform_indices = @transform_5, window_bounds = array<i64: 32>}, {transform_indices = @transform_6, window_bounds = array<i64: 32>}, {transform_indices = @transform_7, window_bounds = array<i64: 3072, 512>}, {pipeline_mode = #tpu.pipeline_mode<synchronous>, transform_indices = @transform_8, window_bounds = array<i64: 1, 512>}, {pipeline_mode = #tpu.pipeline_mode<synchronous>, transform_indices = @transform_9, window_bounds = array<i64: 512, 128>}, {pipeline_mode = #tpu.pipeline_mode<synchronous>, transform_indices = @transform_10, window_bounds = array<i64: 1, 128>}, {pipeline_mode = #tpu.pipeline_mode<synchronous>, transform_indices = @transform_11, window_bounds = array<i64: 2, 128>}]} {
    %c0_i32 = arith.constant 0 : i32
    %0 = arith.cmpi eq, %arg0, %c0_i32 : i32
    %1 = arith.extui %0 : i1 to i32
    %c0_i32_0 = arith.constant 0 : i32
    %2 = arith.cmpi ne, %1, %c0_i32_0 : i32
    scf.if %2 {
      %cst_54 = arith.constant 0.000000e+00 : f32
      %329 = vector.broadcast %cst_54 : f32 to vector<2x512xf32>
      %c0_55 = arith.constant 0 : index
      %c0_56 = arith.constant 0 : index
      %330 = vector.load %arg13[%c0_55, %c0_56] : memref<2x512xf32, #tpu.memory_space<vmem>>, vector<2x512xf32>
      tpu.vector_store %arg13[%c0_55, %c0_56], %329 {strides = array<i32>} : memref<2x512xf32, #tpu.memory_space<vmem>>, vector<2x512xf32>,
    } else {
    }
    %c0 = arith.constant 0 : index
    %c0_1 = arith.constant 0 : index
    %3 = vector.load %arg1[%c0, %c0_1] : memref<2x384xf32, #tpu.memory_space<vmem>>, vector<2x384xf32>
    %c0_2 = arith.constant 0 : index
    %c0_3 = arith.constant 0 : index
    %4 = vector.load %arg2[%c0_2, %c0_3] : memref<2x384xf32, #tpu.memory_space<vmem>>, vector<2x384xf32>
    %c0_4 = arith.constant 0 : index
    %c0_5 = arith.constant 0 : index
    %5 = vector.load %arg3[%c0_4, %c0_5] : memref<2x384xf32, #tpu.memory_space<vmem>>, vector<2x384xf32>
    %c0_6 = arith.constant 0 : index
    %c0_7 = arith.constant 0 : index
    %6 = vector.load %arg4[%c0_6, %c0_7] : memref<2x384xf32, #tpu.memory_space<vmem>>, vector<2x384xf32>
    %c8_i32 = arith.constant 8 : i32
    %7 = arith.muli %arg0, %c8_i32 : i32
    %c0_i32_8 = arith.constant 0 : i32
    %8 = arith.addi %7, %c0_i32_8 : i32
    %9 = arith.index_cast %8 : i32 to index
    %c0_9 = arith.constant 0 : index
    %10 = memref.load %arg5[%9, %c0_9] : memref<32x3xf32, #tpu.memory_space<smem>>
    %11 = arith.index_cast %8 : i32 to index
    %c1 = arith.constant 1 : index
    %12 = memref.load %arg5[%11, %c1] : memref<32x3xf32, #tpu.memory_space<smem>>
    %13 = arith.index_cast %8 : i32 to index
    %c2 = arith.constant 2 : index
    %14 = memref.load %arg5[%13, %c2] : memref<32x3xf32, #tpu.memory_space<smem>>
    %15 = arith.index_cast %8 : i32 to index
    %16 = memref.load %arg6[%15] : memref<32xf32, #tpu.memory_space<smem>>
    %17 = arith.index_cast %8 : i32 to index
    %18 = memref.load %arg7[%17] : memref<32xf32, #tpu.memory_space<smem>>
    %19 = vector.broadcast %10 : f32 to vector<2x384xf32>
    %20 = arith.mulf %19, %3 : vector<2x384xf32>
    %21 = vector.broadcast %12 : f32 to vector<2x384xf32>
    %22 = arith.mulf %21, %4 : vector<2x384xf32>
    %23 = arith.addf %20, %22 : vector<2x384xf32>
    %24 = vector.broadcast %14 : f32 to vector<2x384xf32>
    %25 = arith.mulf %24, %5 : vector<2x384xf32>
    %26 = arith.addf %23, %25 : vector<2x384xf32>
    %27 = vector.broadcast %16 : f32 to vector<2x384xf32>
    %28 = arith.mulf %26, %27 : vector<2x384xf32>
    %29 = vector.broadcast %18 : f32 to vector<2x384xf32>
    %30 = arith.addf %28, %29 : vector<2x384xf32>
    %31 = vector.broadcast %10 : f32 to vector<2x384xf32>
    %32 = arith.mulf %31, %4 : vector<2x384xf32>
    %33 = vector.broadcast %12 : f32 to vector<2x384xf32>
    %34 = arith.mulf %33, %5 : vector<2x384xf32>
    %35 = arith.addf %32, %34 : vector<2x384xf32>
    %36 = vector.broadcast %14 : f32 to vector<2x384xf32>
    %37 = arith.mulf %36, %6 : vector<2x384xf32>
    %38 = arith.addf %35, %37 : vector<2x384xf32>
    %39 = vector.broadcast %16 : f32 to vector<2x384xf32>
    %40 = arith.mulf %38, %39 : vector<2x384xf32>
    %41 = vector.broadcast %18 : f32 to vector<2x384xf32>
    %42 = arith.addf %40, %41 : vector<2x384xf32>
    %43 = arith.maximumf %30, %42 : vector<2x384xf32>
    %cst = arith.constant 0.000000e+00 : f32
    %44 = vector.broadcast %cst : f32 to vector<2x384xf32>
    %45 = arith.maximumf %43, %44 : vector<2x384xf32>
    %c8_i32_10 = arith.constant 8 : i32
    %46 = arith.muli %arg0, %c8_i32_10 : i32
    %c1_i32 = arith.constant 1 : i32
    %47 = arith.addi %46, %c1_i32 : i32
    %48 = arith.index_cast %47 : i32 to index
    %c0_11 = arith.constant 0 : index
    %49 = memref.load %arg5[%48, %c0_11] : memref<32x3xf32, #tpu.memory_space<smem>>
    %50 = arith.index_cast %47 : i32 to index
    %c1_12 = arith.constant 1 : index
    %51 = memref.load %arg5[%50, %c1_12] : memref<32x3xf32, #tpu.memory_space<smem>>
    %52 = arith.index_cast %47 : i32 to index
    %c2_13 = arith.constant 2 : index
    %53 = memref.load %arg5[%52, %c2_13] : memref<32x3xf32, #tpu.memory_space<smem>>
    %54 = arith.index_cast %47 : i32 to index
    %55 = memref.load %arg6[%54] : memref<32xf32, #tpu.memory_space<smem>>
    %56 = arith.index_cast %47 : i32 to index
    %57 = memref.load %arg7[%56] : memref<32xf32, #tpu.memory_space<smem>>
    %58 = vector.broadcast %49 : f32 to vector<2x384xf32>
    %59 = arith.mulf %58, %3 : vector<2x384xf32>
    %60 = vector.broadcast %51 : f32 to vector<2x384xf32>
    %61 = arith.mulf %60, %4 : vector<2x384xf32>
    %62 = arith.addf %59, %61 : vector<2x384xf32>
    %63 = vector.broadcast %53 : f32 to vector<2x384xf32>
    %64 = arith.mulf %63, %5 : vector<2x384xf32>
    %65 = arith.addf %62, %64 : vector<2x384xf32>
    %66 = vector.broadcast %55 : f32 to vector<2x384xf32>
    %67 = arith.mulf %65, %66 : vector<2x384xf32>
    %68 = vector.broadcast %57 : f32 to vector<2x384xf32>
    %69 = arith.addf %67, %68 : vector<2x384xf32>
    %70 = vector.broadcast %49 : f32 to vector<2x384xf32>
    %71 = arith.mulf %70, %4 : vector<2x384xf32>
    %72 = vector.broadcast %51 : f32 to vector<2x384xf32>
    %73 = arith.mulf %72, %5 : vector<2x384xf32>
    %74 = arith.addf %71, %73 : vector<2x384xf32>
    %75 = vector.broadcast %53 : f32 to vector<2x384xf32>
    %76 = arith.mulf %75, %6 : vector<2x384xf32>
    %77 = arith.addf %74, %76 : vector<2x384xf32>
    %78 = vector.broadcast %55 : f32 to vector<2x384xf32>
    %79 = arith.mulf %77, %78 : vector<2x384xf32>
    %80 = vector.broadcast %57 : f32 to vector<2x384xf32>
    %81 = arith.addf %79, %80 : vector<2x384xf32>
    %82 = arith.maximumf %69, %81 : vector<2x384xf32>
    %cst_14 = arith.constant 0.000000e+00 : f32
    %83 = vector.broadcast %cst_14 : f32 to vector<2x384xf32>
    %84 = arith.maximumf %82, %83 : vector<2x384xf32>
    %c8_i32_15 = arith.constant 8 : i32
    %85 = arith.muli %arg0, %c8_i32_15 : i32
    %c2_i32 = arith.constant 2 : i32
    %86 = arith.addi %85, %c2_i32 : i32
    %87 = arith.index_cast %86 : i32 to index
    %c0_16 = arith.constant 0 : index
    %88 = memref.load %arg5[%87, %c0_16] : memref<32x3xf32, #tpu.memory_space<smem>>
    %89 = arith.index_cast %86 : i32 to index
    %c1_17 = arith.constant 1 : index
    %90 = memref.load %arg5[%89, %c1_17] : memref<32x3xf32, #tpu.memory_space<smem>>
    %91 = arith.index_cast %86 : i32 to index
    %c2_18 = arith.constant 2 : index
    %92 = memref.load %arg5[%91, %c2_18] : memref<32x3xf32, #tpu.memory_space<smem>>
    %93 = arith.index_cast %86 : i32 to index
    %94 = memref.load %arg6[%93] : memref<32xf32, #tpu.memory_space<smem>>
    %95 = arith.index_cast %86 : i32 to index
    %96 = memref.load %arg7[%95] : memref<32xf32, #tpu.memory_space<smem>>
    %97 = vector.broadcast %88 : f32 to vector<2x384xf32>
    %98 = arith.mulf %97, %3 : vector<2x384xf32>
    %99 = vector.broadcast %90 : f32 to vector<2x384xf32>
    %100 = arith.mulf %99, %4 : vector<2x384xf32>
    %101 = arith.addf %98, %100 : vector<2x384xf32>
    %102 = vector.broadcast %92 : f32 to vector<2x384xf32>
    %103 = arith.mulf %102, %5 : vector<2x384xf32>
    %104 = arith.addf %101, %103 : vector<2x384xf32>
    %105 = vector.broadcast %94 : f32 to vector<2x384xf32>
    %106 = arith.mulf %104, %105 : vector<2x384xf32>
    %107 = vector.broadcast %96 : f32 to vector<2x384xf32>
    %108 = arith.addf %106, %107 : vector<2x384xf32>
    %109 = vector.broadcast %88 : f32 to vector<2x384xf32>
    %110 = arith.mulf %109, %4 : vector<2x384xf32>
    %111 = vector.broadcast %90 : f32 to vector<2x384xf32>
    %112 = arith.mulf %111, %5 : vector<2x384xf32>
    %113 = arith.addf %110, %112 : vector<2x384xf32>
    %114 = vector.broadcast %92 : f32 to vector<2x384xf32>
    %115 = arith.mulf %114, %6 : vector<2x384xf32>
    %116 = arith.addf %113, %115 : vector<2x384xf32>
    %117 = vector.broadcast %94 : f32 to vector<2x384xf32>
    %118 = arith.mulf %116, %117 : vector<2x384xf32>
    %119 = vector.broadcast %96 : f32 to vector<2x384xf32>
    %120 = arith.addf %118, %119 : vector<2x384xf32>
    %121 = arith.maximumf %108, %120 : vector<2x384xf32>
    %cst_19 = arith.constant 0.000000e+00 : f32
    %122 = vector.broadcast %cst_19 : f32 to vector<2x384xf32>
    %123 = arith.maximumf %121, %122 : vector<2x384xf32>
    %c8_i32_20 = arith.constant 8 : i32
    %124 = arith.muli %arg0, %c8_i32_20 : i32
    %c3_i32 = arith.constant 3 : i32
    %125 = arith.addi %124, %c3_i32 : i32
    %126 = arith.index_cast %125 : i32 to index
    %c0_21 = arith.constant 0 : index
    %127 = memref.load %arg5[%126, %c0_21] : memref<32x3xf32, #tpu.memory_space<smem>>
    %128 = arith.index_cast %125 : i32 to index
    %c1_22 = arith.constant 1 : index
    %129 = memref.load %arg5[%128, %c1_22] : memref<32x3xf32, #tpu.memory_space<smem>>
    %130 = arith.index_cast %125 : i32 to index
    %c2_23 = arith.constant 2 : index
    %131 = memref.load %arg5[%130, %c2_23] : memref<32x3xf32, #tpu.memory_space<smem>>
    %132 = arith.index_cast %125 : i32 to index
    %133 = memref.load %arg6[%132] : memref<32xf32, #tpu.memory_space<smem>>
    %134 = arith.index_cast %125 : i32 to index
    %135 = memref.load %arg7[%134] : memref<32xf32, #tpu.memory_space<smem>>
    %136 = vector.broadcast %127 : f32 to vector<2x384xf32>
    %137 = arith.mulf %136, %3 : vector<2x384xf32>
    %138 = vector.broadcast %129 : f32 to vector<2x384xf32>
    %139 = arith.mulf %138, %4 : vector<2x384xf32>
    %140 = arith.addf %137, %139 : vector<2x384xf32>
    %141 = vector.broadcast %131 : f32 to vector<2x384xf32>
    %142 = arith.mulf %141, %5 : vector<2x384xf32>
    %143 = arith.addf %140, %142 : vector<2x384xf32>
    %144 = vector.broadcast %133 : f32 to vector<2x384xf32>
    %145 = arith.mulf %143, %144 : vector<2x384xf32>
    %146 = vector.broadcast %135 : f32 to vector<2x384xf32>
    %147 = arith.addf %145, %146 : vector<2x384xf32>
    %148 = vector.broadcast %127 : f32 to vector<2x384xf32>
    %149 = arith.mulf %148, %4 : vector<2x384xf32>
    %150 = vector.broadcast %129 : f32 to vector<2x384xf32>
    %151 = arith.mulf %150, %5 : vector<2x384xf32>
    %152 = arith.addf %149, %151 : vector<2x384xf32>
    %153 = vector.broadcast %131 : f32 to vector<2x384xf32>
    %154 = arith.mulf %153, %6 : vector<2x384xf32>
    %155 = arith.addf %152, %154 : vector<2x384xf32>
    %156 = vector.broadcast %133 : f32 to vector<2x384xf32>
    %157 = arith.mulf %155, %156 : vector<2x384xf32>
    %158 = vector.broadcast %135 : f32 to vector<2x384xf32>
    %159 = arith.addf %157, %158 : vector<2x384xf32>
    %160 = arith.maximumf %147, %159 : vector<2x384xf32>
    %cst_24 = arith.constant 0.000000e+00 : f32
    %161 = vector.broadcast %cst_24 : f32 to vector<2x384xf32>
    %162 = arith.maximumf %160, %161 : vector<2x384xf32>
    %c8_i32_25 = arith.constant 8 : i32
    %163 = arith.muli %arg0, %c8_i32_25 : i32
    %c4_i32 = arith.constant 4 : i32
    %164 = arith.addi %163, %c4_i32 : i32
    %165 = arith.index_cast %164 : i32 to index
    %c0_26 = arith.constant 0 : index
    %166 = memref.load %arg5[%165, %c0_26] : memref<32x3xf32, #tpu.memory_space<smem>>
    %167 = arith.index_cast %164 : i32 to index
    %c1_27 = arith.constant 1 : index
    %168 = memref.load %arg5[%167, %c1_27] : memref<32x3xf32, #tpu.memory_space<smem>>
    %169 = arith.index_cast %164 : i32 to index
    %c2_28 = arith.constant 2 : index
    %170 = memref.load %arg5[%169, %c2_28] : memref<32x3xf32, #tpu.memory_space<smem>>
    %171 = arith.index_cast %164 : i32 to index
    %172 = memref.load %arg6[%171] : memref<32xf32, #tpu.memory_space<smem>>
    %173 = arith.index_cast %164 : i32 to index
    %174 = memref.load %arg7[%173] : memref<32xf32, #tpu.memory_space<smem>>
    %175 = vector.broadcast %166 : f32 to vector<2x384xf32>
    %176 = arith.mulf %175, %3 : vector<2x384xf32>
    %177 = vector.broadcast %168 : f32 to vector<2x384xf32>
    %178 = arith.mulf %177, %4 : vector<2x384xf32>
    %179 = arith.addf %176, %178 : vector<2x384xf32>
    %180 = vector.broadcast %170 : f32 to vector<2x384xf32>
    %181 = arith.mulf %180, %5 : vector<2x384xf32>
    %182 = arith.addf %179, %181 : vector<2x384xf32>
    %183 = vector.broadcast %172 : f32 to vector<2x384xf32>
    %184 = arith.mulf %182, %183 : vector<2x384xf32>
    %185 = vector.broadcast %174 : f32 to vector<2x384xf32>
    %186 = arith.addf %184, %185 : vector<2x384xf32>
    %187 = vector.broadcast %166 : f32 to vector<2x384xf32>
    %188 = arith.mulf %187, %4 : vector<2x384xf32>
    %189 = vector.broadcast %168 : f32 to vector<2x384xf32>
    %190 = arith.mulf %189, %5 : vector<2x384xf32>
    %191 = arith.addf %188, %190 : vector<2x384xf32>
    %192 = vector.broadcast %170 : f32 to vector<2x384xf32>
    %193 = arith.mulf %192, %6 : vector<2x384xf32>
    %194 = arith.addf %191, %193 : vector<2x384xf32>
    %195 = vector.broadcast %172 : f32 to vector<2x384xf32>
    %196 = arith.mulf %194, %195 : vector<2x384xf32>
    %197 = vector.broadcast %174 : f32 to vector<2x384xf32>
    %198 = arith.addf %196, %197 : vector<2x384xf32>
    %199 = arith.maximumf %186, %198 : vector<2x384xf32>
    %cst_29 = arith.constant 0.000000e+00 : f32
    %200 = vector.broadcast %cst_29 : f32 to vector<2x384xf32>
    %201 = arith.maximumf %199, %200 : vector<2x384xf32>
    %c8_i32_30 = arith.constant 8 : i32
    %202 = arith.muli %arg0, %c8_i32_30 : i32
    %c5_i32 = arith.constant 5 : i32
    %203 = arith.addi %202, %c5_i32 : i32
    %204 = arith.index_cast %203 : i32 to index
    %c0_31 = arith.constant 0 : index
    %205 = memref.load %arg5[%204, %c0_31] : memref<32x3xf32, #tpu.memory_space<smem>>
    %206 = arith.index_cast %203 : i32 to index
    %c1_32 = arith.constant 1 : index
    %207 = memref.load %arg5[%206, %c1_32] : memref<32x3xf32, #tpu.memory_space<smem>>
    %208 = arith.index_cast %203 : i32 to index
    %c2_33 = arith.constant 2 : index
    %209 = memref.load %arg5[%208, %c2_33] : memref<32x3xf32, #tpu.memory_space<smem>>
    %210 = arith.index_cast %203 : i32 to index
    %211 = memref.load %arg6[%210] : memref<32xf32, #tpu.memory_space<smem>>
    %212 = arith.index_cast %203 : i32 to index
    %213 = memref.load %arg7[%212] : memref<32xf32, #tpu.memory_space<smem>>
    %214 = vector.broadcast %205 : f32 to vector<2x384xf32>
    %215 = arith.mulf %214, %3 : vector<2x384xf32>
    %216 = vector.broadcast %207 : f32 to vector<2x384xf32>
    %217 = arith.mulf %216, %4 : vector<2x384xf32>
    %218 = arith.addf %215, %217 : vector<2x384xf32>
    %219 = vector.broadcast %209 : f32 to vector<2x384xf32>
    %220 = arith.mulf %219, %5 : vector<2x384xf32>
    %221 = arith.addf %218, %220 : vector<2x384xf32>
    %222 = vector.broadcast %211 : f32 to vector<2x384xf32>
    %223 = arith.mulf %221, %222 : vector<2x384xf32>
    %224 = vector.broadcast %213 : f32 to vector<2x384xf32>
    %225 = arith.addf %223, %224 : vector<2x384xf32>
    %226 = vector.broadcast %205 : f32 to vector<2x384xf32>
    %227 = arith.mulf %226, %4 : vector<2x384xf32>
    %228 = vector.broadcast %207 : f32 to vector<2x384xf32>
    %229 = arith.mulf %228, %5 : vector<2x384xf32>
    %230 = arith.addf %227, %229 : vector<2x384xf32>
    %231 = vector.broadcast %209 : f32 to vector<2x384xf32>
    %232 = arith.mulf %231, %6 : vector<2x384xf32>
    %233 = arith.addf %230, %232 : vector<2x384xf32>
    %234 = vector.broadcast %211 : f32 to vector<2x384xf32>
    %235 = arith.mulf %233, %234 : vector<2x384xf32>
    %236 = vector.broadcast %213 : f32 to vector<2x384xf32>
    %237 = arith.addf %235, %236 : vector<2x384xf32>
    %238 = arith.maximumf %225, %237 : vector<2x384xf32>
    %cst_34 = arith.constant 0.000000e+00 : f32
    %239 = vector.broadcast %cst_34 : f32 to vector<2x384xf32>
    %240 = arith.maximumf %238, %239 : vector<2x384xf32>
    %c8_i32_35 = arith.constant 8 : i32
    %241 = arith.muli %arg0, %c8_i32_35 : i32
    %c6_i32 = arith.constant 6 : i32
    %242 = arith.addi %241, %c6_i32 : i32
    %243 = arith.index_cast %242 : i32 to index
    %c0_36 = arith.constant 0 : index
    %244 = memref.load %arg5[%243, %c0_36] : memref<32x3xf32, #tpu.memory_space<smem>>
    %245 = arith.index_cast %242 : i32 to index
    %c1_37 = arith.constant 1 : index
    %246 = memref.load %arg5[%245, %c1_37] : memref<32x3xf32, #tpu.memory_space<smem>>
    %247 = arith.index_cast %242 : i32 to index
    %c2_38 = arith.constant 2 : index
    %248 = memref.load %arg5[%247, %c2_38] : memref<32x3xf32, #tpu.memory_space<smem>>
    %249 = arith.index_cast %242 : i32 to index
    %250 = memref.load %arg6[%249] : memref<32xf32, #tpu.memory_space<smem>>
    %251 = arith.index_cast %242 : i32 to index
    %252 = memref.load %arg7[%251] : memref<32xf32, #tpu.memory_space<smem>>
    %253 = vector.broadcast %244 : f32 to vector<2x384xf32>
    %254 = arith.mulf %253, %3 : vector<2x384xf32>
    %255 = vector.broadcast %246 : f32 to vector<2x384xf32>
    %256 = arith.mulf %255, %4 : vector<2x384xf32>
    %257 = arith.addf %254, %256 : vector<2x384xf32>
    %258 = vector.broadcast %248 : f32 to vector<2x384xf32>
    %259 = arith.mulf %258, %5 : vector<2x384xf32>
    %260 = arith.addf %257, %259 : vector<2x384xf32>
    %261 = vector.broadcast %250 : f32 to vector<2x384xf32>
    %262 = arith.mulf %260, %261 : vector<2x384xf32>
    %263 = vector.broadcast %252 : f32 to vector<2x384xf32>
    %264 = arith.addf %262, %263 : vector<2x384xf32>
    %265 = vector.broadcast %244 : f32 to vector<2x384xf32>
    %266 = arith.mulf %265, %4 : vector<2x384xf32>
    %267 = vector.broadcast %246 : f32 to vector<2x384xf32>
    %268 = arith.mulf %267, %5 : vector<2x384xf32>
    %269 = arith.addf %266, %268 : vector<2x384xf32>
    %270 = vector.broadcast %248 : f32 to vector<2x384xf32>
    %271 = arith.mulf %270, %6 : vector<2x384xf32>
    %272 = arith.addf %269, %271 : vector<2x384xf32>
    %273 = vector.broadcast %250 : f32 to vector<2x384xf32>
    %274 = arith.mulf %272, %273 : vector<2x384xf32>
    %275 = vector.broadcast %252 : f32 to vector<2x384xf32>
    %276 = arith.addf %274, %275 : vector<2x384xf32>
    %277 = arith.maximumf %264, %276 : vector<2x384xf32>
    %cst_39 = arith.constant 0.000000e+00 : f32
    %278 = vector.broadcast %cst_39 : f32 to vector<2x384xf32>
    %279 = arith.maximumf %277, %278 : vector<2x384xf32>
    %c8_i32_40 = arith.constant 8 : i32
    %280 = arith.muli %arg0, %c8_i32_40 : i32
    %c7_i32 = arith.constant 7 : i32
    %281 = arith.addi %280, %c7_i32 : i32
    %282 = arith.index_cast %281 : i32 to index
    %c0_41 = arith.constant 0 : index
    %283 = memref.load %arg5[%282, %c0_41] : memref<32x3xf32, #tpu.memory_space<smem>>
    %284 = arith.index_cast %281 : i32 to index
    %c1_42 = arith.constant 1 : index
    %285 = memref.load %arg5[%284, %c1_42] : memref<32x3xf32, #tpu.memory_space<smem>>
    %286 = arith.index_cast %281 : i32 to index
    %c2_43 = arith.constant 2 : index
    %287 = memref.load %arg5[%286, %c2_43] : memref<32x3xf32, #tpu.memory_space<smem>>
    %288 = arith.index_cast %281 : i32 to index
    %289 = memref.load %arg6[%288] : memref<32xf32, #tpu.memory_space<smem>>
    %290 = arith.index_cast %281 : i32 to index
    %291 = memref.load %arg7[%290] : memref<32xf32, #tpu.memory_space<smem>>
    %292 = vector.broadcast %283 : f32 to vector<2x384xf32>
    %293 = arith.mulf %292, %3 : vector<2x384xf32>
    %294 = vector.broadcast %285 : f32 to vector<2x384xf32>
    %295 = arith.mulf %294, %4 : vector<2x384xf32>
    %296 = arith.addf %293, %295 : vector<2x384xf32>
    %297 = vector.broadcast %287 : f32 to vector<2x384xf32>
    %298 = arith.mulf %297, %5 : vector<2x384xf32>
    %299 = arith.addf %296, %298 : vector<2x384xf32>
    %300 = vector.broadcast %289 : f32 to vector<2x384xf32>
    %301 = arith.mulf %299, %300 : vector<2x384xf32>
    %302 = vector.broadcast %291 : f32 to vector<2x384xf32>
    %303 = arith.addf %301, %302 : vector<2x384xf32>
    %304 = vector.broadcast %283 : f32 to vector<2x384xf32>
    %305 = arith.mulf %304, %4 : vector<2x384xf32>
    %306 = vector.broadcast %285 : f32 to vector<2x384xf32>
    %307 = arith.mulf %306, %5 : vector<2x384xf32>
    %308 = arith.addf %305, %307 : vector<2x384xf32>
    %309 = vector.broadcast %287 : f32 to vector<2x384xf32>
    %310 = arith.mulf %309, %6 : vector<2x384xf32>
    %311 = arith.addf %308, %310 : vector<2x384xf32>
    %312 = vector.broadcast %289 : f32 to vector<2x384xf32>
    %313 = arith.mulf %311, %312 : vector<2x384xf32>
    %314 = vector.broadcast %291 : f32 to vector<2x384xf32>
    %315 = arith.addf %313, %314 : vector<2x384xf32>
    %316 = arith.maximumf %303, %315 : vector<2x384xf32>
    %cst_44 = arith.constant 0.000000e+00 : f32
    %317 = vector.broadcast %cst_44 : f32 to vector<2x384xf32>
    %318 = arith.maximumf %316, %317 : vector<2x384xf32>
    %319 = tpu.concatenate %45, %84, %123, %162, %201, %240, %279, %318 in 1 : vector<2x384xf32>, vector<2x384xf32>, vector<2x384xf32>, vector<2x384xf32>, vector<2x384xf32>, vector<2x384xf32>, vector<2x384xf32>, vector<2x384xf32> -> vector<2x3072xf32>
    %320 = arith.truncf %319 : vector<2x3072xf32> to vector<2x3072xbf16>
    %c0_45 = arith.constant 0 : index
    %c0_46 = arith.constant 0 : index
    %321 = vector.load %arg13[%c0_45, %c0_46] : memref<2x512xf32, #tpu.memory_space<vmem>>, vector<2x512xf32>
    %c0_47 = arith.constant 0 : index
    %c0_48 = arith.constant 0 : index
    %322 = vector.load %arg8[%c0_47, %c0_48] : memref<3072x512xbf16, #tpu.memory_space<vmem>>, vector<3072x512xbf16>
    %cst_49 = arith.constant dense<0.000000e+00> : vector<2x512xf32>
    %323 = tpu.matmul %320, %322, %cst_49 {dimension_numbers = #tpu.dot_dimension_numbers<[1], [0], [0], [1], [0, 0, 1, 1], [], []>} : vector<2x3072xbf16>, vector<3072x512xbf16>, vector<2x512xf32> -> vector<2x512xf32>
    %324 = arith.addf %321, %323 : vector<2x512xf32>
    %c0_50 = arith.constant 0 : index
    %c0_51 = arith.constant 0 : index
    %325 = vector.load %arg13[%c0_50, %c0_51] : memref<2x512xf32, #tpu.memory_space<vmem>>, vector<2x512xf32>
    tpu.vector_store %arg13[%c0_50, %c0_51], %324 {strides = array<i32>} : memref<2x512xf32, #tpu.memory_space<vmem>>, vector<2x512xf32>,
    %c3_i32_52 = arith.constant 3 : i32
    %326 = arith.cmpi eq, %arg0, %c3_i32_52 : i32
    %327 = arith.extui %326 : i1 to i32
    %c0_i32_53 = arith.constant 0 : i32
    %328 = arith.cmpi ne, %327, %c0_i32_53 : i32
    scf.if %328 {
      %c0_54 = arith.constant 0 : index
      %c0_55 = arith.constant 0 : index
      %329 = vector.load %arg13[%c0_54, %c0_55] : memref<2x512xf32, #tpu.memory_space<vmem>>, vector<2x512xf32>
      %c0_56 = arith.constant 0 : index
      %c0_57 = arith.constant 0 : index
      %330 = vector.load %arg9[%c0_56, %c0_57] : memref<1x512xf32, #tpu.memory_space<vmem>>, vector<1x512xf32>
      %331 = vector.broadcast %330 : vector<1x512xf32> to vector<2x512xf32>
      %332 = arith.addf %329, %331 : vector<2x512xf32>
      %cst_58 = arith.constant 0.000000e+00 : f32
      %333 = vector.broadcast %cst_58 : f32 to vector<2x512xf32>
      %334 = arith.maximumf %332, %333 : vector<2x512xf32>
      %c0_59 = arith.constant 0 : index
      %c0_60 = arith.constant 0 : index
      %335 = vector.load %arg10[%c0_59, %c0_60] : memref<512x128xf32, #tpu.memory_space<vmem>>, vector<512x128xf32>
      %cst_61 = arith.constant dense<0.000000e+00> : vector<2x128xf32>
      %336 = tpu.matmul %334, %335, %cst_61 {dimension_numbers = #tpu.dot_dimension_numbers<[1], [0], [0], [1], [0, 0, 1, 1], [], []>} : vector<2x512xf32>, vector<512x128xf32>, vector<2x128xf32> -> vector<2x128xf32>
      %c0_62 = arith.constant 0 : index
      %c0_63 = arith.constant 0 : index
      %337 = vector.load %arg11[%c0_62, %c0_63] : memref<1x128xf32, #tpu.memory_space<vmem>>, vector<1x128xf32>
      %338 = vector.broadcast %337 : vector<1x128xf32> to vector<2x128xf32>
      %339 = arith.addf %336, %338 : vector<2x128xf32>
      %c0_64 = arith.constant 0 : index
      %c0_65 = arith.constant 0 : index
      %340 = vector.load %arg12[%c0_64, %c0_65] : memref<2x128xf32, #tpu.memory_space<vmem>>, vector<2x128xf32>
      tpu.vector_store %arg12[%c0_64, %c0_65], %339 {strides = array<i32>} : memref<2x128xf32, #tpu.memory_space<vmem>>, vector<2x128xf32>,
    } else {
    }
    return
  }
  func.func @transform_0(%arg0: i32) -> (i32, i32) {
    %c0_i32 = arith.constant 0 : i32
    %c0_i32_0 = arith.constant 0 : i32
    %c0_i32_1 = arith.constant 0 : i32
    return %c0_i32, %c0_i32_0 : i32, i32
  }
  func.func @transform_1(%arg0: i32) -> (i32, i32) {
    %c0_i32 = arith.constant 0 : i32
    %c0_i32_0 = arith.constant 0 : i32
    %c0_i32_1 = arith.constant 0 : i32
    return %c0_i32, %c0_i32_0 : i32, i32
  }
  func.func @transform_2(%arg0: i32) -> (i32, i32) {
    %c0_i32 = arith.constant 0 : i32
    %c0_i32_0 = arith.constant 0 : i32
    %c0_i32_1 = arith.constant 0 : i32
    return %c0_i32, %c0_i32_0 : i32, i32
  }
  func.func @transform_3(%arg0: i32) -> (i32, i32) {
    %c0_i32 = arith.constant 0 : i32
    %c0_i32_0 = arith.constant 0 : i32
    %c0_i32_1 = arith.constant 0 : i32
    return %c0_i32, %c0_i32_0 : i32, i32
  }
  func.func @transform_4(%arg0: i32) -> (i32, i32) {
    %c0_i32 = arith.constant 0 : i32
    %c0_i32_0 = arith.constant 0 : i32
    %c0_i32_1 = arith.constant 0 : i32
    return %c0_i32, %c0_i32_0 : i32, i32
  }
  func.func @transform_5(%arg0: i32) -> i32 {
    %c0_i32 = arith.constant 0 : i32
    %c0_i32_0 = arith.constant 0 : i32
    return %c0_i32 : i32
  }
  func.func @transform_6(%arg0: i32) -> i32 {
    %c0_i32 = arith.constant 0 : i32
    %c0_i32_0 = arith.constant 0 : i32
    return %c0_i32 : i32
  }
  func.func @transform_7(%arg0: i32) -> (i32, i32) {
    %c0_i32 = arith.constant 0 : i32
    %c0_i32_0 = arith.constant 0 : i32
    return %arg0, %c0_i32 : i32, i32
  }
  func.func @transform_8(%arg0: i32) -> (i32, i32) {
    %c0_i32 = arith.constant 0 : i32
    %c0_i32_0 = arith.constant 0 : i32
    %c0_i32_1 = arith.constant 0 : i32
    return %c0_i32, %c0_i32_0 : i32, i32
  }
  func.func @transform_9(%arg0: i32) -> (i32, i32) {
    %c0_i32 = arith.constant 0 : i32
    %c0_i32_0 = arith.constant 0 : i32
    %c0_i32_1 = arith.constant 0 : i32
    return %c0_i32, %c0_i32_0 : i32, i32
  }
  func.func @transform_10(%arg0: i32) -> (i32, i32) {
    %c0_i32 = arith.constant 0 : i32
    %c0_i32_0 = arith.constant 0 : i32
    %c0_i32_1 = arith.constant 0 : i32
    return %c0_i32, %c0_i32_0 : i32, i32
  }
  func.func @transform_11(%arg0: i32) -> (i32, i32) {
    %c0_i32 = arith.constant 0 : i32
    %c0_i32_0 = arith.constant 0 : i32
    %c0_i32_1 = arith.constant 0 : i32
    return %c0_i32, %c0_i32_0 : i32, i32
  }
}

</mosaic_0001>

<llo_original>
// kernel: tpu_custom_call.1
$region0: #{tpu_custom_call.1}
  #allocation0 [shape = 'u32[]', space=smem, size = 0x4, offset = 0x4, fixed_abs, tag = 'smem constant byte address 0x4 - core index']
  #allocation1 [shape = 'u32[144,128]{1,0:T(1,128)}', space=vmem, size = 0x12000, scoped, tag = 'internal scratch']
  #allocation2 [shape = 'f32[2,512]{1,0:T(2,128)}', space=vmem, size = 0x1000, scoped, tag = 'scratch operand']
  %s0 = inlined_call_operand.hbm [shape: f32[2,384], index: 0, kind: input, shape index: {}]
  %s1 = inlined_call_operand.hbm [shape: f32[2,384], index: 1, kind: input, shape index: {}]
  %s2 = inlined_call_operand.hbm [shape: f32[2,384], index: 2, kind: input, shape index: {}]
  %s3 = inlined_call_operand.hbm [shape: f32[2,384], index: 3, kind: input, shape index: {}]
  %s4 = inlined_call_operand.vmem [shape: f32[32,3], index: 4, kind: input, shape index: {}]
  %s5 = inlined_call_operand.hbm [shape: f32[32], index: 5, kind: input, shape index: {}]
  %s6 = inlined_call_operand.hbm [shape: f32[32], index: 6, kind: input, shape index: {}]
  %s7 = inlined_call_operand.hbm [shape: bf16[12288,512], index: 7, kind: input, shape index: {}]
  %s8 = inlined_call_operand.hbm [shape: f32[1,512], index: 8, kind: input, shape index: {}]
  %s9 = inlined_call_operand.hbm [shape: f32[512,128], index: 9, kind: input, shape index: {}]
  %s10 = inlined_call_operand.hbm [shape: f32[1,128], index: 10, kind: input, shape index: {}]
  %s11 = inlined_call_operand.hbm [shape: f32[2,128], index: 11, kind: output, shape index: {}]
  %s12 = sld [smem:[#allocation0]]
  $region129: #{tpu_custom_call.1} parent=0
    _
  %s14 = ssub.s32 1, %s12
  %s15 = scalar_select 0, %s14, %s12
  $region1: #{tpu_custom_call.1} parent=0
    #allocation3 [shape = 'u8[3072]{0}', space=vmem, size = 0xc00, scoped, tag = 'input window, operand 0, single buffered']
    #allocation4 [shape = 's32[2]{0}', space=sflag, size = 0x8, scoped, tag = 'scoped memory for tpu_custom_call.1']
    #allocation5 [shape = 's32[2]{0}', space=sflag, size = 0x8, scoped, tag = 'scoped memory for tpu_custom_call.1']
    #allocation6 [shape = 's32[2]{0}', space=sflag, size = 0x8, scoped, tag = 'scoped memory for tpu_custom_call.1']
    #allocation7 [shape = 's32[2]{0}', space=sflag, size = 0x8, scoped, tag = 'scoped memory for tpu_custom_call.1']
    #allocation8 [shape = 'u8[3072]{0}', space=vmem, size = 0xc00, scoped, tag = 'input window, operand 1, single buffered']
    #allocation9 [shape = 's32[1]{0}', space=sflag, size = 0x4, scoped, tag = 'scoped memory for tpu_custom_call.1']
    #allocation10 [shape = 'u8[3072]{0}', space=vmem, size = 0xc00, scoped, tag = 'input window, operand 2, single buffered']
    #allocation11 [shape = 'u8[3072]{0}', space=vmem, size = 0xc00, scoped, tag = 'input window, operand 3, single buffered']
    #allocation12 [shape = 's32[1]{0}', space=sflag, size = 0x4, scoped, tag = 'scoped memory for tpu_custom_call.1']
    #allocation13 [shape = 'u8[16384]{0}', space=smem, size = 0x4000, scoped, tag = 'input window, operand 4, single buffered']
    #allocation14 [shape = 'u8[512]{0}', space=smem, size = 0x200, scoped, tag = 'input window, operand 5, single buffered']
    #allocation15 [shape = 'u8[512]{0}', space=smem, size = 0x200, scoped, tag = 'input window, operand 6, single buffered']
    #allocation16 [shape = 's32[1]{0}', space=sflag, size = 0x4, scoped, tag = 'scoped memory for tpu_custom_call.1']
    #allocation17 [shape = 'u8[6291456]{0}', space=vmem, size = 0x600000, scoped, tag = 'input window, operand 7']
    #allocation18 [shape = 'u8[2048]{0}', space=vmem, size = 0x800, scoped, tag = 'input window, operand 8, single buffered']
    #allocation19 [shape = 'u8[262144]{0}', space=vmem, size = 0x40000, scoped, tag = 'input window, operand 9, single buffered']
    #allocation20 [shape = 'u8[512]{0}', space=vmem, size = 0x400, scoped, tag = 'input window, operand 10, single buffered']
    #allocation21 [shape = 's32[1]{0}', space=sflag, size = 0x4, scoped, tag = 'scoped memory for tpu_custom_call.1']
    #allocation22 [shape = 'u8[1024]{0}', space=vmem, size = 0x400, scoped, tag = 'output window, operand 0, single buffered']
    %16 = vsyncpa [#allocation4], 0
    %17 = vsyncpa [#allocation9], 0
    %18 = vsyncpa [#allocation12], 0
    %19 = vsyncpa [#allocation7], 0
    %20 = vsyncpa [#allocation6], 0
    %21 = vsyncpa [#allocation16], 0
    %22 = vsyncpa [#allocation21], 0
    %23 = vsyncpa [#allocation5], 0
    loop: start=0, step=1, limit=6
    $region2: #{tpu_custom_call.1} parent=1 // loop_pre_header
      _
    $region3: #{tpu_custom_call.1} parent=1 // loop_header
      %s25 = sphi 0, %s29
      %p26 = scmp.ge.s32.totalorder %s25, 6
      %s33 = sphi 0, %s33
      %s35 = sphi 0, %s33
      %s36 = sphi 0, %s35
      %s50 = sphi 0, %s36
      %s54 = sphi 0, %s54
      %s56 = sphi 0, %s54
      %s57 = sphi 0, %s56
      %s71 = sphi 0, %s57
      %s75 = sphi 0, %s75
      %s77 = sphi 0, %s75
      %s78 = sphi 0, %s77
      %s92 = sphi 0, %s78
      %s96 = sphi 0, %s96
      %s98 = sphi 0, %s96
      %s99 = sphi 0, %s98
      %s113 = sphi 0, %s99
      %s117 = sphi 0, %s117
      %s119 = sphi 0, %s117
      %s120 = sphi 0, %s119
      %s134 = sphi 0, %s120
      %s138 = sphi 0, %s138
      %s140 = sphi 0, %s138
      %s141 = sphi 0, %s140
      %s155 = sphi 0, %s141
      %s159 = sphi 0, %s159
      %s161 = sphi 0, %s159
      %s162 = sphi 0, %s161
      %s176 = sphi 0, %s162
      %s182 = sphi 0, %s184
      %s185 = sphi 0, %s182
      %s186 = sphi 0, %s185
      %s202 = sphi 0, %s186
      %s206 = sphi 0, %s206
      %s208 = sphi 0, %s206
      %s209 = sphi 0, %s208
      %s223 = sphi 0, %s209
      %s227 = sphi 0, %s227
      %s229 = sphi 0, %s227
      %s230 = sphi 0, %s229
      %s244 = sphi 0, %s230
      %s248 = sphi 0, %s248
      %s250 = sphi 0, %s248
      %s251 = sphi 0, %s250
      %s265 = sphi 0, %s251
      %s269 = sphi 0, %s269
      %s271 = sphi 0, %s269
      %s272 = sphi 0, %s271
      %s286 = sphi 0, %s272
    $region4: #{tpu_custom_call.1} parent=1 // loop_header_branch
      %28 = sbr.rel (%p26) target = $region8
    $region5: #{tpu_custom_call.1} parent=1 // loop_body
      %s30 = ssub.s32 %s25, 1
      %s31 = ssub.s32 %s25, 2
      %s32 = sadd.s32 %s25, 1
      %s34 = sadd.s32 %s33, 1
      %p37 = scmp.eq.s32.totalorder %s25, 3
      %p38 = scmp.ne.s32.totalorder %s33, %s35
      %p39 = scmp.eq.s32.totalorder %s25, 0
      %p40 = por %p38, %p39
      %p41 = scmp.ne.s32.totalorder %s33, %s35
      %p42 = scmp.eq.s32.totalorder %s30, 3
      %p43 = por %p41, %p42
      %p44 = scmp.ne.s32.totalorder %s35, %s36
      %p45 = scmp.eq.s32.totalorder %s30, 0
      %p46 = por %p44, %p45
      %p47 = scmp.ne.s32.totalorder %s35, %s36
      %p48 = scmp.eq.s32.totalorder %s31, 3
      %p49 = por %p47, %p48
      %p51 = scmp.ne.s32.totalorder %s36, %s50
      %p52 = scmp.eq.s32.totalorder %s31, 0
      %p53 = por %p51, %p52
      %s55 = sadd.s32 %s54, 1
      %p58 = scmp.eq.s32.totalorder %s25, 3
      %p59 = scmp.ne.s32.totalorder %s54, %s56
      %p60 = scmp.eq.s32.totalorder %s25, 0
      %p61 = por %p59, %p60
      %p62 = scmp.ne.s32.totalorder %s54, %s56
      %p63 = scmp.eq.s32.totalorder %s30, 3
      %p64 = por %p62, %p63
      %p65 = scmp.ne.s32.totalorder %s56, %s57
      %p66 = scmp.eq.s32.totalorder %s30, 0
      %p67 = por %p65, %p66
      %p68 = scmp.ne.s32.totalorder %s56, %s57
      %p69 = scmp.eq.s32.totalorder %s31, 3
      %p70 = por %p68, %p69
      %p72 = scmp.ne.s32.totalorder %s57, %s71
      %p73 = scmp.eq.s32.totalorder %s31, 0
      %p74 = por %p72, %p73
      %s76 = sadd.s32 %s75, 1
      %p79 = scmp.eq.s32.totalorder %s25, 3
      %p80 = scmp.ne.s32.totalorder %s75, %s77
      %p81 = scmp.eq.s32.totalorder %s25, 0
      %p82 = por %p80, %p81
      %p83 = scmp.ne.s32.totalorder %s75, %s77
      %p84 = scmp.eq.s32.totalorder %s30, 3
      %p85 = por %p83, %p84
      %p86 = scmp.ne.s32.totalorder %s77, %s78
      %p87 = scmp.eq.s32.totalorder %s30, 0
      %p88 = por %p86, %p87
      %p89 = scmp.ne.s32.totalorder %s77, %s78
      %p90 = scmp.eq.s32.totalorder %s31, 3
      %p91 = por %p89, %p90
      %p93 = scmp.ne.s32.totalorder %s78, %s92
      %p94 = scmp.eq.s32.totalorder %s31, 0
      %p95 = por %p93, %p94
      %s97 = sadd.s32 %s96, 1
      %p100 = scmp.eq.s32.totalorder %s25, 3
      %p101 = scmp.ne.s32.totalorder %s96, %s98
      %p102 = scmp.eq.s32.totalorder %s25, 0
      %p103 = por %p101, %p102
      %p104 = scmp.ne.s32.totalorder %s96, %s98
      %p105 = scmp.eq.s32.totalorder %s30, 3
      %p106 = por %p104, %p105
      %p107 = scmp.ne.s32.totalorder %s98, %s99
      %p108 = scmp.eq.s32.totalorder %s30, 0
      %p109 = por %p107, %p108
      %p110 = scmp.ne.s32.totalorder %s98, %s99
      %p111 = scmp.eq.s32.totalorder %s31, 3
      %p112 = por %p110, %p111
      %p114 = scmp.ne.s32.totalorder %s99, %s113
      %p115 = scmp.eq.s32.totalorder %s31, 0
      %p116 = por %p114, %p115
      %s118 = sadd.s32 %s117, 1
      %p121 = scmp.eq.s32.totalorder %s25, 3
      %p122 = scmp.ne.s32.totalorder %s117, %s119
      %p123 = scmp.eq.s32.totalorder %s25, 0
      %p124 = por %p122, %p123
      %p125 = scmp.ne.s32.totalorder %s117, %s119
      %p126 = scmp.eq.s32.totalorder %s30, 3
      %p127 = por %p125, %p126
      %p128 = scmp.ne.s32.totalorder %s119, %s120
      %p129 = scmp.eq.s32.totalorder %s30, 0
      %p130 = por %p128, %p129
      %p131 = scmp.ne.s32.totalorder %s119, %s120
      %p132 = scmp.eq.s32.totalorder %s31, 3
      %p133 = por %p131, %p132
      %p135 = scmp.ne.s32.totalorder %s120, %s134
      %p136 = scmp.eq.s32.totalorder %s31, 0
      %p137 = por %p135, %p136
      %s139 = sadd.s32 %s138, 1
      %p142 = scmp.eq.s32.totalorder %s25, 3
      %p143 = scmp.ne.s32.totalorder %s138, %s140
      %p144 = scmp.eq.s32.totalorder %s25, 0
      %p145 = por %p143, %p144
      %p146 = scmp.ne.s32.totalorder %s138, %s140
      %p147 = scmp.eq.s32.totalorder %s30, 3
      %p148 = por %p146, %p147
      %p149 = scmp.ne.s32.totalorder %s140, %s141
      %p150 = scmp.eq.s32.totalorder %s30, 0
      %p151 = por %p149, %p150
      %p152 = scmp.ne.s32.totalorder %s140, %s141
      %p153 = scmp.eq.s32.totalorder %s31, 3
      %p154 = por %p152, %p153
      %p156 = scmp.ne.s32.totalorder %s141, %s155
      %p157 = scmp.eq.s32.totalorder %s31, 0
      %p158 = por %p156, %p157
      %s160 = sadd.s32 %s159, 1
      %p163 = scmp.eq.s32.totalorder %s25, 3
      %p164 = scmp.ne.s32.totalorder %s159, %s161
      %p165 = scmp.eq.s32.totalorder %s25, 0
      %p166 = por %p164, %p165
      %p167 = scmp.ne.s32.totalorder %s159, %s161
      %p168 = scmp.eq.s32.totalorder %s30, 3
      %p169 = por %p167, %p168
      %p170 = scmp.ne.s32.totalorder %s161, %s162
      %p171 = scmp.eq.s32.totalorder %s30, 0
      %p172 = por %p170, %p171
      %p173 = scmp.ne.s32.totalorder %s161, %s162
      %p174 = scmp.eq.s32.totalorder %s31, 3
      %p175 = por %p173, %p174
      %p177 = scmp.ne.s32.totalorder %s162, %s176
      %p178 = scmp.eq.s32.totalorder %s31, 0
      %p179 = por %p177, %p178
      %s180 = ssub.s32 %s25, %s32
      %p181 = scmp.eq.s32.totalorder %s180, 0
      %s183 = sadd.s32 %s182, 1
      %s184 = scalar_select %p181, %s182, %s183
      %p187 = pneg %p181
      %p188 = scmp.eq.s32.totalorder %s25, 3
      %p189 = por %p187, %p188
      %p190 = scmp.ne.s32.totalorder %s182, %s185
      %p191 = scmp.eq.s32.totalorder %s25, 0
      %p192 = por %p190, %p191
      %p193 = scmp.ne.s32.totalorder %s182, %s185
      %p194 = scmp.eq.s32.totalorder %s30, 3
      %p195 = por %p193, %p194
      %p196 = scmp.ne.s32.totalorder %s185, %s186
      %p197 = scmp.eq.s32.totalorder %s30, 0
      %p198 = por %p196, %p197
      %p199 = scmp.ne.s32.totalorder %s185, %s186
      %p200 = scmp.eq.s32.totalorder %s31, 3
      %p201 = por %p199, %p200
      %p203 = scmp.ne.s32.totalorder %s186, %s202
      %p204 = scmp.eq.s32.totalorder %s31, 0
      %p205 = por %p203, %p204
      %s207 = sadd.s32 %s206, 1
      %p210 = scmp.eq.s32.totalorder %s25, 3
      %p211 = scmp.ne.s32.totalorder %s206, %s208
      %p212 = scmp.eq.s32.totalorder %s25, 0
      %p213 = por %p211, %p212
      %p214 = scmp.ne.s32.totalorder %s206, %s208
      %p215 = scmp.eq.s32.totalorder %s30, 3
      %p216 = por %p214, %p215
      %p217 = scmp.ne.s32.totalorder %s208, %s209
      %p218 = scmp.eq.s32.totalorder %s30, 0
      %p219 = por %p217, %p218
      %p220 = scmp.ne.s32.totalorder %s208, %s209
      %p221 = scmp.eq.s32.totalorder %s31, 3
      %p222 = por %p220, %p221
      %p224 = scmp.ne.s32.totalorder %s209, %s223
      %p225 = scmp.eq.s32.totalorder %s31, 0
      %p226 = por %p224, %p225
      %s228 = sadd.s32 %s227, 1
      %p231 = scmp.eq.s32.totalorder %s25, 3
      %p232 = scmp.ne.s32.totalorder %s227, %s229
      %p233 = scmp.eq.s32.totalorder %s25, 0
      %p234 = por %p232, %p233
      %p235 = scmp.ne.s32.totalorder %s227, %s229
      %p236 = scmp.eq.s32.totalorder %s30, 3
      %p237 = por %p235, %p236
      %p238 = scmp.ne.s32.totalorder %s229, %s230
      %p239 = scmp.eq.s32.totalorder %s30, 0
      %p240 = por %p238, %p239
      %p241 = scmp.ne.s32.totalorder %s229, %s230
      %p242 = scmp.eq.s32.totalorder %s31, 3
      %p243 = por %p241, %p242
      %p245 = scmp.ne.s32.totalorder %s230, %s244
      %p246 = scmp.eq.s32.totalorder %s31, 0
      %p247 = por %p245, %p246
      %s249 = sadd.s32 %s248, 1
      %p252 = scmp.eq.s32.totalorder %s25, 3
      %p253 = scmp.ne.s32.totalorder %s248, %s250
      %p254 = scmp.eq.s32.totalorder %s25, 0
      %p255 = por %p253, %p254
      %p256 = scmp.ne.s32.totalorder %s248, %s250
      %p257 = scmp.eq.s32.totalorder %s30, 3
      %p258 = por %p256, %p257
      %p259 = scmp.ne.s32.totalorder %s250, %s251
      %p260 = scmp.eq.s32.totalorder %s30, 0
      %p261 = por %p259, %p260
      %p262 = scmp.ne.s32.totalorder %s250, %s251
      %p263 = scmp.eq.s32.totalorder %s31, 3
      %p264 = por %p262, %p263
      %p266 = scmp.ne.s32.totalorder %s251, %s265
      %p267 = scmp.eq.s32.totalorder %s31, 0
      %p268 = por %p266, %p267
      %s270 = sadd.s32 %s269, 1
      %p273 = scmp.eq.s32.totalorder %s25, 3
      %p274 = scmp.ne.s32.totalorder %s269, %s271
      %p275 = scmp.eq.s32.totalorder %s25, 0
      %p276 = por %p274, %p275
      %p277 = scmp.ne.s32.totalorder %s269, %s271
      %p278 = scmp.eq.s32.totalorder %s30, 3
      %p279 = por %p277, %p278
      %p280 = scmp.ne.s32.totalorder %s271, %s272
      %p281 = scmp.eq.s32.totalorder %s30, 0
      %p282 = por %p280, %p281
      %p283 = scmp.ne.s32.totalorder %s271, %s272
      %p284 = scmp.eq.s32.totalorder %s31, 3
      %p285 = por %p283, %p284
      %p287 = scmp.ne.s32.totalorder %s272, %s286
      %p288 = scmp.eq.s32.totalorder %s31, 0
      %p289 = por %p287, %p288
      %p290 = scmp.le.s32.totalorder 1, %s25
      %p291 = scmp.lt.s32.totalorder %s25, 5
      %p292 = pnand %p290, %p291
      %p293 = pneg %p292
      // Predicated region
      $region9: #{tpu_custom_call.1} parent=5 // pred_check
        _
      $region10: #{tpu_custom_call.1} parent=5 // pred_check_branch
        %295 = sbr.rel (%p292) target = $region12
      $region11: #{tpu_custom_call.1} parent=5 // pred_region
        %s296 = ssub.s32 %s25, 1
        // Predicated region
        $region13: #{tpu_custom_call.1} parent=11 // pred_check
          %p297 = pneg %p46
        $region14: #{tpu_custom_call.1} parent=11 // pred_check_branch
          %299 = sbr.rel (%p297) target = $region16
        $region15: #{tpu_custom_call.1} parent=11 // pred_region
          %s301 = ssub.s32 96, 96
          %302 = vsyncadd [#allocation4], %s301
          %s304 = sshll.u32 [#allocation3], 4
          %s305 = int_to_ptr.vmem [resolvable:$true] %s304
          %307 = dma.hbm_to_vmem [thread:$0]  %s0, 96, %s305, [#allocation4]
        $region16: #{tpu_custom_call.1} parent=11 // pred_fallthru
          _
        // Predicated region
        $region17: #{tpu_custom_call.1} parent=11 // pred_check
          %p308 = pneg %p67
        $region18: #{tpu_custom_call.1} parent=11 // pred_check_branch
          %310 = sbr.rel (%p308) target = $region20
        $region19: #{tpu_custom_call.1} parent=11 // pred_region
          %s312 = ssub.s32 96, 96
          %313 = vsyncadd [#allocation9], %s312
          %s315 = sshll.u32 [#allocation8], 4
          %s316 = int_to_ptr.vmem [resolvable:$true] %s315
          %318 = dma.hbm_to_vmem [thread:$0]  %s1, 96, %s316, [#allocation9]
        $region20: #{tpu_custom_call.1} parent=11 // pred_fallthru
          _
        // Predicated region
        $region21: #{tpu_custom_call.1} parent=11 // pred_check
          %p319 = pneg %p88
        $region22: #{tpu_custom_call.1} parent=11 // pred_check_branch
          %321 = sbr.rel (%p319) target = $region24
        $region23: #{tpu_custom_call.1} parent=11 // pred_region
          %s323 = ssub.s32 96, 96
          %324 = vsyncadd [#allocation9], %s323
          %s326 = sshll.u32 [#allocation10], 4
          %s327 = int_to_ptr.vmem [resolvable:$true] %s326
          %329 = dma.hbm_to_vmem [thread:$0]  %s2, 96, %s327, [#allocation9]
        $region24: #{tpu_custom_call.1} parent=11 // pred_fallthru
          _
        // Predicated region
        $region25: #{tpu_custom_call.1} parent=11 // pred_check
          %p330 = pneg %p109
        $region26: #{tpu_custom_call.1} parent=11 // pred_check_branch
          %332 = sbr.rel (%p330) target = $region28
        $region27: #{tpu_custom_call.1} parent=11 // pred_region
          %s334 = ssub.s32 96, 96
          %335 = vsyncadd [#allocation12], %s334
          %s337 = sshll.u32 [#allocation11], 4
          %s338 = int_to_ptr.vmem [resolvable:$true] %s337
          %340 = dma.hbm_to_vmem [thread:$0]  %s3, 96, %s338, [#allocation12]
        $region28: #{tpu_custom_call.1} parent=11 // pred_fallthru
          _
        // Predicated region
        $region29: #{tpu_custom_call.1} parent=11 // pred_check
          %p341 = pneg %p130
        $region30: #{tpu_custom_call.1} parent=11 // pred_check_branch
          %343 = sbr.rel (%p341) target = $region32
        $region31: #{tpu_custom_call.1} parent=11 // pred_region
          %s345 = ssub.s32 512, 512
          %346 = vsyncadd [#allocation7], %s345
          %s347 = sshll.u32 %s4, 4
          %s348 = int_to_ptr.vmem [resolvable:$true] %s347
          %353 = dma.vmem_to_smem %s348, 512, [#allocation13], [#allocation7], 128, 128, 8
        $region32: #{tpu_custom_call.1} parent=11 // pred_fallthru
          _
        // Predicated region
        $region33: #{tpu_custom_call.1} parent=11 // pred_check
          %p354 = pneg %p151
        $region34: #{tpu_custom_call.1} parent=11 // pred_check_branch
          %356 = sbr.rel (%p354) target = $region36
        $region35: #{tpu_custom_call.1} parent=11 // pred_region
          %s358 = ssub.s32 16, 16
          %359 = vsyncadd [#allocation6], %s358
          %362 = dma.hbm_to_smem %s5, 16, [#allocation14], [#allocation6]
        $region36: #{tpu_custom_call.1} parent=11 // pred_fallthru
          _
        // Predicated region
        $region37: #{tpu_custom_call.1} parent=11 // pred_check
          %p363 = pneg %p172
        $region38: #{tpu_custom_call.1} parent=11 // pred_check_branch
          %365 = sbr.rel (%p363) target = $region40
        $region39: #{tpu_custom_call.1} parent=11 // pred_region
          %s367 = ssub.s32 16, 16
          %368 = vsyncadd [#allocation16], %s367
          %371 = dma.hbm_to_smem %s6, 16, [#allocation15], [#allocation16]
        $region40: #{tpu_custom_call.1} parent=11 // pred_fallthru
          _
        // Predicated region
        $region41: #{tpu_custom_call.1} parent=11 // pred_check
          %p372 = pneg %p219
        $region42: #{tpu_custom_call.1} parent=11 // pred_check_branch
          %374 = sbr.rel (%p372) target = $region44
        $region43: #{tpu_custom_call.1} parent=11 // pred_region
          %s376 = ssub.s32 64, 64
          %377 = vsyncadd [#allocation9], %s376
          %s379 = sshll.u32 [#allocation18], 4
          %s380 = int_to_ptr.vmem [resolvable:$true] %s379
          %382 = dma.hbm_to_vmem [thread:$0]  %s8, 64, %s380, [#allocation9]
        $region44: #{tpu_custom_call.1} parent=11 // pred_fallthru
          _
        // Predicated region
        $region45: #{tpu_custom_call.1} parent=11 // pred_check
          %p383 = pneg %p240
        $region46: #{tpu_custom_call.1} parent=11 // pred_check_branch
          %385 = sbr.rel (%p383) target = $region48
        $region47: #{tpu_custom_call.1} parent=11 // pred_region
          %s387 = ssub.s32 8192, 8192
          %388 = vsyncadd [#allocation12], %s387
          %s389 = sshll.u32 [#allocation19], 4
          %s390 = int_to_ptr.vmem [resolvable:$true] %s389
          %395 = dma.hbm_to_vmem [thread:$0]  %s9, 8192, %s390, [#allocation12], 128, 128, 8
        $region48: #{tpu_custom_call.1} parent=11 // pred_fallthru
          _
        // Predicated region
        $region49: #{tpu_custom_call.1} parent=11 // pred_check
          %p396 = pneg %p261
        $region50: #{tpu_custom_call.1} parent=11 // pred_check_branch
          %398 = sbr.rel (%p396) target = $region52
        $region51: #{tpu_custom_call.1} parent=11 // pred_region
          %s400 = ssub.s32 16, 16
          %401 = vsyncadd [#allocation21], %s400
          %s403 = sshll.u32 [#allocation20], 4
          %s404 = int_to_ptr.vmem [resolvable:$true] %s403
          %406 = dma.hbm_to_vmem [thread:$0]  %s10, 16, %s404, [#allocation21]
        $region52: #{tpu_custom_call.1} parent=11 // pred_fallthru
          _
      $region12: #{tpu_custom_call.1} parent=5 // pred_fallthru
        _
      %p407 = scmp.lt.s32.totalorder %s25, 4
      // Predicated region
      $region53: #{tpu_custom_call.1} parent=5 // pred_check
        %p408 = pneg %p407
      $region54: #{tpu_custom_call.1} parent=5 // pred_check_branch
        %410 = sbr.rel (%p408) target = $region56
      $region55: #{tpu_custom_call.1} parent=5 // pred_region
        // Predicated region
        $region57: #{tpu_custom_call.1} parent=55 // pred_check
          %p411 = pneg %p192
        $region58: #{tpu_custom_call.1} parent=55 // pred_check_branch
          %413 = sbr.rel (%p411) target = $region60
        $region59: #{tpu_custom_call.1} parent=55 // pred_region
          %s414 = sand.u32 %s25, 1
          %s415 = scalar_lea.sflag [#allocation4], %s414
          %s416 = sand.u32 %s182, 1
          %s417 = smul.addr %s416, 6144
          %s418 = scalar_lea.vmem [#allocation17], %s417
          %s419 = smul.u32 384, %s25
          %s421 = ssub.s32 98304, 98304
          %422 = vsyncadd %s415, %s421
          %s423 = smul.addr %s419, 4
          %s424 = smul.addr %s423, 64
          %s425 = scalar_lea.hbm %s7, %s424
          %s426 = sshll.u32 %s418, 4
          %s427 = int_to_ptr.vmem [resolvable:$true] %s426
          %432 = dma.hbm_to_vmem [thread:$0]  %s425, 98304, %s427, %s415, 256, 256, 16
        $region60: #{tpu_custom_call.1} parent=55 // pred_fallthru
          _
      $region56: #{tpu_custom_call.1} parent=5 // pred_fallthru
        _
      %p433 = scmp.le.s32.totalorder 1, %s25
      %p434 = scmp.lt.s32.totalorder %s25, 5
      %p435 = pnand %p433, %p434
      %p436 = pneg %p435
      // Predicated region
      $region61: #{tpu_custom_call.1} parent=5 // pred_check
        _
      $region62: #{tpu_custom_call.1} parent=5 // pred_check_branch
        %438 = sbr.rel (%p435) target = $region64
      $region63: #{tpu_custom_call.1} parent=5 // pred_region
        %s439 = ssub.s32 %s25, 1
        // Predicated region
        $region65: #{tpu_custom_call.1} parent=63 // pred_check
          %p440 = pneg %p46
        $region66: #{tpu_custom_call.1} parent=63 // pred_check_branch
          %442 = sbr.rel (%p440) target = $region68
        $region67: #{tpu_custom_call.1} parent=63 // pred_region
          %443 = dma.done [#allocation4], 96
        $region68: #{tpu_custom_call.1} parent=63 // pred_fallthru
          _
        // Predicated region
        $region69: #{tpu_custom_call.1} parent=63 // pred_check
          %p444 = pneg %p67
        $region70: #{tpu_custom_call.1} parent=63 // pred_check_branch
          %446 = sbr.rel (%p444) target = $region72
        $region71: #{tpu_custom_call.1} parent=63 // pred_region
          %447 = dma.done [#allocation9], 96
        $region72: #{tpu_custom_call.1} parent=63 // pred_fallthru
          _
        // Predicated region
        $region73: #{tpu_custom_call.1} parent=63 // pred_check
          %p448 = pneg %p88
        $region74: #{tpu_custom_call.1} parent=63 // pred_check_branch
          %450 = sbr.rel (%p448) target = $region76
        $region75: #{tpu_custom_call.1} parent=63 // pred_region
          %451 = dma.done [#allocation9], 96
        $region76: #{tpu_custom_call.1} parent=63 // pred_fallthru
          _
        // Predicated region
        $region77: #{tpu_custom_call.1} parent=63 // pred_check
          %p452 = pneg %p109
        $region78: #{tpu_custom_call.1} parent=63 // pred_check_branch
          %454 = sbr.rel (%p452) target = $region80
        $region79: #{tpu_custom_call.1} parent=63 // pred_region
          %455 = dma.done [#allocation12], 96
        $region80: #{tpu_custom_call.1} parent=63 // pred_fallthru
          _
        // Predicated region
        $region81: #{tpu_custom_call.1} parent=63 // pred_check
          %p456 = pneg %p130
        $region82: #{tpu_custom_call.1} parent=63 // pred_check_branch
          %458 = sbr.rel (%p456) target = $region84
        $region83: #{tpu_custom_call.1} parent=63 // pred_region
          %459 = dma.done [#allocation7], 512
        $region84: #{tpu_custom_call.1} parent=63 // pred_fallthru
          _
        // Predicated region
        $region85: #{tpu_custom_call.1} parent=63 // pred_check
          %p460 = pneg %p151
        $region86: #{tpu_custom_call.1} parent=63 // pred_check_branch
          %462 = sbr.rel (%p460) target = $region88
        $region87: #{tpu_custom_call.1} parent=63 // pred_region
          %463 = dma.done [#allocation6], 16
        $region88: #{tpu_custom_call.1} parent=63 // pred_fallthru
          _
        // Predicated region
        $region89: #{tpu_custom_call.1} parent=63 // pred_check
          %p464 = pneg %p172
        $region90: #{tpu_custom_call.1} parent=63 // pred_check_branch
          %466 = sbr.rel (%p464) target = $region92
        $region91: #{tpu_custom_call.1} parent=63 // pred_region
          %467 = dma.done [#allocation16], 16
        $region92: #{tpu_custom_call.1} parent=63 // pred_fallthru
          _
        %s468 = sand.u32 %s30, 1
        %s469 = scalar_lea.sflag [#allocation4], %s468
        %s470 = sand.u32 %s185, 1
        %s471 = smul.addr %s470, 6144
        %s472 = scalar_lea.vmem [#allocation17], %s471
        // Predicated region
        $region93: #{tpu_custom_call.1} parent=63 // pred_check
          %p473 = pneg %p198
        $region94: #{tpu_custom_call.1} parent=63 // pred_check_branch
          %475 = sbr.rel (%p473) target = $region96
        $region95: #{tpu_custom_call.1} parent=63 // pred_region
          %476 = dma.done %s469, 98304
        $region96: #{tpu_custom_call.1} parent=63 // pred_fallthru
          _
        // Predicated region
        $region97: #{tpu_custom_call.1} parent=63 // pred_check
          %p477 = pneg %p219
        $region98: #{tpu_custom_call.1} parent=63 // pred_check_branch
          %479 = sbr.rel (%p477) target = $region100
        $region99: #{tpu_custom_call.1} parent=63 // pred_region
          %480 = dma.done [#allocation9], 64
        $region100: #{tpu_custom_call.1} parent=63 // pred_fallthru
          _
        // Predicated region
        $region101: #{tpu_custom_call.1} parent=63 // pred_check
          %p481 = pneg %p240
        $region102: #{tpu_custom_call.1} parent=63 // pred_check_branch
          %483 = sbr.rel (%p481) target = $region104
        $region103: #{tpu_custom_call.1} parent=63 // pred_region
          %484 = dma.done [#allocation12], 8192
        $region104: #{tpu_custom_call.1} parent=63 // pred_fallthru
          _
        // Predicated region
        $region105: #{tpu_custom_call.1} parent=63 // pred_check
          %p485 = pneg %p261
        $region106: #{tpu_custom_call.1} parent=63 // pred_check_branch
          %487 = sbr.rel (%p485) target = $region108
        $region107: #{tpu_custom_call.1} parent=63 // pred_region
          %488 = dma.done [#allocation21], 16
        $region108: #{tpu_custom_call.1} parent=63 // pred_fallthru
          _
        %489 = sfence
        %p490 = pneg %p46
        %p491 = pneg %p43
        %p492 = pneg %p67
        %p493 = pneg %p64
        %p494 = pneg %p88
        %p495 = pneg %p85
        %p496 = pneg %p109
        %p497 = pneg %p106
        %p498 = pneg %p130
        %p499 = pneg %p127
        %p500 = pneg %p151
        %p501 = pneg %p148
        %p502 = pneg %p172
        %p503 = pneg %p169
        %s504 = sand.u32 %s30, 1
        %s505 = scalar_lea.sflag [#allocation4], %s504
        %s506 = sand.u32 %s185, 1
        %s507 = smul.addr %s506, 6144
        %s508 = scalar_lea.vmem [#allocation17], %s507
        %p509 = pneg %p198
        %p510 = pneg %p195
        %p511 = pneg %p219
        %p512 = pneg %p216
        %p513 = pneg %p240
        %p514 = pneg %p237
        %p515 = pneg %p261
        %p516 = pneg %p258
        %p517 = pneg %p282
        %p518 = pneg %p279
        %s519 = smul.u32 384, %s30
        %p520 = scmp.eq.s32.totalorder %s30, 0
        // Predicated region
        $region109: #{tpu_custom_call.1} parent=63 // pred_check
          %p521 = pneg %p520
        $region110: #{tpu_custom_call.1} parent=63 // pred_check_branch
          %523 = sbr.rel (%p521) target = $region112
        $region111: #{tpu_custom_call.1} parent=63 // pred_region
          %524 = vst [vmem:[#allocation2] sm:$0xff] 0.0
        $region112: #{tpu_custom_call.1} parent=63 // pred_fallthru
          _
        %v525 = vld [vmem:[#allocation3] sm:$0x3f]
        %v526 = vld [vmem:[#allocation8] sm:$0x3f]
        %v527 = vld [vmem:[#allocation10] sm:$0x3f]
        %v528 = vld [vmem:[#allocation11] sm:$0x3f]
        %s529 = smul.u32 %s30, 8
        %s530 = smul.u32 %s529, 128
        %s531 = sld [smem:[#allocation13 + %s530]]
        %s532 = sadd.s32 %s530, 1
        %s533 = sld [smem:[#allocation13 + %s532]]
        %s534 = sadd.s32 %s530, 2
        %s535 = sld [smem:[#allocation13 + %s534]]
        %s536 = sld [smem:[#allocation14 + %s529]]
        %s537 = sld [smem:[#allocation15 + %s529]]
        %v538 = vstv %s531
        %v539 = vmul.f32 %v538, %v525
        %v540 = vstv %s533
        %v541 = vmul.f32 %v540, %v526
        %v542 = vadd.f32 %v539, %v541
        %v543 = vstv %s535
        %v544 = vmul.f32 %v543, %v527
        %v545 = vadd.f32 %v542, %v544
        %v546 = vstv %s536
        %v547 = vmul.f32 %v545, %v546
        %v548 = vstv %s537
        %v549 = vadd.f32 %v547, %v548
        %v550 = vmul.f32 %v538, %v526
        %v551 = vmul.f32 %v540, %v527
        %v552 = vadd.f32 %v550, %v551
        %v553 = vmul.f32 %v543, %v528
        %v554 = vadd.f32 %v552, %v553
        %v555 = vmul.f32 %v554, %v546
        %v556 = vadd.f32 %v555, %v548
        %v557 = vmax.f32 %v549, %v556
        %v558 = vmax.f32 %v557, 0.0
        %s559 = sadd.s32 %s529, 1
        %s560 = smul.u32 %s559, 128
        %s561 = sld [smem:[#allocation13 + %s560]]
        %s562 = sadd.s32 %s560, 1
        %s563 = sld [smem:[#allocation13 + %s562]]
        %s564 = sadd.s32 %s560, 2
        %s565 = sld [smem:[#allocation13 + %s564]]
        %s566 = sld [smem:[#allocation14 + %s559]]
        %s567 = sld [smem:[#allocation15 + %s559]]
        %v568 = vstv %s561
        %v569 = vmul.f32 %v568, %v525
        %v570 = vstv %s563
        %v571 = vmul.f32 %v570, %v526
        %v572 = vadd.f32 %v569, %v571
        %v573 = vstv %s565
        %v574 = vmul.f32 %v573, %v527
        %v575 = vadd.f32 %v572, %v574
        %v576 = vstv %s566
        %v577 = vmul.f32 %v575, %v576
        %v578 = vstv %s567
        %v579 = vadd.f32 %v577, %v578
        %v580 = vmul.f32 %v568, %v526
        %v581 = vmul.f32 %v570, %v527
        %v582 = vadd.f32 %v580, %v581
        %v583 = vmul.f32 %v573, %v528
        %v584 = vadd.f32 %v582, %v583
        %v585 = vmul.f32 %v584, %v576
        %v586 = vadd.f32 %v585, %v578
        %v587 = vmax.f32 %v579, %v586
        %v588 = vmax.f32 %v587, 0.0
        %s589 = sadd.s32 %s529, 2
        %s590 = smul.u32 %s589, 128
        %s591 = sld [smem:[#allocation13 + %s590]]
        %s592 = sadd.s32 %s590, 1
        %s593 = sld [smem:[#allocation13 + %s592]]
        %s594 = sadd.s32 %s590, 2
        %s595 = sld [smem:[#allocation13 + %s594]]
        %s596 = sld [smem:[#allocation14 + %s589]]
        %s597 = sld [smem:[#allocation15 + %s589]]
        %v598 = vstv %s591
        %v599 = vmul.f32 %v598, %v525
        %v600 = vstv %s593
        %v601 = vmul.f32 %v600, %v526
        %v602 = vadd.f32 %v599, %v601
        %v603 = vstv %s595
        %v604 = vmul.f32 %v603, %v527
        %v605 = vadd.f32 %v602, %v604
        %v606 = vstv %s596
        %v607 = vmul.f32 %v605, %v606
        %v608 = vstv %s597
        %v609 = vadd.f32 %v607, %v608
        %v610 = vmul.f32 %v598, %v526
        %v611 = vmul.f32 %v600, %v527
        %v612 = vadd.f32 %v610, %v611
        %v613 = vmul.f32 %v603, %v528
        %v614 = vadd.f32 %v612, %v613
        %v615 = vmul.f32 %v614, %v606
        %v616 = vadd.f32 %v615, %v608
        %v617 = vmax.f32 %v609, %v616
        %v618 = vmax.f32 %v617, 0.0
        %s619 = sadd.s32 %s529, 3
        %s620 = smul.u32 %s619, 128
        %s621 = sld [smem:[#allocation13 + %s620]]
        %s622 = sadd.s32 %s620, 1
        %s623 = sld [smem:[#allocation13 + %s622]]
        %s624 = sadd.s32 %s620, 2
        %s625 = sld [smem:[#allocation13 + %s624]]
        %s626 = sld [smem:[#allocation14 + %s619]]
        %s627 = sld [smem:[#allocation15 + %s619]]
        %v628 = vstv %s621
        %v629 = vmul.f32 %v628, %v525
        %v630 = vstv %s623
        %v631 = vmul.f32 %v630, %v526
        %v632 = vadd.f32 %v629, %v631
        %v633 = vstv %s625
        %v634 = vmul.f32 %v633, %v527
        %v635 = vadd.f32 %v632, %v634
        %v636 = vstv %s626
        %v637 = vmul.f32 %v635, %v636
        %v638 = vstv %s627
        %v639 = vadd.f32 %v637, %v638
        %v640 = vmul.f32 %v628, %v526
        %v641 = vmul.f32 %v630, %v527
        %v642 = vadd.f32 %v640, %v641
        %v643 = vmul.f32 %v633, %v528
        %v644 = vadd.f32 %v642, %v643
        %v645 = vmul.f32 %v644, %v636
        %v646 = vadd.f32 %v645, %v638
        %v647 = vmax.f32 %v639, %v646
        %v648 = vmax.f32 %v647, 0.0
        %s649 = sadd.s32 %s529, 4
        %s650 = smul.u32 %s649, 128
        %s651 = sld [smem:[#allocation13 + %s650]]
        %s652 = sadd.s32 %s650, 1
        %s653 = sld [smem:[#allocation13 + %s652]]
        %s654 = sadd.s32 %s650, 2
        %s655 = sld [smem:[#allocation13 + %s654]]
        %s656 = sld [smem:[#allocation14 + %s649]]
        %s657 = sld [smem:[#allocation15 + %s649]]
        %v658 = vstv %s651
        %v659 = vmul.f32 %v658, %v525
        %v660 = vstv %s653
        %v661 = vmul.f32 %v660, %v526
        %v662 = vadd.f32 %v659, %v661
        %v663 = vstv %s655
        %v664 = vmul.f32 %v663, %v527
        %v665 = vadd.f32 %v662, %v664
        %v666 = vstv %s656
        %v667 = vmul.f32 %v665, %v666
        %v668 = vstv %s657
        %v669 = vadd.f32 %v667, %v668
        %v670 = vmul.f32 %v658, %v526
        %v671 = vmul.f32 %v660, %v527
        %v672 = vadd.f32 %v670, %v671
        %v673 = vmul.f32 %v663, %v528
        %v674 = vadd.f32 %v672, %v673
        %v675 = vmul.f32 %v674, %v666
        %v676 = vadd.f32 %v675, %v668
        %v677 = vmax.f32 %v669, %v676
        %v678 = vmax.f32 %v677, 0.0
        %s679 = sadd.s32 %s529, 5
        %s680 = smul.u32 %s679, 128
        %s681 = sld [smem:[#allocation13 + %s680]]
        %s682 = sadd.s32 %s680, 1
        %s683 = sld [smem:[#allocation13 + %s682]]
        %s684 = sadd.s32 %s680, 2
        %s685 = sld [smem:[#allocation13 + %s684]]
        %s686 = sld [smem:[#allocation14 + %s679]]
        %s687 = sld [smem:[#allocation15 + %s679]]
        %v688 = vstv %s681
        %v689 = vmul.f32 %v688, %v525
        %v690 = vstv %s683
        %v691 = vmul.f32 %v690, %v526
        %v692 = vadd.f32 %v689, %v691
        %v693 = vstv %s685
        %v694 = vmul.f32 %v693, %v527
        %v695 = vadd.f32 %v692, %v694
        %v696 = vstv %s686
        %v697 = vmul.f32 %v695, %v696
        %v698 = vstv %s687
        %v699 = vadd.f32 %v697, %v698
        %v700 = vmul.f32 %v688, %v526
        %v701 = vmul.f32 %v690, %v527
        %v702 = vadd.f32 %v700, %v701
        %v703 = vmul.f32 %v693, %v528
        %v704 = vadd.f32 %v702, %v703
        %v705 = vmul.f32 %v704, %v696
        %v706 = vadd.f32 %v705, %v698
        %v707 = vmax.f32 %v699, %v706
        %v708 = vmax.f32 %v707, 0.0
        %s709 = sadd.s32 %s529, 6
        %s710 = smul.u32 %s709, 128
        %s711 = sld [smem:[#allocation13 + %s710]]
        %s712 = sadd.s32 %s710, 1
        %s713 = sld [smem:[#allocation13 + %s712]]
        %s714 = sadd.s32 %s710, 2
        %s715 = sld [smem:[#allocation13 + %s714]]
        %s716 = sld [smem:[#allocation14 + %s709]]
        %s717 = sld [smem:[#allocation15 + %s709]]
        %v718 = vstv %s711
        %v719 = vmul.f32 %v718, %v525
        %v720 = vstv %s713
        %v721 = vmul.f32 %v720, %v526
        %v722 = vadd.f32 %v719, %v721
        %v723 = vstv %s715
        %v724 = vmul.f32 %v723, %v527
        %v725 = vadd.f32 %v722, %v724
        %v726 = vstv %s716
        %v727 = vmul.f32 %v725, %v726
        %v728 = vstv %s717
        %v729 = vadd.f32 %v727, %v728
        %v730 = vmul.f32 %v718, %v526
        %v731 = vmul.f32 %v720, %v527
        %v732 = vadd.f32 %v730, %v731
        %v733 = vmul.f32 %v723, %v528
        %v734 = vadd.f32 %v732, %v733
        %v735 = vmul.f32 %v734, %v726
        %v736 = vadd.f32 %v735, %v728
        %v737 = vmax.f32 %v729, %v736
        %v738 = vmax.f32 %v737, 0.0
        %s739 = sadd.s32 %s529, 7
        %s740 = smul.u32 %s739, 128
        %s741 = sld [smem:[#allocation13 + %s740]]
        %s742 = sadd.s32 %s740, 1
        %s743 = sld [smem:[#allocation13 + %s742]]
        %s744 = sadd.s32 %s740, 2
        %s745 = sld [smem:[#allocation13 + %s744]]
        %s746 = sld [smem:[#allocation14 + %s739]]
        %s747 = sld [smem:[#allocation15 + %s739]]
        %v748 = vstv %s741
        %v749 = vmul.f32 %v748, %v525
        %v750 = vstv %s743
        %v751 = vmul.f32 %v750, %v526
        %v752 = vadd.f32 %v749, %v751
        %v753 = vstv %s745
        %v754 = vmul.f32 %v753, %v527
        %v755 = vadd.f32 %v752, %v754
        %v756 = vstv %s746
        %v757 = vmul.f32 %v755, %v756
        %v758 = vstv %s747
        %v759 = vadd.f32 %v757, %v758
        %v760 = vmul.f32 %v748, %v526
        %v761 = vmul.f32 %v750, %v527
        %v762 = vadd.f32 %v760, %v761
        %v763 = vmul.f32 %v753, %v528
        %v764 = vadd.f32 %v762, %v763
        %v765 = vmul.f32 %v764, %v756
        %v766 = vadd.f32 %v765, %v758
        %v767 = vmax.f32 %v759, %v766
        %v768 = vmax.f32 %v767, 0.0
        %v770 = vcombine.high %v558, %v558
        %v772 = vunpack.c.l.s4 1983009808
        %v773 = vunpack.c.0.s8 %v772
        %v774 = vlaneseq
        %v775 = vshrl.u32 %v774, 7
        %v776 = vsub.s32 %v773, %v775
        %v777 = vrot.slane %v558, %v776
        %v779 = vunpack.c.l.s4 1983009808
        %v780 = vunpack.c.0.s8 %v779
        %v781 = vlaneseq
        %v782 = vshrl.u32 %v781, 7
        %v783 = vsub.s32 %v780, %v782
        %v784 = vrot.slane %v770, %v783
        %v785 = vcombine.high %v777, %v777
        %v790 = vcombine.high %v588, %v588
        %v792 = vunpack.c.l.s4 1983009808
        %v793 = vunpack.c.0.s8 %v792
        %v794 = vlaneseq
        %v795 = vshrl.u32 %v794, 7
        %v796 = vsub.s32 %v793, %v795
        %v797 = vrot.slane %v588, %v796
        %v799 = vunpack.c.l.s4 1983009808
        %v800 = vunpack.c.0.s8 %v799
        %v801 = vlaneseq
        %v802 = vshrl.u32 %v801, 7
        %v803 = vsub.s32 %v800, %v802
        %v804 = vrot.slane %v790, %v803
        %v805 = vcombine.high %v797, %v797
        %v810 = vcombine.high %v618, %v618
        %v812 = vunpack.c.l.s4 1983009808
        %v813 = vunpack.c.0.s8 %v812
        %v814 = vlaneseq
        %v815 = vshrl.u32 %v814, 7
        %v816 = vsub.s32 %v813, %v815
        %v817 = vrot.slane %v618, %v816
        %v819 = vunpack.c.l.s4 1983009808
        %v820 = vunpack.c.0.s8 %v819
        %v821 = vlaneseq
        %v822 = vshrl.u32 %v821, 7
        %v823 = vsub.s32 %v820, %v822
        %v824 = vrot.slane %v810, %v823
        %v825 = vcombine.high %v817, %v817
        %v830 = vcombine.high %v648, %v648
        %v832 = vunpack.c.l.s4 1983009808
        %v833 = vunpack.c.0.s8 %v832
        %v834 = vlaneseq
        %v835 = vshrl.u32 %v834, 7
        %v836 = vsub.s32 %v833, %v835
        %v837 = vrot.slane %v648, %v836
        %v839 = vunpack.c.l.s4 1983009808
        %v840 = vunpack.c.0.s8 %v839
        %v841 = vlaneseq
        %v842 = vshrl.u32 %v841, 7
        %v843 = vsub.s32 %v840, %v842
        %v844 = vrot.slane %v830, %v843
        %v845 = vcombine.high %v837, %v837
        %v850 = vcombine.high %v678, %v678
        %v852 = vunpack.c.l.s4 1983009808
        %v853 = vunpack.c.0.s8 %v852
        %v854 = vlaneseq
        %v855 = vshrl.u32 %v854, 7
        %v856 = vsub.s32 %v853, %v855
        %v857 = vrot.slane %v678, %v856
        %v859 = vunpack.c.l.s4 1983009808
        %v860 = vunpack.c.0.s8 %v859
        %v861 = vlaneseq
        %v862 = vshrl.u32 %v861, 7
        %v863 = vsub.s32 %v860, %v862
        %v864 = vrot.slane %v850, %v863
        %v865 = vcombine.high %v857, %v857
        %v870 = vcombine.high %v708, %v708
        %v872 = vunpack.c.l.s4 1983009808
        %v873 = vunpack.c.0.s8 %v872
        %v874 = vlaneseq
        %v875 = vshrl.u32 %v874, 7
        %v876 = vsub.s32 %v873, %v875
        %v877 = vrot.slane %v708, %v876
        %v879 = vunpack.c.l.s4 1983009808
        %v880 = vunpack.c.0.s8 %v879
        %v881 = vlaneseq
        %v882 = vshrl.u32 %v881, 7
        %v883 = vsub.s32 %v880, %v882
        %v884 = vrot.slane %v870, %v883
        %v885 = vcombine.high %v877, %v877
        %v890 = vcombine.high %v738, %v738
        %v892 = vunpack.c.l.s4 1983009808
        %v893 = vunpack.c.0.s8 %v892
        %v894 = vlaneseq
        %v895 = vshrl.u32 %v894, 7
        %v896 = vsub.s32 %v893, %v895
        %v897 = vrot.slane %v738, %v896
        %v899 = vunpack.c.l.s4 1983009808
        %v900 = vunpack.c.0.s8 %v899
        %v901 = vlaneseq
        %v902 = vshrl.u32 %v901, 7
        %v903 = vsub.s32 %v900, %v902
        %v904 = vrot.slane %v890, %v903
        %v905 = vcombine.high %v897, %v897
        %v910 = vcombine.high %v768, %v768
        %v912 = vunpack.c.l.s4 1983009808
        %v913 = vunpack.c.0.s8 %v912
        %v914 = vlaneseq
        %v915 = vshrl.u32 %v914, 7
        %v916 = vsub.s32 %v913, %v915
        %v917 = vrot.slane %v768, %v916
        %v919 = vunpack.c.l.s4 1983009808
        %v920 = vunpack.c.0.s8 %v919
        %v921 = vlaneseq
        %v922 = vshrl.u32 %v921, 7
        %v923 = vsub.s32 %v920, %v922
        %v924 = vrot.slane %v910, %v923
        %v925 = vcombine.high %v917, %v917
        %v929 = vpack.c.bf16 %v777, %v777
        %v930 = vpack.c.bf16 %v785, %v785
        %v931 = vpack.c.bf16 %v784, %v784
        %v932 = vpack.c.bf16 %v797, %v797
        %v933 = vpack.c.bf16 %v805, %v805
        %v934 = vpack.c.bf16 %v804, %v804
        %v935 = vpack.c.bf16 %v817, %v817
        %v936 = vpack.c.bf16 %v825, %v825
        %v937 = vpack.c.bf16 %v824, %v824
        %v938 = vpack.c.bf16 %v837, %v837
        %v939 = vpack.c.bf16 %v845, %v845
        %v940 = vpack.c.bf16 %v844, %v844
        %v941 = vpack.c.bf16 %v857, %v857
        %v942 = vpack.c.bf16 %v865, %v865
        %v943 = vpack.c.bf16 %v864, %v864
        %v944 = vpack.c.bf16 %v877, %v877
        %v945 = vpack.c.bf16 %v885, %v885
        %v946 = vpack.c.bf16 %v884, %v884
        %v947 = vpack.c.bf16 %v897, %v897
        %v948 = vpack.c.bf16 %v905, %v905
        %v949 = vpack.c.bf16 %v904, %v904
        %v950 = vpack.c.bf16 %v917, %v917
        %v951 = vpack.c.bf16 %v925, %v925
        %v952 = vpack.c.bf16 %v924, %v924
        %v953 = vld [vmem:[#allocation2] sm:$0xff]
        %v954 = vld [vmem:[%s472] sm:$0xff]
        %v955 = vld [vmem:[%s472 + $0x8] sm:$0xff]
        %v956 = vld [vmem:[%s472 + $0x10] sm:$0xff]
        %v957 = vld [vmem:[%s472 + $0x18] sm:$0xff]
        %v958 = vld [vmem:[%s472 + $0x20] sm:$0xff]
        %v959 = vld [vmem:[%s472 + $0x28] sm:$0xff]
        %v960 = vld [vmem:[%s472 + $0x30] sm:$0xff]
        %v961 = vld [vmem:[%s472 + $0x38] sm:$0xff]
        %v962 = vld [vmem:[%s472 + $0x40] sm:$0xff]
        %v963 = vld [vmem:[%s472 + $0x48] sm:$0xff]
        %v964 = vld [vmem:[%s472 + $0x50] sm:$0xff]
        %v965 = vld [vmem:[%s472 + $0x58] sm:$0xff]
        %v966 = vld [vmem:[%s472 + $0x60] sm:$0xff]
        %v967 = vld [vmem:[%s472 + $0x68] sm:$0xff]
        %v968 = vld [vmem:[%s472 + $0x70] sm:$0xff]
        %v969 = vld [vmem:[%s472 + $0x78] sm:$0xff]
        %v970 = vld [vmem:[%s472 + $0x80] sm:$0xff]
        %v971 = vld [vmem:[%s472 + $0x88] sm:$0xff]
        %v972 = vld [vmem:[%s472 + $0x90] sm:$0xff]
        %v973 = vld [vmem:[%s472 + $0x98] sm:$0xff]
        %v974 = vld [vmem:[%s472 + $0xa0] sm:$0xff]
        %v975 = vld [vmem:[%s472 + $0xa8] sm:$0xff]
        %v976 = vld [vmem:[%s472 + $0xb0] sm:$0xff]
        %v977 = vld [vmem:[%s472 + $0xb8] sm:$0xff]
        %v978 = vld [vmem:[%s472 + $0xc0] sm:$0xff]
        %v979 = vld [vmem:[%s472 + $0xc8] sm:$0xff]
        %v980 = vld [vmem:[%s472 + $0xd0] sm:$0xff]
        %v981 = vld [vmem:[%s472 + $0xd8] sm:$0xff]
        %v982 = vld [vmem:[%s472 + $0xe0] sm:$0xff]
        %v983 = vld [vmem:[%s472 + $0xe8] sm:$0xff]
        %v984 = vld [vmem:[%s472 + $0xf0] sm:$0xff]
        %v985 = vld [vmem:[%s472 + $0xf8] sm:$0xff]
        %v986 = vld [vmem:[%s472 + $0x100] sm:$0xff]
        %v987 = vld [vmem:[%s472 + $0x108] sm:$0xff]
        %v988 = vld [vmem:[%s472 + $0x110] sm:$0xff]
        %v989 = vld [vmem:[%s472 + $0x118] sm:$0xff]
        %v990 = vld [vmem:[%s472 + $0x120] sm:$0xff]
        %v991 = vld [vmem:[%s472 + $0x128] sm:$0xff]
        %v992 = vld [vmem:[%s472 + $0x130] sm:$0xff]
        %v993 = vld [vmem:[%s472 + $0x138] sm:$0xff]
        %v994 = vld [vmem:[%s472 + $0x140] sm:$0xff]
        %v995 = vld [vmem:[%s472 + $0x148] sm:$0xff]
        %v996 = vld [vmem:[%s472 + $0x150] sm:$0xff]
        %v997 = vld [vmem:[%s472 + $0x158] sm:$0xff]
        %v998 = vld [vmem:[%s472 + $0x160] sm:$0xff]
        %v999 = vld [vmem:[%s472 + $0x168] sm:$0xff]
        %v1000 = vld [vmem:[%s472 + $0x170] sm:$0xff]
        %v1001 = vld [vmem:[%s472 + $0x178] sm:$0xff]
        %v1002 = vld [vmem:[%s472 + $0x180] sm:$0xff]
        %v1003 = vld [vmem:[%s472 + $0x188] sm:$0xff]
        %v1004 = vld [vmem:[%s472 + $0x190] sm:$0xff]
        %v1005 = vld [vmem:[%s472 + $0x198] sm:$0xff]
        %v1006 = vld [vmem:[%s472 + $0x1a0] sm:$0xff]
        %v1007 = vld [vmem:[%s472 + $0x1a8] sm:$0xff]
        %v1008 = vld [vmem:[%s472 + $0x1b0] sm:$0xff]
        %v1009 = vld [vmem:[%s472 + $0x1b8] sm:$0xff]
        %v1010 = vld [vmem:[%s472 + $0x1c0] sm:$0xff]
        %v1011 = vld [vmem:[%s472 + $0x1c8] sm:$0xff]
        %v1012 = vld [vmem:[%s472 + $0x1d0] sm:$0xff]
        %v1013 = vld [vmem:[%s472 + $0x1d8] sm:$0xff]
        %v1014 = vld [vmem:[%s472 + $0x1e0] sm:$0xff]
        %v1015 = vld [vmem:[%s472 + $0x1e8] sm:$0xff]
        %v1016 = vld [vmem:[%s472 + $0x1f0] sm:$0xff]
        %v1017 = vld [vmem:[%s472 + $0x1f8] sm:$0xff]
        %v1018 = vld [vmem:[%s472 + $0x200] sm:$0xff]
        %v1019 = vld [vmem:[%s472 + $0x208] sm:$0xff]
        %v1020 = vld [vmem:[%s472 + $0x210] sm:$0xff]
        %v1021 = vld [vmem:[%s472 + $0x218] sm:$0xff]
        %v1022 = vld [vmem:[%s472 + $0x220] sm:$0xff]
        %v1023 = vld [vmem:[%s472 + $0x228] sm:$0xff]
        %v1024 = vld [vmem:[%s472 + $0x230] sm:$0xff]
        %v1025 = vld [vmem:[%s472 + $0x238] sm:$0xff]
        %v1026 = vld [vmem:[%s472 + $0x240] sm:$0xff]
        %v1027 = vld [vmem:[%s472 + $0x248] sm:$0xff]
        %v1028 = vld [vmem:[%s472 + $0x250] sm:$0xff]
        %v1029 = vld [vmem:[%s472 + $0x258] sm:$0xff]
        %v1030 = vld [vmem:[%s472 + $0x260] sm:$0xff]
        %v1031 = vld [vmem:[%s472 + $0x268] sm:$0xff]
        %v1032 = vld [vmem:[%s472 + $0x270] sm:$0xff]
        %v1033 = vld [vmem:[%s472 + $0x278] sm:$0xff]
        %v1034 = vld [vmem:[%s472 + $0x280] sm:$0xff]
        %v1035 = vld [vmem:[%s472 + $0x288] sm:$0xff]
        %v1036 = vld [vmem:[%s472 + $0x290] sm:$0xff]
        %v1037 = vld [vmem:[%s472 + $0x298] sm:$0xff]
        %v1038 = vld [vmem:[%s472 + $0x2a0] sm:$0xff]
        %v1039 = vld [vmem:[%s472 + $0x2a8] sm:$0xff]
        %v1040 = vld [vmem:[%s472 + $0x2b0] sm:$0xff]
        %v1041 = vld [vmem:[%s472 + $0x2b8] sm:$0xff]
        %v1042 = vld [vmem:[%s472 + $0x2c0] sm:$0xff]
        %v1043 = vld [vmem:[%s472 + $0x2c8] sm:$0xff]
        %v1044 = vld [vmem:[%s472 + $0x2d0] sm:$0xff]
        %v1045 = vld [vmem:[%s472 + $0x2d8] sm:$0xff]
        %v1046 = vld [vmem:[%s472 + $0x2e0] sm:$0xff]
        %v1047 = vld [vmem:[%s472 + $0x2e8] sm:$0xff]
        %v1048 = vld [vmem:[%s472 + $0x2f0] sm:$0xff]
        %v1049 = vld [vmem:[%s472 + $0x2f8] sm:$0xff]
        %v1050 = vld [vmem:[%s472 + $0x300] sm:$0xff]
        %v1051 = vld [vmem:[%s472 + $0x308] sm:$0xff]
        %v1052 = vld [vmem:[%s472 + $0x310] sm:$0xff]
        %v1053 = vld [vmem:[%s472 + $0x318] sm:$0xff]
        %v1054 = vld [vmem:[%s472 + $0x320] sm:$0xff]
        %v1055 = vld [vmem:[%s472 + $0x328] sm:$0xff]
        %v1056 = vld [vmem:[%s472 + $0x330] sm:$0xff]
        %v1057 = vld [vmem:[%s472 + $0x338] sm:$0xff]
        %v1058 = vld [vmem:[%s472 + $0x340] sm:$0xff]
        %v1059 = vld [vmem:[%s472 + $0x348] sm:$0xff]
        %v1060 = vld [vmem:[%s472 + $0x350] sm:$0xff]
        %v1061 = vld [vmem:[%s472 + $0x358] sm:$0xff]
        %v1062 = vld [vmem:[%s472 + $0x360] sm:$0xff]
        %v1063 = vld [vmem:[%s472 + $0x368] sm:$0xff]
        %v1064 = vld [vmem:[%s472 + $0x370] sm:$0xff]
        %v1065 = vld [vmem:[%s472 + $0x378] sm:$0xff]
        %v1066 = vld [vmem:[%s472 + $0x380] sm:$0xff]
        %v1067 = vld [vmem:[%s472 + $0x388] sm:$0xff]
        %v1068 = vld [vmem:[%s472 + $0x390] sm:$0xff]
        %v1069 = vld [vmem:[%s472 + $0x398] sm:$0xff]
        %v1070 = vld [vmem:[%s472 + $0x3a0] sm:$0xff]
        %v1071 = vld [vmem:[%s472 + $0x3a8] sm:$0xff]
        %v1072 = vld [vmem:[%s472 + $0x3b0] sm:$0xff]
        %v1073 = vld [vmem:[%s472 + $0x3b8] sm:$0xff]
        %v1074 = vld [vmem:[%s472 + $0x3c0] sm:$0xff]
        %v1075 = vld [vmem:[%s472 + $0x3c8] sm:$0xff]
        %v1076 = vld [vmem:[%s472 + $0x3d0] sm:$0xff]
        %v1077 = vld [vmem:[%s472 + $0x3d8] sm:$0xff]
        %v1078 = vld [vmem:[%s472 + $0x3e0] sm:$0xff]
        %v1079 = vld [vmem:[%s472 + $0x3e8] sm:$0xff]
        %v1080 = vld [vmem:[%s472 + $0x3f0] sm:$0xff]
        %v1081 = vld [vmem:[%s472 + $0x3f8] sm:$0xff]
        %v1082 = vld [vmem:[%s472 + $0x400] sm:$0xff]
        %v1083 = vld [vmem:[%s472 + $0x408] sm:$0xff]
        %v1084 = vld [vmem:[%s472 + $0x410] sm:$0xff]
        %v1085 = vld [vmem:[%s472 + $0x418] sm:$0xff]
        %v1086 = vld [vmem:[%s472 + $0x420] sm:$0xff]
        %v1087 = vld [vmem:[%s472 + $0x428] sm:$0xff]
        %v1088 = vld [vmem:[%s472 + $0x430] sm:$0xff]
        %v1089 = vld [vmem:[%s472 + $0x438] sm:$0xff]
        %v1090 = vld [vmem:[%s472 + $0x440] sm:$0xff]
        %v1091 = vld [vmem:[%s472 + $0x448] sm:$0xff]
        %v1092 = vld [vmem:[%s472 + $0x450] sm:$0xff]
        %v1093 = vld [vmem:[%s472 + $0x458] sm:$0xff]
        %v1094 = vld [vmem:[%s472 + $0x460] sm:$0xff]
        %v1095 = vld [vmem:[%s472 + $0x468] sm:$0xff]
        %v1096 = vld [vmem:[%s472 + $0x470] sm:$0xff]
        %v1097 = vld [vmem:[%s472 + $0x478] sm:$0xff]
        %v1098 = vld [vmem:[%s472 + $0x480] sm:$0xff]
        %v1099 = vld [vmem:[%s472 + $0x488] sm:$0xff]
        %v1100 = vld [vmem:[%s472 + $0x490] sm:$0xff]
        %v1101 = vld [vmem:[%s472 + $0x498] sm:$0xff]
        %v1102 = vld [vmem:[%s472 + $0x4a0] sm:$0xff]
        %v1103 = vld [vmem:[%s472 + $0x4a8] sm:$0xff]
        %v1104 = vld [vmem:[%s472 + $0x4b0] sm:$0xff]
        %v1105 = vld [vmem:[%s472 + $0x4b8] sm:$0xff]
        %v1106 = vld [vmem:[%s472 + $0x4c0] sm:$0xff]
        %v1107 = vld [vmem:[%s472 + $0x4c8] sm:$0xff]
        %v1108 = vld [vmem:[%s472 + $0x4d0] sm:$0xff]
        %v1109 = vld [vmem:[%s472 + $0x4d8] sm:$0xff]
        %v1110 = vld [vmem:[%s472 + $0x4e0] sm:$0xff]
        %v1111 = vld [vmem:[%s472 + $0x4e8] sm:$0xff]
        %v1112 = vld [vmem:[%s472 + $0x4f0] sm:$0xff]
        %v1113 = vld [vmem:[%s472 + $0x4f8] sm:$0xff]
        %v1114 = vld [vmem:[%s472 + $0x500] sm:$0xff]
        %v1115 = vld [vmem:[%s472 + $0x508] sm:$0xff]
        %v1116 = vld [vmem:[%s472 + $0x510] sm:$0xff]
        %v1117 = vld [vmem:[%s472 + $0x518] sm:$0xff]
        %v1118 = vld [vmem:[%s472 + $0x520] sm:$0xff]
        %v1119 = vld [vmem:[%s472 + $0x528] sm:$0xff]
        %v1120 = vld [vmem:[%s472 + $0x530] sm:$0xff]
        %v1121 = vld [vmem:[%s472 + $0x538] sm:$0xff]
        %v1122 = vld [vmem:[%s472 + $0x540] sm:$0xff]
        %v1123 = vld [vmem:[%s472 + $0x548] sm:$0xff]
        %v1124 = vld [vmem:[%s472 + $0x550] sm:$0xff]
        %v1125 = vld [vmem:[%s472 + $0x558] sm:$0xff]
        %v1126 = vld [vmem:[%s472 + $0x560] sm:$0xff]
        %v1127 = vld [vmem:[%s472 + $0x568] sm:$0xff]
        %v1128 = vld [vmem:[%s472 + $0x570] sm:$0xff]
        %v1129 = vld [vmem:[%s472 + $0x578] sm:$0xff]
        %v1130 = vld [vmem:[%s472 + $0x580] sm:$0xff]
        %v1131 = vld [vmem:[%s472 + $0x588] sm:$0xff]
        %v1132 = vld [vmem:[%s472 + $0x590] sm:$0xff]
        %v1133 = vld [vmem:[%s472 + $0x598] sm:$0xff]
        %v1134 = vld [vmem:[%s472 + $0x5a0] sm:$0xff]
        %v1135 = vld [vmem:[%s472 + $0x5a8] sm:$0xff]
        %v1136 = vld [vmem:[%s472 + $0x5b0] sm:$0xff]
        %v1137 = vld [vmem:[%s472 + $0x5b8] sm:$0xff]
        %v1138 = vld [vmem:[%s472 + $0x5c0] sm:$0xff]
        %v1139 = vld [vmem:[%s472 + $0x5c8] sm:$0xff]
        %v1140 = vld [vmem:[%s472 + $0x5d0] sm:$0xff]
        %v1141 = vld [vmem:[%s472 + $0x5d8] sm:$0xff]
        %v1142 = vld [vmem:[%s472 + $0x5e0] sm:$0xff]
        %v1143 = vld [vmem:[%s472 + $0x5e8] sm:$0xff]
        %v1144 = vld [vmem:[%s472 + $0x5f0] sm:$0xff]
        %v1145 = vld [vmem:[%s472 + $0x5f8] sm:$0xff]
        %v1146 = vld [vmem:[%s472 + $0x600] sm:$0xff]
        %v1147 = vld [vmem:[%s472 + $0x608] sm:$0xff]
        %v1148 = vld [vmem:[%s472 + $0x610] sm:$0xff]
        %v1149 = vld [vmem:[%s472 + $0x618] sm:$0xff]
        %v1150 = vld [vmem:[%s472 + $0x620] sm:$0xff]
        %v1151 = vld [vmem:[%s472 + $0x628] sm:$0xff]
        %v1152 = vld [vmem:[%s472 + $0x630] sm:$0xff]
        %v1153 = vld [vmem:[%s472 + $0x638] sm:$0xff]
        %v1154 = vld [vmem:[%s472 + $0x640] sm:$0xff]
        %v1155 = vld [vmem:[%s472 + $0x648] sm:$0xff]
        %v1156 = vld [vmem:[%s472 + $0x650] sm:$0xff]
        %v1157 = vld [vmem:[%s472 + $0x658] sm:$0xff]
        %v1158 = vld [vmem:[%s472 + $0x660] sm:$0xff]
        %v1159 = vld [vmem:[%s472 + $0x668] sm:$0xff]
        %v1160 = vld [vmem:[%s472 + $0x670] sm:$0xff]
        %v1161 = vld [vmem:[%s472 + $0x678] sm:$0xff]
        %v1162 = vld [vmem:[%s472 + $0x680] sm:$0xff]
        %v1163 = vld [vmem:[%s472 + $0x688] sm:$0xff]
        %v1164 = vld [vmem:[%s472 + $0x690] sm:$0xff]
        %v1165 = vld [vmem:[%s472 + $0x698] sm:$0xff]
        %v1166 = vld [vmem:[%s472 + $0x6a0] sm:$0xff]
        %v1167 = vld [vmem:[%s472 + $0x6a8] sm:$0xff]
        %v1168 = vld [vmem:[%s472 + $0x6b0] sm:$0xff]
        %v1169 = vld [vmem:[%s472 + $0x6b8] sm:$0xff]
        %v1170 = vld [vmem:[%s472 + $0x6c0] sm:$0xff]
        %v1171 = vld [vmem:[%s472 + $0x6c8] sm:$0xff]
        %v1172 = vld [vmem:[%s472 + $0x6d0] sm:$0xff]
        %v1173 = vld [vmem:[%s472 + $0x6d8] sm:$0xff]
        %v1174 = vld [vmem:[%s472 + $0x6e0] sm:$0xff]
        %v1175 = vld [vmem:[%s472 + $0x6e8] sm:$0xff]
        %v1176 = vld [vmem:[%s472 + $0x6f0] sm:$0xff]
        %v1177 = vld [vmem:[%s472 + $0x6f8] sm:$0xff]
        %v1178 = vld [vmem:[%s472 + $0x700] sm:$0xff]
        %v1179 = vld [vmem:[%s472 + $0x708] sm:$0xff]
        %v1180 = vld [vmem:[%s472 + $0x710] sm:$0xff]
        %v1181 = vld [vmem:[%s472 + $0x718] sm:$0xff]
        %v1182 = vld [vmem:[%s472 + $0x720] sm:$0xff]
        %v1183 = vld [vmem:[%s472 + $0x728] sm:$0xff]
        %v1184 = vld [vmem:[%s472 + $0x730] sm:$0xff]
        %v1185 = vld [vmem:[%s472 + $0x738] sm:$0xff]
        %v1186 = vld [vmem:[%s472 + $0x740] sm:$0xff]
        %v1187 = vld [vmem:[%s472 + $0x748] sm:$0xff]
        %v1188 = vld [vmem:[%s472 + $0x750] sm:$0xff]
        %v1189 = vld [vmem:[%s472 + $0x758] sm:$0xff]
        %v1190 = vld [vmem:[%s472 + $0x760] sm:$0xff]
        %v1191 = vld [vmem:[%s472 + $0x768] sm:$0xff]
        %v1192 = vld [vmem:[%s472 + $0x770] sm:$0xff]
        %v1193 = vld [vmem:[%s472 + $0x778] sm:$0xff]
        %v1194 = vld [vmem:[%s472 + $0x780] sm:$0xff]
        %v1195 = vld [vmem:[%s472 + $0x788] sm:$0xff]
        %v1196 = vld [vmem:[%s472 + $0x790] sm:$0xff]
        %v1197 = vld [vmem:[%s472 + $0x798] sm:$0xff]
        %v1198 = vld [vmem:[%s472 + $0x7a0] sm:$0xff]
        %v1199 = vld [vmem:[%s472 + $0x7a8] sm:$0xff]
        %v1200 = vld [vmem:[%s472 + $0x7b0] sm:$0xff]
        %v1201 = vld [vmem:[%s472 + $0x7b8] sm:$0xff]
        %v1202 = vld [vmem:[%s472 + $0x7c0] sm:$0xff]
        %v1203 = vld [vmem:[%s472 + $0x7c8] sm:$0xff]
        %v1204 = vld [vmem:[%s472 + $0x7d0] sm:$0xff]
        %v1205 = vld [vmem:[%s472 + $0x7d8] sm:$0xff]
        %v1206 = vld [vmem:[%s472 + $0x7e0] sm:$0xff]
        %v1207 = vld [vmem:[%s472 + $0x7e8] sm:$0xff]
        %v1208 = vld [vmem:[%s472 + $0x7f0] sm:$0xff]
        %v1209 = vld [vmem:[%s472 + $0x7f8] sm:$0xff]
        %v1210 = vld [vmem:[%s472 + $0x800] sm:$0xff]
        %v1211 = vld [vmem:[%s472 + $0x808] sm:$0xff]
        %v1212 = vld [vmem:[%s472 + $0x810] sm:$0xff]
        %v1213 = vld [vmem:[%s472 + $0x818] sm:$0xff]
        %v1214 = vld [vmem:[%s472 + $0x820] sm:$0xff]
        %v1215 = vld [vmem:[%s472 + $0x828] sm:$0xff]
        %v1216 = vld [vmem:[%s472 + $0x830] sm:$0xff]
        %v1217 = vld [vmem:[%s472 + $0x838] sm:$0xff]
        %v1218 = vld [vmem:[%s472 + $0x840] sm:$0xff]
        %v1219 = vld [vmem:[%s472 + $0x848] sm:$0xff]
        %v1220 = vld [vmem:[%s472 + $0x850] sm:$0xff]
        %v1221 = vld [vmem:[%s472 + $0x858] sm:$0xff]
        %v1222 = vld [vmem:[%s472 + $0x860] sm:$0xff]
        %v1223 = vld [vmem:[%s472 + $0x868] sm:$0xff]
        %v1224 = vld [vmem:[%s472 + $0x870] sm:$0xff]
        %v1225 = vld [vmem:[%s472 + $0x878] sm:$0xff]
        %v1226 = vld [vmem:[%s472 + $0x880] sm:$0xff]
        %v1227 = vld [vmem:[%s472 + $0x888] sm:$0xff]
        %v1228 = vld [vmem:[%s472 + $0x890] sm:$0xff]
        %v1229 = vld [vmem:[%s472 + $0x898] sm:$0xff]
        %v1230 = vld [vmem:[%s472 + $0x8a0] sm:$0xff]
        %v1231 = vld [vmem:[%s472 + $0x8a8] sm:$0xff]
        %v1232 = vld [vmem:[%s472 + $0x8b0] sm:$0xff]
        %v1233 = vld [vmem:[%s472 + $0x8b8] sm:$0xff]
        %v1234 = vld [vmem:[%s472 + $0x8c0] sm:$0xff]
        %v1235 = vld [vmem:[%s472 + $0x8c8] sm:$0xff]
        %v1236 = vld [vmem:[%s472 + $0x8d0] sm:$0xff]
        %v1237 = vld [vmem:[%s472 + $0x8d8] sm:$0xff]
        %v1238 = vld [vmem:[%s472 + $0x8e0] sm:$0xff]
        %v1239 = vld [vmem:[%s472 + $0x8e8] sm:$0xff]
        %v1240 = vld [vmem:[%s472 + $0x8f0] sm:$0xff]
        %v1241 = vld [vmem:[%s472 + $0x8f8] sm:$0xff]
        %v1242 = vld [vmem:[%s472 + $0x900] sm:$0xff]
        %v1243 = vld [vmem:[%s472 + $0x908] sm:$0xff]
        %v1244 = vld [vmem:[%s472 + $0x910] sm:$0xff]
        %v1245 = vld [vmem:[%s472 + $0x918] sm:$0xff]
        %v1246 = vld [vmem:[%s472 + $0x920] sm:$0xff]
        %v1247 = vld [vmem:[%s472 + $0x928] sm:$0xff]
        %v1248 = vld [vmem:[%s472 + $0x930] sm:$0xff]
        %v1249 = vld [vmem:[%s472 + $0x938] sm:$0xff]
        %v1250 = vld [vmem:[%s472 + $0x940] sm:$0xff]
        %v1251 = vld [vmem:[%s472 + $0x948] sm:$0xff]
        %v1252 = vld [vmem:[%s472 + $0x950] sm:$0xff]
        %v1253 = vld [vmem:[%s472 + $0x958] sm:$0xff]
        %v1254 = vld [vmem:[%s472 + $0x960] sm:$0xff]
        %v1255 = vld [vmem:[%s472 + $0x968] sm:$0xff]
        %v1256 = vld [vmem:[%s472 + $0x970] sm:$0xff]
        %v1257 = vld [vmem:[%s472 + $0x978] sm:$0xff]
        %v1258 = vld [vmem:[%s472 + $0x980] sm:$0xff]
        %v1259 = vld [vmem:[%s472 + $0x988] sm:$0xff]
        %v1260 = vld [vmem:[%s472 + $0x990] sm:$0xff]
        %v1261 = vld [vmem:[%s472 + $0x998] sm:$0xff]
        %v1262 = vld [vmem:[%s472 + $0x9a0] sm:$0xff]
        %v1263 = vld [vmem:[%s472 + $0x9a8] sm:$0xff]
        %v1264 = vld [vmem:[%s472 + $0x9b0] sm:$0xff]
        %v1265 = vld [vmem:[%s472 + $0x9b8] sm:$0xff]
        %v1266 = vld [vmem:[%s472 + $0x9c0] sm:$0xff]
        %v1267 = vld [vmem:[%s472 + $0x9c8] sm:$0xff]
        %v1268 = vld [vmem:[%s472 + $0x9d0] sm:$0xff]
        %v1269 = vld [vmem:[%s472 + $0x9d8] sm:$0xff]
        %v1270 = vld [vmem:[%s472 + $0x9e0] sm:$0xff]
        %v1271 = vld [vmem:[%s472 + $0x9e8] sm:$0xff]
        %v1272 = vld [vmem:[%s472 + $0x9f0] sm:$0xff]
        %v1273 = vld [vmem:[%s472 + $0x9f8] sm:$0xff]
        %v1274 = vld [vmem:[%s472 + $0xa00] sm:$0xff]
        %v1275 = vld [vmem:[%s472 + $0xa08] sm:$0xff]
        %v1276 = vld [vmem:[%s472 + $0xa10] sm:$0xff]
        %v1277 = vld [vmem:[%s472 + $0xa18] sm:$0xff]
        %v1278 = vld [vmem:[%s472 + $0xa20] sm:$0xff]
        %v1279 = vld [vmem:[%s472 + $0xa28] sm:$0xff]
        %v1280 = vld [vmem:[%s472 + $0xa30] sm:$0xff]
        %v1281 = vld [vmem:[%s472 + $0xa38] sm:$0xff]
        %v1282 = vld [vmem:[%s472 + $0xa40] sm:$0xff]
        %v1283 = vld [vmem:[%s472 + $0xa48] sm:$0xff]
        %v1284 = vld [vmem:[%s472 + $0xa50] sm:$0xff]
        %v1285 = vld [vmem:[%s472 + $0xa58] sm:$0xff]
        %v1286 = vld [vmem:[%s472 + $0xa60] sm:$0xff]
        %v1287 = vld [vmem:[%s472 + $0xa68] sm:$0xff]
        %v1288 = vld [vmem:[%s472 + $0xa70] sm:$0xff]
        %v1289 = vld [vmem:[%s472 + $0xa78] sm:$0xff]
        %v1290 = vld [vmem:[%s472 + $0xa80] sm:$0xff]
        %v1291 = vld [vmem:[%s472 + $0xa88] sm:$0xff]
        %v1292 = vld [vmem:[%s472 + $0xa90] sm:$0xff]
        %v1293 = vld [vmem:[%s472 + $0xa98] sm:$0xff]
        %v1294 = vld [vmem:[%s472 + $0xaa0] sm:$0xff]
        %v1295 = vld [vmem:[%s472 + $0xaa8] sm:$0xff]
        %v1296 = vld [vmem:[%s472 + $0xab0] sm:$0xff]
        %v1297 = vld [vmem:[%s472 + $0xab8] sm:$0xff]
        %v1298 = vld [vmem:[%s472 + $0xac0] sm:$0xff]
        %v1299 = vld [vmem:[%s472 + $0xac8] sm:$0xff]
        %v1300 = vld [vmem:[%s472 + $0xad0] sm:$0xff]
        %v1301 = vld [vmem:[%s472 + $0xad8] sm:$0xff]
        %v1302 = vld [vmem:[%s472 + $0xae0] sm:$0xff]
        %v1303 = vld [vmem:[%s472 + $0xae8] sm:$0xff]
        %v1304 = vld [vmem:[%s472 + $0xaf0] sm:$0xff]
        %v1305 = vld [vmem:[%s472 + $0xaf8] sm:$0xff]
        %v1306 = vld [vmem:[%s472 + $0xb00] sm:$0xff]
        %v1307 = vld [vmem:[%s472 + $0xb08] sm:$0xff]
        %v1308 = vld [vmem:[%s472 + $0xb10] sm:$0xff]
        %v1309 = vld [vmem:[%s472 + $0xb18] sm:$0xff]
        %v1310 = vld [vmem:[%s472 + $0xb20] sm:$0xff]
        %v1311 = vld [vmem:[%s472 + $0xb28] sm:$0xff]
        %v1312 = vld [vmem:[%s472 + $0xb30] sm:$0xff]
        %v1313 = vld [vmem:[%s472 + $0xb38] sm:$0xff]
        %v1314 = vld [vmem:[%s472 + $0xb40] sm:$0xff]
        %v1315 = vld [vmem:[%s472 + $0xb48] sm:$0xff]
        %v1316 = vld [vmem:[%s472 + $0xb50] sm:$0xff]
        %v1317 = vld [vmem:[%s472 + $0xb58] sm:$0xff]
        %v1318 = vld [vmem:[%s472 + $0xb60] sm:$0xff]
        %v1319 = vld [vmem:[%s472 + $0xb68] sm:$0xff]
        %v1320 = vld [vmem:[%s472 + $0xb70] sm:$0xff]
        %v1321 = vld [vmem:[%s472 + $0xb78] sm:$0xff]
        %v1322 = vld [vmem:[%s472 + $0xb80] sm:$0xff]
        %v1323 = vld [vmem:[%s472 + $0xb88] sm:$0xff]
        %v1324 = vld [vmem:[%s472 + $0xb90] sm:$0xff]
        %v1325 = vld [vmem:[%s472 + $0xb98] sm:$0xff]
        %v1326 = vld [vmem:[%s472 + $0xba0] sm:$0xff]
        %v1327 = vld [vmem:[%s472 + $0xba8] sm:$0xff]
        %v1328 = vld [vmem:[%s472 + $0xbb0] sm:$0xff]
        %v1329 = vld [vmem:[%s472 + $0xbb8] sm:$0xff]
        %v1330 = vld [vmem:[%s472 + $0xbc0] sm:$0xff]
        %v1331 = vld [vmem:[%s472 + $0xbc8] sm:$0xff]
        %v1332 = vld [vmem:[%s472 + $0xbd0] sm:$0xff]
        %v1333 = vld [vmem:[%s472 + $0xbd8] sm:$0xff]
        %v1334 = vld [vmem:[%s472 + $0xbe0] sm:$0xff]
        %v1335 = vld [vmem:[%s472 + $0xbe8] sm:$0xff]
        %v1336 = vld [vmem:[%s472 + $0xbf0] sm:$0xff]
        %v1337 = vld [vmem:[%s472 + $0xbf8] sm:$0xff]
        %v1338 = vld [vmem:[%s472 + $0xc00] sm:$0xff]
        %v1339 = vld [vmem:[%s472 + $0xc08] sm:$0xff]
        %v1340 = vld [vmem:[%s472 + $0xc10] sm:$0xff]
        %v1341 = vld [vmem:[%s472 + $0xc18] sm:$0xff]
        %v1342 = vld [vmem:[%s472 + $0xc20] sm:$0xff]
        %v1343 = vld [vmem:[%s472 + $0xc28] sm:$0xff]
        %v1344 = vld [vmem:[%s472 + $0xc30] sm:$0xff]
        %v1345 = vld [vmem:[%s472 + $0xc38] sm:$0xff]
        %v1346 = vld [vmem:[%s472 + $0xc40] sm:$0xff]
        %v1347 = vld [vmem:[%s472 + $0xc48] sm:$0xff]
        %v1348 = vld [vmem:[%s472 + $0xc50] sm:$0xff]
        %v1349 = vld [vmem:[%s472 + $0xc58] sm:$0xff]
        %v1350 = vld [vmem:[%s472 + $0xc60] sm:$0xff]
        %v1351 = vld [vmem:[%s472 + $0xc68] sm:$0xff]
        %v1352 = vld [vmem:[%s472 + $0xc70] sm:$0xff]
        %v1353 = vld [vmem:[%s472 + $0xc78] sm:$0xff]
        %v1354 = vld [vmem:[%s472 + $0xc80] sm:$0xff]
        %v1355 = vld [vmem:[%s472 + $0xc88] sm:$0xff]
        %v1356 = vld [vmem:[%s472 + $0xc90] sm:$0xff]
        %v1357 = vld [vmem:[%s472 + $0xc98] sm:$0xff]
        %v1358 = vld [vmem:[%s472 + $0xca0] sm:$0xff]
        %v1359 = vld [vmem:[%s472 + $0xca8] sm:$0xff]
        %v1360 = vld [vmem:[%s472 + $0xcb0] sm:$0xff]
        %v1361 = vld [vmem:[%s472 + $0xcb8] sm:$0xff]
        %v1362 = vld [vmem:[%s472 + $0xcc0] sm:$0xff]
        %v1363 = vld [vmem:[%s472 + $0xcc8] sm:$0xff]
        %v1364 = vld [vmem:[%s472 + $0xcd0] sm:$0xff]
        %v1365 = vld [vmem:[%s472 + $0xcd8] sm:$0xff]
        %v1366 = vld [vmem:[%s472 + $0xce0] sm:$0xff]
        %v1367 = vld [vmem:[%s472 + $0xce8] sm:$0xff]
        %v1368 = vld [vmem:[%s472 + $0xcf0] sm:$0xff]
        %v1369 = vld [vmem:[%s472 + $0xcf8] sm:$0xff]
        %v1370 = vld [vmem:[%s472 + $0xd00] sm:$0xff]
        %v1371 = vld [vmem:[%s472 + $0xd08] sm:$0xff]
        %v1372 = vld [vmem:[%s472 + $0xd10] sm:$0xff]
        %v1373 = vld [vmem:[%s472 + $0xd18] sm:$0xff]
        %v1374 = vld [vmem:[%s472 + $0xd20] sm:$0xff]
        %v1375 = vld [vmem:[%s472 + $0xd28] sm:$0xff]
        %v1376 = vld [vmem:[%s472 + $0xd30] sm:$0xff]
        %v1377 = vld [vmem:[%s472 + $0xd38] sm:$0xff]
        %v1378 = vld [vmem:[%s472 + $0xd40] sm:$0xff]
        %v1379 = vld [vmem:[%s472 + $0xd48] sm:$0xff]
        %v1380 = vld [vmem:[%s472 + $0xd50] sm:$0xff]
        %v1381 = vld [vmem:[%s472 + $0xd58] sm:$0xff]
        %v1382 = vld [vmem:[%s472 + $0xd60] sm:$0xff]
        %v1383 = vld [vmem:[%s472 + $0xd68] sm:$0xff]
        %v1384 = vld [vmem:[%s472 + $0xd70] sm:$0xff]
        %v1385 = vld [vmem:[%s472 + $0xd78] sm:$0xff]
        %v1386 = vld [vmem:[%s472 + $0xd80] sm:$0xff]
        %v1387 = vld [vmem:[%s472 + $0xd88] sm:$0xff]
        %v1388 = vld [vmem:[%s472 + $0xd90] sm:$0xff]
        %v1389 = vld [vmem:[%s472 + $0xd98] sm:$0xff]
        %v1390 = vld [vmem:[%s472 + $0xda0] sm:$0xff]
        %v1391 = vld [vmem:[%s472 + $0xda8] sm:$0xff]
        %v1392 = vld [vmem:[%s472 + $0xdb0] sm:$0xff]
        %v1393 = vld [vmem:[%s472 + $0xdb8] sm:$0xff]
        %v1394 = vld [vmem:[%s472 + $0xdc0] sm:$0xff]
        %v1395 = vld [vmem:[%s472 + $0xdc8] sm:$0xff]
        %v1396 = vld [vmem:[%s472 + $0xdd0] sm:$0xff]
        %v1397 = vld [vmem:[%s472 + $0xdd8] sm:$0xff]
        %v1398 = vld [vmem:[%s472 + $0xde0] sm:$0xff]
        %v1399 = vld [vmem:[%s472 + $0xde8] sm:$0xff]
        %v1400 = vld [vmem:[%s472 + $0xdf0] sm:$0xff]
        %v1401 = vld [vmem:[%s472 + $0xdf8] sm:$0xff]
        %v1402 = vld [vmem:[%s472 + $0xe00] sm:$0xff]
        %v1403 = vld [vmem:[%s472 + $0xe08] sm:$0xff]
        %v1404 = vld [vmem:[%s472 + $0xe10] sm:$0xff]
        %v1405 = vld [vmem:[%s472 + $0xe18] sm:$0xff]
        %v1406 = vld [vmem:[%s472 + $0xe20] sm:$0xff]
        %v1407 = vld [vmem:[%s472 + $0xe28] sm:$0xff]
        %v1408 = vld [vmem:[%s472 + $0xe30] sm:$0xff]
        %v1409 = vld [vmem:[%s472 + $0xe38] sm:$0xff]
        %v1410 = vld [vmem:[%s472 + $0xe40] sm:$0xff]
        %v1411 = vld [vmem:[%s472 + $0xe48] sm:$0xff]
        %v1412 = vld [vmem:[%s472 + $0xe50] sm:$0xff]
        %v1413 = vld [vmem:[%s472 + $0xe58] sm:$0xff]
        %v1414 = vld [vmem:[%s472 + $0xe60] sm:$0xff]
        %v1415 = vld [vmem:[%s472 + $0xe68] sm:$0xff]
        %v1416 = vld [vmem:[%s472 + $0xe70] sm:$0xff]
        %v1417 = vld [vmem:[%s472 + $0xe78] sm:$0xff]
        %v1418 = vld [vmem:[%s472 + $0xe80] sm:$0xff]
        %v1419 = vld [vmem:[%s472 + $0xe88] sm:$0xff]
        %v1420 = vld [vmem:[%s472 + $0xe90] sm:$0xff]
        %v1421 = vld [vmem:[%s472 + $0xe98] sm:$0xff]
        %v1422 = vld [vmem:[%s472 + $0xea0] sm:$0xff]
        %v1423 = vld [vmem:[%s472 + $0xea8] sm:$0xff]
        %v1424 = vld [vmem:[%s472 + $0xeb0] sm:$0xff]
        %v1425 = vld [vmem:[%s472 + $0xeb8] sm:$0xff]
        %v1426 = vld [vmem:[%s472 + $0xec0] sm:$0xff]
        %v1427 = vld [vmem:[%s472 + $0xec8] sm:$0xff]
        %v1428 = vld [vmem:[%s472 + $0xed0] sm:$0xff]
        %v1429 = vld [vmem:[%s472 + $0xed8] sm:$0xff]
        %v1430 = vld [vmem:[%s472 + $0xee0] sm:$0xff]
        %v1431 = vld [vmem:[%s472 + $0xee8] sm:$0xff]
        %v1432 = vld [vmem:[%s472 + $0xef0] sm:$0xff]
        %v1433 = vld [vmem:[%s472 + $0xef8] sm:$0xff]
        %v1434 = vld [vmem:[%s472 + $0xf00] sm:$0xff]
        %v1435 = vld [vmem:[%s472 + $0xf08] sm:$0xff]
        %v1436 = vld [vmem:[%s472 + $0xf10] sm:$0xff]
        %v1437 = vld [vmem:[%s472 + $0xf18] sm:$0xff]
        %v1438 = vld [vmem:[%s472 + $0xf20] sm:$0xff]
        %v1439 = vld [vmem:[%s472 + $0xf28] sm:$0xff]
        %v1440 = vld [vmem:[%s472 + $0xf30] sm:$0xff]
        %v1441 = vld [vmem:[%s472 + $0xf38] sm:$0xff]
        %v1442 = vld [vmem:[%s472 + $0xf40] sm:$0xff]
        %v1443 = vld [vmem:[%s472 + $0xf48] sm:$0xff]
        %v1444 = vld [vmem:[%s472 + $0xf50] sm:$0xff]
        %v1445 = vld [vmem:[%s472 + $0xf58] sm:$0xff]
        %v1446 = vld [vmem:[%s472 + $0xf60] sm:$0xff]
        %v1447 = vld [vmem:[%s472 + $0xf68] sm:$0xff]
        %v1448 = vld [vmem:[%s472 + $0xf70] sm:$0xff]
        %v1449 = vld [vmem:[%s472 + $0xf78] sm:$0xff]
        %v1450 = vld [vmem:[%s472 + $0xf80] sm:$0xff]
        %v1451 = vld [vmem:[%s472 + $0xf88] sm:$0xff]
        %v1452 = vld [vmem:[%s472 + $0xf90] sm:$0xff]
        %v1453 = vld [vmem:[%s472 + $0xf98] sm:$0xff]
        %v1454 = vld [vmem:[%s472 + $0xfa0] sm:$0xff]
        %v1455 = vld [vmem:[%s472 + $0xfa8] sm:$0xff]
        %v1456 = vld [vmem:[%s472 + $0xfb0] sm:$0xff]
        %v1457 = vld [vmem:[%s472 + $0xfb8] sm:$0xff]
        %v1458 = vld [vmem:[%s472 + $0xfc0] sm:$0xff]
        %v1459 = vld [vmem:[%s472 + $0xfc8] sm:$0xff]
        %v1460 = vld [vmem:[%s472 + $0xfd0] sm:$0xff]
        %v1461 = vld [vmem:[%s472 + $0xfd8] sm:$0xff]
        %v1462 = vld [vmem:[%s472 + $0xfe0] sm:$0xff]
        %v1463 = vld [vmem:[%s472 + $0xfe8] sm:$0xff]
        %v1464 = vld [vmem:[%s472 + $0xff0] sm:$0xff]
        %v1465 = vld [vmem:[%s472 + $0xff8] sm:$0xff]
        %v1466 = vld [vmem:[%s472 + $0x1000] sm:$0xff]
        %v1467 = vld [vmem:[%s472 + $0x1008] sm:$0xff]
        %v1468 = vld [vmem:[%s472 + $0x1010] sm:$0xff]
        %v1469 = vld [vmem:[%s472 + $0x1018] sm:$0xff]
        %v1470 = vld [vmem:[%s472 + $0x1020] sm:$0xff]
        %v1471 = vld [vmem:[%s472 + $0x1028] sm:$0xff]
        %v1472 = vld [vmem:[%s472 + $0x1030] sm:$0xff]
        %v1473 = vld [vmem:[%s472 + $0x1038] sm:$0xff]
        %v1474 = vld [vmem:[%s472 + $0x1040] sm:$0xff]
        %v1475 = vld [vmem:[%s472 + $0x1048] sm:$0xff]
        %v1476 = vld [vmem:[%s472 + $0x1050] sm:$0xff]
        %v1477 = vld [vmem:[%s472 + $0x1058] sm:$0xff]
        %v1478 = vld [vmem:[%s472 + $0x1060] sm:$0xff]
        %v1479 = vld [vmem:[%s472 + $0x1068] sm:$0xff]
        %v1480 = vld [vmem:[%s472 + $0x1070] sm:$0xff]
        %v1481 = vld [vmem:[%s472 + $0x1078] sm:$0xff]
        %v1482 = vld [vmem:[%s472 + $0x1080] sm:$0xff]
        %v1483 = vld [vmem:[%s472 + $0x1088] sm:$0xff]
        %v1484 = vld [vmem:[%s472 + $0x1090] sm:$0xff]
        %v1485 = vld [vmem:[%s472 + $0x1098] sm:$0xff]
        %v1486 = vld [vmem:[%s472 + $0x10a0] sm:$0xff]
        %v1487 = vld [vmem:[%s472 + $0x10a8] sm:$0xff]
        %v1488 = vld [vmem:[%s472 + $0x10b0] sm:$0xff]
        %v1489 = vld [vmem:[%s472 + $0x10b8] sm:$0xff]
        %v1490 = vld [vmem:[%s472 + $0x10c0] sm:$0xff]
        %v1491 = vld [vmem:[%s472 + $0x10c8] sm:$0xff]
        %v1492 = vld [vmem:[%s472 + $0x10d0] sm:$0xff]
        %v1493 = vld [vmem:[%s472 + $0x10d8] sm:$0xff]
        %v1494 = vld [vmem:[%s472 + $0x10e0] sm:$0xff]
        %v1495 = vld [vmem:[%s472 + $0x10e8] sm:$0xff]
        %v1496 = vld [vmem:[%s472 + $0x10f0] sm:$0xff]
        %v1497 = vld [vmem:[%s472 + $0x10f8] sm:$0xff]
        %v1498 = vld [vmem:[%s472 + $0x1100] sm:$0xff]
        %v1499 = vld [vmem:[%s472 + $0x1108] sm:$0xff]
        %v1500 = vld [vmem:[%s472 + $0x1110] sm:$0xff]
        %v1501 = vld [vmem:[%s472 + $0x1118] sm:$0xff]
        %v1502 = vld [vmem:[%s472 + $0x1120] sm:$0xff]
        %v1503 = vld [vmem:[%s472 + $0x1128] sm:$0xff]
        %v1504 = vld [vmem:[%s472 + $0x1130] sm:$0xff]
        %v1505 = vld [vmem:[%s472 + $0x1138] sm:$0xff]
        %v1506 = vld [vmem:[%s472 + $0x1140] sm:$0xff]
        %v1507 = vld [vmem:[%s472 + $0x1148] sm:$0xff]
        %v1508 = vld [vmem:[%s472 + $0x1150] sm:$0xff]
        %v1509 = vld [vmem:[%s472 + $0x1158] sm:$0xff]
        %v1510 = vld [vmem:[%s472 + $0x1160] sm:$0xff]
        %v1511 = vld [vmem:[%s472 + $0x1168] sm:$0xff]
        %v1512 = vld [vmem:[%s472 + $0x1170] sm:$0xff]
        %v1513 = vld [vmem:[%s472 + $0x1178] sm:$0xff]
        %v1514 = vld [vmem:[%s472 + $0x1180] sm:$0xff]
        %v1515 = vld [vmem:[%s472 + $0x1188] sm:$0xff]
        %v1516 = vld [vmem:[%s472 + $0x1190] sm:$0xff]
        %v1517 = vld [vmem:[%s472 + $0x1198] sm:$0xff]
        %v1518 = vld [vmem:[%s472 + $0x11a0] sm:$0xff]
        %v1519 = vld [vmem:[%s472 + $0x11a8] sm:$0xff]
        %v1520 = vld [vmem:[%s472 + $0x11b0] sm:$0xff]
        %v1521 = vld [vmem:[%s472 + $0x11b8] sm:$0xff]
        %v1522 = vld [vmem:[%s472 + $0x11c0] sm:$0xff]
        %v1523 = vld [vmem:[%s472 + $0x11c8] sm:$0xff]
        %v1524 = vld [vmem:[%s472 + $0x11d0] sm:$0xff]
        %v1525 = vld [vmem:[%s472 + $0x11d8] sm:$0xff]
        %v1526 = vld [vmem:[%s472 + $0x11e0] sm:$0xff]
        %v1527 = vld [vmem:[%s472 + $0x11e8] sm:$0xff]
        %v1528 = vld [vmem:[%s472 + $0x11f0] sm:$0xff]
        %v1529 = vld [vmem:[%s472 + $0x11f8] sm:$0xff]
        %v1530 = vld [vmem:[%s472 + $0x1200] sm:$0xff]
        %v1531 = vld [vmem:[%s472 + $0x1208] sm:$0xff]
        %v1532 = vld [vmem:[%s472 + $0x1210] sm:$0xff]
        %v1533 = vld [vmem:[%s472 + $0x1218] sm:$0xff]
        %v1534 = vld [vmem:[%s472 + $0x1220] sm:$0xff]
        %v1535 = vld [vmem:[%s472 + $0x1228] sm:$0xff]
        %v1536 = vld [vmem:[%s472 + $0x1230] sm:$0xff]
        %v1537 = vld [vmem:[%s472 + $0x1238] sm:$0xff]
        %v1538 = vld [vmem:[%s472 + $0x1240] sm:$0xff]
        %v1539 = vld [vmem:[%s472 + $0x1248] sm:$0xff]
        %v1540 = vld [vmem:[%s472 + $0x1250] sm:$0xff]
        %v1541 = vld [vmem:[%s472 + $0x1258] sm:$0xff]
        %v1542 = vld [vmem:[%s472 + $0x1260] sm:$0xff]
        %v1543 = vld [vmem:[%s472 + $0x1268] sm:$0xff]
        %v1544 = vld [vmem:[%s472 + $0x1270] sm:$0xff]
        %v1545 = vld [vmem:[%s472 + $0x1278] sm:$0xff]
        %v1546 = vld [vmem:[%s472 + $0x1280] sm:$0xff]
        %v1547 = vld [vmem:[%s472 + $0x1288] sm:$0xff]
        %v1548 = vld [vmem:[%s472 + $0x1290] sm:$0xff]
        %v1549 = vld [vmem:[%s472 + $0x1298] sm:$0xff]
        %v1550 = vld [vmem:[%s472 + $0x12a0] sm:$0xff]
        %v1551 = vld [vmem:[%s472 + $0x12a8] sm:$0xff]
        %v1552 = vld [vmem:[%s472 + $0x12b0] sm:$0xff]
        %v1553 = vld [vmem:[%s472 + $0x12b8] sm:$0xff]
        %v1554 = vld [vmem:[%s472 + $0x12c0] sm:$0xff]
        %v1555 = vld [vmem:[%s472 + $0x12c8] sm:$0xff]
        %v1556 = vld [vmem:[%s472 + $0x12d0] sm:$0xff]
        %v1557 = vld [vmem:[%s472 + $0x12d8] sm:$0xff]
        %v1558 = vld [vmem:[%s472 + $0x12e0] sm:$0xff]
        %v1559 = vld [vmem:[%s472 + $0x12e8] sm:$0xff]
        %v1560 = vld [vmem:[%s472 + $0x12f0] sm:$0xff]
        %v1561 = vld [vmem:[%s472 + $0x12f8] sm:$0xff]
        %v1562 = vld [vmem:[%s472 + $0x1300] sm:$0xff]
        %v1563 = vld [vmem:[%s472 + $0x1308] sm:$0xff]
        %v1564 = vld [vmem:[%s472 + $0x1310] sm:$0xff]
        %v1565 = vld [vmem:[%s472 + $0x1318] sm:$0xff]
        %v1566 = vld [vmem:[%s472 + $0x1320] sm:$0xff]
        %v1567 = vld [vmem:[%s472 + $0x1328] sm:$0xff]
        %v1568 = vld [vmem:[%s472 + $0x1330] sm:$0xff]
        %v1569 = vld [vmem:[%s472 + $0x1338] sm:$0xff]
        %v1570 = vld [vmem:[%s472 + $0x1340] sm:$0xff]
        %v1571 = vld [vmem:[%s472 + $0x1348] sm:$0xff]
        %v1572 = vld [vmem:[%s472 + $0x1350] sm:$0xff]
        %v1573 = vld [vmem:[%s472 + $0x1358] sm:$0xff]
        %v1574 = vld [vmem:[%s472 + $0x1360] sm:$0xff]
        %v1575 = vld [vmem:[%s472 + $0x1368] sm:$0xff]
        %v1576 = vld [vmem:[%s472 + $0x1370] sm:$0xff]
        %v1577 = vld [vmem:[%s472 + $0x1378] sm:$0xff]
        %v1578 = vld [vmem:[%s472 + $0x1380] sm:$0xff]
        %v1579 = vld [vmem:[%s472 + $0x1388] sm:$0xff]
        %v1580 = vld [vmem:[%s472 + $0x1390] sm:$0xff]
        %v1581 = vld [vmem:[%s472 + $0x1398] sm:$0xff]
        %v1582 = vld [vmem:[%s472 + $0x13a0] sm:$0xff]
        %v1583 = vld [vmem:[%s472 + $0x13a8] sm:$0xff]
        %v1584 = vld [vmem:[%s472 + $0x13b0] sm:$0xff]
        %v1585 = vld [vmem:[%s472 + $0x13b8] sm:$0xff]
        %v1586 = vld [vmem:[%s472 + $0x13c0] sm:$0xff]
        %v1587 = vld [vmem:[%s472 + $0x13c8] sm:$0xff]
        %v1588 = vld [vmem:[%s472 + $0x13d0] sm:$0xff]
        %v1589 = vld [vmem:[%s472 + $0x13d8] sm:$0xff]
        %v1590 = vld [vmem:[%s472 + $0x13e0] sm:$0xff]
        %v1591 = vld [vmem:[%s472 + $0x13e8] sm:$0xff]
        %v1592 = vld [vmem:[%s472 + $0x13f0] sm:$0xff]
        %v1593 = vld [vmem:[%s472 + $0x13f8] sm:$0xff]
        %v1594 = vld [vmem:[%s472 + $0x1400] sm:$0xff]
        %v1595 = vld [vmem:[%s472 + $0x1408] sm:$0xff]
        %v1596 = vld [vmem:[%s472 + $0x1410] sm:$0xff]
        %v1597 = vld [vmem:[%s472 + $0x1418] sm:$0xff]
        %v1598 = vld [vmem:[%s472 + $0x1420] sm:$0xff]
        %v1599 = vld [vmem:[%s472 + $0x1428] sm:$0xff]
        %v1600 = vld [vmem:[%s472 + $0x1430] sm:$0xff]
        %v1601 = vld [vmem:[%s472 + $0x1438] sm:$0xff]
        %v1602 = vld [vmem:[%s472 + $0x1440] sm:$0xff]
        %v1603 = vld [vmem:[%s472 + $0x1448] sm:$0xff]
        %v1604 = vld [vmem:[%s472 + $0x1450] sm:$0xff]
        %v1605 = vld [vmem:[%s472 + $0x1458] sm:$0xff]
        %v1606 = vld [vmem:[%s472 + $0x1460] sm:$0xff]
        %v1607 = vld [vmem:[%s472 + $0x1468] sm:$0xff]
        %v1608 = vld [vmem:[%s472 + $0x1470] sm:$0xff]
        %v1609 = vld [vmem:[%s472 + $0x1478] sm:$0xff]
        %v1610 = vld [vmem:[%s472 + $0x1480] sm:$0xff]
        %v1611 = vld [vmem:[%s472 + $0x1488] sm:$0xff]
        %v1612 = vld [vmem:[%s472 + $0x1490] sm:$0xff]
        %v1613 = vld [vmem:[%s472 + $0x1498] sm:$0xff]
        %v1614 = vld [vmem:[%s472 + $0x14a0] sm:$0xff]
        %v1615 = vld [vmem:[%s472 + $0x14a8] sm:$0xff]
        %v1616 = vld [vmem:[%s472 + $0x14b0] sm:$0xff]
        %v1617 = vld [vmem:[%s472 + $0x14b8] sm:$0xff]
        %v1618 = vld [vmem:[%s472 + $0x14c0] sm:$0xff]
        %v1619 = vld [vmem:[%s472 + $0x14c8] sm:$0xff]
        %v1620 = vld [vmem:[%s472 + $0x14d0] sm:$0xff]
        %v1621 = vld [vmem:[%s472 + $0x14d8] sm:$0xff]
        %v1622 = vld [vmem:[%s472 + $0x14e0] sm:$0xff]
        %v1623 = vld [vmem:[%s472 + $0x14e8] sm:$0xff]
        %v1624 = vld [vmem:[%s472 + $0x14f0] sm:$0xff]
        %v1625 = vld [vmem:[%s472 + $0x14f8] sm:$0xff]
        %v1626 = vld [vmem:[%s472 + $0x1500] sm:$0xff]
        %v1627 = vld [vmem:[%s472 + $0x1508] sm:$0xff]
        %v1628 = vld [vmem:[%s472 + $0x1510] sm:$0xff]
        %v1629 = vld [vmem:[%s472 + $0x1518] sm:$0xff]
        %v1630 = vld [vmem:[%s472 + $0x1520] sm:$0xff]
        %v1631 = vld [vmem:[%s472 + $0x1528] sm:$0xff]
        %v1632 = vld [vmem:[%s472 + $0x1530] sm:$0xff]
        %v1633 = vld [vmem:[%s472 + $0x1538] sm:$0xff]
        %v1634 = vld [vmem:[%s472 + $0x1540] sm:$0xff]
        %v1635 = vld [vmem:[%s472 + $0x1548] sm:$0xff]
        %v1636 = vld [vmem:[%s472 + $0x1550] sm:$0xff]
        %v1637 = vld [vmem:[%s472 + $0x1558] sm:$0xff]
        %v1638 = vld [vmem:[%s472 + $0x1560] sm:$0xff]
        %v1639 = vld [vmem:[%s472 + $0x1568] sm:$0xff]
        %v1640 = vld [vmem:[%s472 + $0x1570] sm:$0xff]
        %v1641 = vld [vmem:[%s472 + $0x1578] sm:$0xff]
        %v1642 = vld [vmem:[%s472 + $0x1580] sm:$0xff]
        %v1643 = vld [vmem:[%s472 + $0x1588] sm:$0xff]
        %v1644 = vld [vmem:[%s472 + $0x1590] sm:$0xff]
        %v1645 = vld [vmem:[%s472 + $0x1598] sm:$0xff]
        %v1646 = vld [vmem:[%s472 + $0x15a0] sm:$0xff]
        %v1647 = vld [vmem:[%s472 + $0x15a8] sm:$0xff]
        %v1648 = vld [vmem:[%s472 + $0x15b0] sm:$0xff]
        %v1649 = vld [vmem:[%s472 + $0x15b8] sm:$0xff]
        %v1650 = vld [vmem:[%s472 + $0x15c0] sm:$0xff]
        %v1651 = vld [vmem:[%s472 + $0x15c8] sm:$0xff]
        %v1652 = vld [vmem:[%s472 + $0x15d0] sm:$0xff]
        %v1653 = vld [vmem:[%s472 + $0x15d8] sm:$0xff]
        %v1654 = vld [vmem:[%s472 + $0x15e0] sm:$0xff]
        %v1655 = vld [vmem:[%s472 + $0x15e8] sm:$0xff]
        %v1656 = vld [vmem:[%s472 + $0x15f0] sm:$0xff]
        %v1657 = vld [vmem:[%s472 + $0x15f8] sm:$0xff]
        %v1658 = vld [vmem:[%s472 + $0x1600] sm:$0xff]
        %v1659 = vld [vmem:[%s472 + $0x1608] sm:$0xff]
        %v1660 = vld [vmem:[%s472 + $0x1610] sm:$0xff]
        %v1661 = vld [vmem:[%s472 + $0x1618] sm:$0xff]
        %v1662 = vld [vmem:[%s472 + $0x1620] sm:$0xff]
        %v1663 = vld [vmem:[%s472 + $0x1628] sm:$0xff]
        %v1664 = vld [vmem:[%s472 + $0x1630] sm:$0xff]
        %v1665 = vld [vmem:[%s472 + $0x1638] sm:$0xff]
        %v1666 = vld [vmem:[%s472 + $0x1640] sm:$0xff]
        %v1667 = vld [vmem:[%s472 + $0x1648] sm:$0xff]
        %v1668 = vld [vmem:[%s472 + $0x1650] sm:$0xff]
        %v1669 = vld [vmem:[%s472 + $0x1658] sm:$0xff]
        %v1670 = vld [vmem:[%s472 + $0x1660] sm:$0xff]
        %v1671 = vld [vmem:[%s472 + $0x1668] sm:$0xff]
        %v1672 = vld [vmem:[%s472 + $0x1670] sm:$0xff]
        %v1673 = vld [vmem:[%s472 + $0x1678] sm:$0xff]
        %v1674 = vld [vmem:[%s472 + $0x1680] sm:$0xff]
        %v1675 = vld [vmem:[%s472 + $0x1688] sm:$0xff]
        %v1676 = vld [vmem:[%s472 + $0x1690] sm:$0xff]
        %v1677 = vld [vmem:[%s472 + $0x1698] sm:$0xff]
        %v1678 = vld [vmem:[%s472 + $0x16a0] sm:$0xff]
        %v1679 = vld [vmem:[%s472 + $0x16a8] sm:$0xff]
        %v1680 = vld [vmem:[%s472 + $0x16b0] sm:$0xff]
        %v1681 = vld [vmem:[%s472 + $0x16b8] sm:$0xff]
        %v1682 = vld [vmem:[%s472 + $0x16c0] sm:$0xff]
        %v1683 = vld [vmem:[%s472 + $0x16c8] sm:$0xff]
        %v1684 = vld [vmem:[%s472 + $0x16d0] sm:$0xff]
        %v1685 = vld [vmem:[%s472 + $0x16d8] sm:$0xff]
        %v1686 = vld [vmem:[%s472 + $0x16e0] sm:$0xff]
        %v1687 = vld [vmem:[%s472 + $0x16e8] sm:$0xff]
        %v1688 = vld [vmem:[%s472 + $0x16f0] sm:$0xff]
        %v1689 = vld [vmem:[%s472 + $0x16f8] sm:$0xff]
        %v1690 = vld [vmem:[%s472 + $0x1700] sm:$0xff]
        %v1691 = vld [vmem:[%s472 + $0x1708] sm:$0xff]
        %v1692 = vld [vmem:[%s472 + $0x1710] sm:$0xff]
        %v1693 = vld [vmem:[%s472 + $0x1718] sm:$0xff]
        %v1694 = vld [vmem:[%s472 + $0x1720] sm:$0xff]
        %v1695 = vld [vmem:[%s472 + $0x1728] sm:$0xff]
        %v1696 = vld [vmem:[%s472 + $0x1730] sm:$0xff]
        %v1697 = vld [vmem:[%s472 + $0x1738] sm:$0xff]
        %v1698 = vld [vmem:[%s472 + $0x1740] sm:$0xff]
        %v1699 = vld [vmem:[%s472 + $0x1748] sm:$0xff]
        %v1700 = vld [vmem:[%s472 + $0x1750] sm:$0xff]
        %v1701 = vld [vmem:[%s472 + $0x1758] sm:$0xff]
        %v1702 = vld [vmem:[%s472 + $0x1760] sm:$0xff]
        %v1703 = vld [vmem:[%s472 + $0x1768] sm:$0xff]
        %v1704 = vld [vmem:[%s472 + $0x1770] sm:$0xff]
        %v1705 = vld [vmem:[%s472 + $0x1778] sm:$0xff]
        %v1706 = vld [vmem:[%s472 + $0x1780] sm:$0xff]
        %v1707 = vld [vmem:[%s472 + $0x1788] sm:$0xff]
        %v1708 = vld [vmem:[%s472 + $0x1790] sm:$0xff]
        %v1709 = vld [vmem:[%s472 + $0x1798] sm:$0xff]
        %v1710 = vld [vmem:[%s472 + $0x17a0] sm:$0xff]
        %v1711 = vld [vmem:[%s472 + $0x17a8] sm:$0xff]
        %v1712 = vld [vmem:[%s472 + $0x17b0] sm:$0xff]
        %v1713 = vld [vmem:[%s472 + $0x17b8] sm:$0xff]
        %v1714 = vld [vmem:[%s472 + $0x17c0] sm:$0xff]
        %v1715 = vld [vmem:[%s472 + $0x17c8] sm:$0xff]
        %v1716 = vld [vmem:[%s472 + $0x17d0] sm:$0xff]
        %v1717 = vld [vmem:[%s472 + $0x17d8] sm:$0xff]
        %v1718 = vld [vmem:[%s472 + $0x17e0] sm:$0xff]
        %v1719 = vld [vmem:[%s472 + $0x17e8] sm:$0xff]
        %v1720 = vld [vmem:[%s472 + $0x17f0] sm:$0xff]
        %v1721 = vld [vmem:[%s472 + $0x17f8] sm:$0xff]
        %v2490 = vunpack.c.l.b16 %v954
        %v2491 = vunpack.c.h.b16 %v954
        %v2492 = vunpack.c.l.b16 %v955
        %v2493 = vunpack.c.h.b16 %v955
        %v2494 = vunpack.c.l.b16 %v956
        %v2495 = vunpack.c.h.b16 %v956
        %v2496 = vunpack.c.l.b16 %v957
        %v2497 = vunpack.c.h.b16 %v957
        %v2498 = vunpack.c.l.b16 %v958
        %v2499 = vunpack.c.h.b16 %v958
        %v2500 = vunpack.c.l.b16 %v959
        %v2501 = vunpack.c.h.b16 %v959
        %v2502 = vunpack.c.l.b16 %v960
        %v2503 = vunpack.c.h.b16 %v960
        %v2504 = vunpack.c.l.b16 %v961
        %v2505 = vunpack.c.h.b16 %v961
        %v2506 = vunpack.c.l.b16 %v962
        %v2507 = vunpack.c.h.b16 %v962
        %v2508 = vunpack.c.l.b16 %v963
        %v2509 = vunpack.c.h.b16 %v963
        %v2510 = vunpack.c.l.b16 %v964
        %v2511 = vunpack.c.h.b16 %v964
        %v2512 = vunpack.c.l.b16 %v965
        %v2513 = vunpack.c.h.b16 %v965
        %v2514 = vunpack.c.l.b16 %v966
        %v2515 = vunpack.c.h.b16 %v966
        %v2516 = vunpack.c.l.b16 %v967
        %v2517 = vunpack.c.h.b16 %v967
        %v2518 = vunpack.c.l.b16 %v968
        %v2519 = vunpack.c.h.b16 %v968
        %v2520 = vunpack.c.l.b16 %v969
        %v2521 = vunpack.c.h.b16 %v969
        %v2522 = vunpack.c.l.b16 %v970
        %v2523 = vunpack.c.h.b16 %v970
        %v2524 = vunpack.c.l.b16 %v971
        %v2525 = vunpack.c.h.b16 %v971
        %v2526 = vunpack.c.l.b16 %v972
        %v2527 = vunpack.c.h.b16 %v972
        %v2528 = vunpack.c.l.b16 %v973
        %v2529 = vunpack.c.h.b16 %v973
        %v2530 = vunpack.c.l.b16 %v974
        %v2531 = vunpack.c.h.b16 %v974
        %v2532 = vunpack.c.l.b16 %v975
        %v2533 = vunpack.c.h.b16 %v975
        %v2534 = vunpack.c.l.b16 %v976
        %v2535 = vunpack.c.h.b16 %v976
        %v2536 = vunpack.c.l.b16 %v977
        %v2537 = vunpack.c.h.b16 %v977
        %v2538 = vunpack.c.l.b16 %v978
        %v2539 = vunpack.c.h.b16 %v978
        %v2540 = vunpack.c.l.b16 %v979
        %v2541 = vunpack.c.h.b16 %v979
        %v2542 = vunpack.c.l.b16 %v980
        %v2543 = vunpack.c.h.b16 %v980
        %v2544 = vunpack.c.l.b16 %v981
        %v2545 = vunpack.c.h.b16 %v981
        %v2546 = vunpack.c.l.b16 %v982
        %v2547 = vunpack.c.h.b16 %v982
        %v2548 = vunpack.c.l.b16 %v983
        %v2549 = vunpack.c.h.b16 %v983
        %v2550 = vunpack.c.l.b16 %v984
        %v2551 = vunpack.c.h.b16 %v984
        %v2552 = vunpack.c.l.b16 %v985
        %v2553 = vunpack.c.h.b16 %v985
        %v2554 = vunpack.c.l.b16 %v986
        %v2555 = vunpack.c.h.b16 %v986
        %v2556 = vunpack.c.l.b16 %v987
        %v2557 = vunpack.c.h.b16 %v987
        %v2558 = vunpack.c.l.b16 %v988
        %v2559 = vunpack.c.h.b16 %v988
        %v2560 = vunpack.c.l.b16 %v989
        %v2561 = vunpack.c.h.b16 %v989
        %v2562 = vunpack.c.l.b16 %v990
        %v2563 = vunpack.c.h.b16 %v990
        %v2564 = vunpack.c.l.b16 %v991
        %v2565 = vunpack.c.h.b16 %v991
        %v2566 = vunpack.c.l.b16 %v992
        %v2567 = vunpack.c.h.b16 %v992
        %v2568 = vunpack.c.l.b16 %v993
        %v2569 = vunpack.c.h.b16 %v993
        %v2570 = vunpack.c.l.b16 %v994
        %v2571 = vunpack.c.h.b16 %v994
        %v2572 = vunpack.c.l.b16 %v995
        %v2573 = vunpack.c.h.b16 %v995
        %v2574 = vunpack.c.l.b16 %v996
        %v2575 = vunpack.c.h.b16 %v996
        %v2576 = vunpack.c.l.b16 %v997
        %v2577 = vunpack.c.h.b16 %v997
        %v2578 = vunpack.c.l.b16 %v998
        %v2579 = vunpack.c.h.b16 %v998
        %v2580 = vunpack.c.l.b16 %v999
        %v2581 = vunpack.c.h.b16 %v999
        %v2582 = vunpack.c.l.b16 %v1000
        %v2583 = vunpack.c.h.b16 %v1000
        %v2584 = vunpack.c.l.b16 %v1001
        %v2585 = vunpack.c.h.b16 %v1001
        %v2586 = vunpack.c.l.b16 %v1002
        %v2587 = vunpack.c.h.b16 %v1002
        %v2588 = vunpack.c.l.b16 %v1003
        %v2589 = vunpack.c.h.b16 %v1003
        %v2590 = vunpack.c.l.b16 %v1004
        %v2591 = vunpack.c.h.b16 %v1004
        %v2592 = vunpack.c.l.b16 %v1005
        %v2593 = vunpack.c.h.b16 %v1005
        %v2594 = vunpack.c.l.b16 %v1006
        %v2595 = vunpack.c.h.b16 %v1006
        %v2596 = vunpack.c.l.b16 %v1007
        %v2597 = vunpack.c.h.b16 %v1007
        %v2598 = vunpack.c.l.b16 %v1008
        %v2599 = vunpack.c.h.b16 %v1008
        %v2600 = vunpack.c.l.b16 %v1009
        %v2601 = vunpack.c.h.b16 %v1009
        %v2602 = vunpack.c.l.b16 %v1010
        %v2603 = vunpack.c.h.b16 %v1010
        %v2604 = vunpack.c.l.b16 %v1011
        %v2605 = vunpack.c.h.b16 %v1011
        %v2606 = vunpack.c.l.b16 %v1012
        %v2607 = vunpack.c.h.b16 %v1012
        %v2608 = vunpack.c.l.b16 %v1013
        %v2609 = vunpack.c.h.b16 %v1013
        %v2610 = vunpack.c.l.b16 %v1014
        %v2611 = vunpack.c.h.b16 %v1014
        %v2612 = vunpack.c.l.b16 %v1015
        %v2613 = vunpack.c.h.b16 %v1015
        %v2614 = vunpack.c.l.b16 %v1016
        %v2615 = vunpack.c.h.b16 %v1016
        %v2616 = vunpack.c.l.b16 %v1017
        %v2617 = vunpack.c.h.b16 %v1017
        %v2618 = vunpack.c.l.b16 %v1018
        %v2619 = vunpack.c.h.b16 %v1018
        %v2620 = vunpack.c.l.b16 %v1019
        %v2621 = vunpack.c.h.b16 %v1019
        %v2622 = vunpack.c.l.b16 %v1020
        %v2623 = vunpack.c.h.b16 %v1020
        %v2624 = vunpack.c.l.b16 %v1021
        %v2625 = vunpack.c.h.b16 %v1021
        %v2626 = vunpack.c.l.b16 %v1022
        %v2627 = vunpack.c.h.b16 %v1022
        %v2628 = vunpack.c.l.b16 %v1023
        %v2629 = vunpack.c.h.b16 %v1023
        %v2630 = vunpack.c.l.b16 %v1024
        %v2631 = vunpack.c.h.b16 %v1024
        %v2632 = vunpack.c.l.b16 %v1025
        %v2633 = vunpack.c.h.b16 %v1025
        %v2634 = vunpack.c.l.b16 %v1026
        %v2635 = vunpack.c.h.b16 %v1026
        %v2636 = vunpack.c.l.b16 %v1027
        %v2637 = vunpack.c.h.b16 %v1027
        %v2638 = vunpack.c.l.b16 %v1028
        %v2639 = vunpack.c.h.b16 %v1028
        %v2640 = vunpack.c.l.b16 %v1029
        %v2641 = vunpack.c.h.b16 %v1029
        %v2642 = vunpack.c.l.b16 %v1030
        %v2643 = vunpack.c.h.b16 %v1030
        %v2644 = vunpack.c.l.b16 %v1031
        %v2645 = vunpack.c.h.b16 %v1031
        %v2646 = vunpack.c.l.b16 %v1032
        %v2647 = vunpack.c.h.b16 %v1032
        %v2648 = vunpack.c.l.b16 %v1033
        %v2649 = vunpack.c.h.b16 %v1033
        %v2650 = vunpack.c.l.b16 %v1034
        %v2651 = vunpack.c.h.b16 %v1034
        %v2652 = vunpack.c.l.b16 %v1035
        %v2653 = vunpack.c.h.b16 %v1035
        %v2654 = vunpack.c.l.b16 %v1036
        %v2655 = vunpack.c.h.b16 %v1036
        %v2656 = vunpack.c.l.b16 %v1037
        %v2657 = vunpack.c.h.b16 %v1037
        %v2658 = vunpack.c.l.b16 %v1038
        %v2659 = vunpack.c.h.b16 %v1038
        %v2660 = vunpack.c.l.b16 %v1039
        %v2661 = vunpack.c.h.b16 %v1039
        %v2662 = vunpack.c.l.b16 %v1040
        %v2663 = vunpack.c.h.b16 %v1040
        %v2664 = vunpack.c.l.b16 %v1041
        %v2665 = vunpack.c.h.b16 %v1041
        %v2666 = vunpack.c.l.b16 %v1042
        %v2667 = vunpack.c.h.b16 %v1042
        %v2668 = vunpack.c.l.b16 %v1043
        %v2669 = vunpack.c.h.b16 %v1043
        %v2670 = vunpack.c.l.b16 %v1044
        %v2671 = vunpack.c.h.b16 %v1044
        %v2672 = vunpack.c.l.b16 %v1045
        %v2673 = vunpack.c.h.b16 %v1045
        %v2674 = vunpack.c.l.b16 %v1046
        %v2675 = vunpack.c.h.b16 %v1046
        %v2676 = vunpack.c.l.b16 %v1047
        %v2677 = vunpack.c.h.b16 %v1047
        %v2678 = vunpack.c.l.b16 %v1048
        %v2679 = vunpack.c.h.b16 %v1048
        %v2680 = vunpack.c.l.b16 %v1049
        %v2681 = vunpack.c.h.b16 %v1049
        %v2682 = vunpack.c.l.b16 %v1050
        %v2683 = vunpack.c.h.b16 %v1050
        %v2684 = vunpack.c.l.b16 %v1051
        %v2685 = vunpack.c.h.b16 %v1051
        %v2686 = vunpack.c.l.b16 %v1052
        %v2687 = vunpack.c.h.b16 %v1052
        %v2688 = vunpack.c.l.b16 %v1053
        %v2689 = vunpack.c.h.b16 %v1053
        %v2690 = vunpack.c.l.b16 %v1054
        %v2691 = vunpack.c.h.b16 %v1054
        %v2692 = vunpack.c.l.b16 %v1055
        %v2693 = vunpack.c.h.b16 %v1055
        %v2694 = vunpack.c.l.b16 %v1056
        %v2695 = vunpack.c.h.b16 %v1056
        %v2696 = vunpack.c.l.b16 %v1057
        %v2697 = vunpack.c.h.b16 %v1057
        %v2698 = vunpack.c.l.b16 %v1058
        %v2699 = vunpack.c.h.b16 %v1058
        %v2700 = vunpack.c.l.b16 %v1059
        %v2701 = vunpack.c.h.b16 %v1059
        %v2702 = vunpack.c.l.b16 %v1060
        %v2703 = vunpack.c.h.b16 %v1060
        %v2704 = vunpack.c.l.b16 %v1061
        %v2705 = vunpack.c.h.b16 %v1061
        %v2706 = vunpack.c.l.b16 %v1062
        %v2707 = vunpack.c.h.b16 %v1062
        %v2708 = vunpack.c.l.b16 %v1063
        %v2709 = vunpack.c.h.b16 %v1063
        %v2710 = vunpack.c.l.b16 %v1064
        %v2711 = vunpack.c.h.b16 %v1064
        %v2712 = vunpack.c.l.b16 %v1065
        %v2713 = vunpack.c.h.b16 %v1065
        %v2714 = vunpack.c.l.b16 %v1066
        %v2715 = vunpack.c.h.b16 %v1066
        %v2716 = vunpack.c.l.b16 %v1067
        %v2717 = vunpack.c.h.b16 %v1067
        %v2718 = vunpack.c.l.b16 %v1068
        %v2719 = vunpack.c.h.b16 %v1068
        %v2720 = vunpack.c.l.b16 %v1069
        %v2721 = vunpack.c.h.b16 %v1069
        %v2722 = vunpack.c.l.b16 %v1070
        %v2723 = vunpack.c.h.b16 %v1070
        %v2724 = vunpack.c.l.b16 %v1071
        %v2725 = vunpack.c.h.b16 %v1071
        %v2726 = vunpack.c.l.b16 %v1072
        %v2727 = vunpack.c.h.b16 %v1072
        %v2728 = vunpack.c.l.b16 %v1073
        %v2729 = vunpack.c.h.b16 %v1073
        %v2730 = vunpack.c.l.b16 %v1074
        %v2731 = vunpack.c.h.b16 %v1074
        %v2732 = vunpack.c.l.b16 %v1075
        %v2733 = vunpack.c.h.b16 %v1075
        %v2734 = vunpack.c.l.b16 %v1076
        %v2735 = vunpack.c.h.b16 %v1076
        %v2736 = vunpack.c.l.b16 %v1077
        %v2737 = vunpack.c.h.b16 %v1077
        %v2738 = vunpack.c.l.b16 %v1078
        %v2739 = vunpack.c.h.b16 %v1078
        %v2740 = vunpack.c.l.b16 %v1079
        %v2741 = vunpack.c.h.b16 %v1079
        %v2742 = vunpack.c.l.b16 %v1080
        %v2743 = vunpack.c.h.b16 %v1080
        %v2744 = vunpack.c.l.b16 %v1081
        %v2745 = vunpack.c.h.b16 %v1081
        %v2746 = vunpack.c.l.b16 %v1082
        %v2747 = vunpack.c.h.b16 %v1082
        %v2748 = vunpack.c.l.b16 %v1083
        %v2749 = vunpack.c.h.b16 %v1083
        %v2750 = vunpack.c.l.b16 %v1084
        %v2751 = vunpack.c.h.b16 %v1084
        %v2752 = vunpack.c.l.b16 %v1085
        %v2753 = vunpack.c.h.b16 %v1085
        %v2754 = vunpack.c.l.b16 %v1086
        %v2755 = vunpack.c.h.b16 %v1086
        %v2756 = vunpack.c.l.b16 %v1087
        %v2757 = vunpack.c.h.b16 %v1087
        %v2758 = vunpack.c.l.b16 %v1088
        %v2759 = vunpack.c.h.b16 %v1088
        %v2760 = vunpack.c.l.b16 %v1089
        %v2761 = vunpack.c.h.b16 %v1089
        %v2762 = vunpack.c.l.b16 %v1090
        %v2763 = vunpack.c.h.b16 %v1090
        %v2764 = vunpack.c.l.b16 %v1091
        %v2765 = vunpack.c.h.b16 %v1091
        %v2766 = vunpack.c.l.b16 %v1092
        %v2767 = vunpack.c.h.b16 %v1092
        %v2768 = vunpack.c.l.b16 %v1093
        %v2769 = vunpack.c.h.b16 %v1093
        %v2770 = vunpack.c.l.b16 %v1094
        %v2771 = vunpack.c.h.b16 %v1094
        %v2772 = vunpack.c.l.b16 %v1095
        %v2773 = vunpack.c.h.b16 %v1095
        %v2774 = vunpack.c.l.b16 %v1096
        %v2775 = vunpack.c.h.b16 %v1096
        %v2776 = vunpack.c.l.b16 %v1097
        %v2777 = vunpack.c.h.b16 %v1097
        %v2778 = vunpack.c.l.b16 %v1098
        %v2779 = vunpack.c.h.b16 %v1098
        %v2780 = vunpack.c.l.b16 %v1099
        %v2781 = vunpack.c.h.b16 %v1099
        %v2782 = vunpack.c.l.b16 %v1100
        %v2783 = vunpack.c.h.b16 %v1100
        %v2784 = vunpack.c.l.b16 %v1101
        %v2785 = vunpack.c.h.b16 %v1101
        %v2786 = vunpack.c.l.b16 %v1102
        %v2787 = vunpack.c.h.b16 %v1102
        %v2788 = vunpack.c.l.b16 %v1103
        %v2789 = vunpack.c.h.b16 %v1103
        %v2790 = vunpack.c.l.b16 %v1104
        %v2791 = vunpack.c.h.b16 %v1104
        %v2792 = vunpack.c.l.b16 %v1105
        %v2793 = vunpack.c.h.b16 %v1105
        %v2794 = vunpack.c.l.b16 %v1106
        %v2795 = vunpack.c.h.b16 %v1106
        %v2796 = vunpack.c.l.b16 %v1107
        %v2797 = vunpack.c.h.b16 %v1107
        %v2798 = vunpack.c.l.b16 %v1108
        %v2799 = vunpack.c.h.b16 %v1108
        %v2800 = vunpack.c.l.b16 %v1109
        %v2801 = vunpack.c.h.b16 %v1109
        %v2802 = vunpack.c.l.b16 %v1110
        %v2803 = vunpack.c.h.b16 %v1110
        %v2804 = vunpack.c.l.b16 %v1111
        %v2805 = vunpack.c.h.b16 %v1111
        %v2806 = vunpack.c.l.b16 %v1112
        %v2807 = vunpack.c.h.b16 %v1112
        %v2808 = vunpack.c.l.b16 %v1113
        %v2809 = vunpack.c.h.b16 %v1113
        %v2810 = vunpack.c.l.b16 %v1114
        %v2811 = vunpack.c.h.b16 %v1114
        %v2812 = vunpack.c.l.b16 %v1115
        %v2813 = vunpack.c.h.b16 %v1115
        %v2814 = vunpack.c.l.b16 %v1116
        %v2815 = vunpack.c.h.b16 %v1116
        %v2816 = vunpack.c.l.b16 %v1117
        %v2817 = vunpack.c.h.b16 %v1117
        %v2818 = vunpack.c.l.b16 %v1118
        %v2819 = vunpack.c.h.b16 %v1118
        %v2820 = vunpack.c.l.b16 %v1119
        %v2821 = vunpack.c.h.b16 %v1119
        %v2822 = vunpack.c.l.b16 %v1120
        %v2823 = vunpack.c.h.b16 %v1120
        %v2824 = vunpack.c.l.b16 %v1121
        %v2825 = vunpack.c.h.b16 %v1121
        %v2826 = vunpack.c.l.b16 %v1122
        %v2827 = vunpack.c.h.b16 %v1122
        %v2828 = vunpack.c.l.b16 %v1123
        %v2829 = vunpack.c.h.b16 %v1123
        %v2830 = vunpack.c.l.b16 %v1124
        %v2831 = vunpack.c.h.b16 %v1124
        %v2832 = vunpack.c.l.b16 %v1125
        %v2833 = vunpack.c.h.b16 %v1125
        %v2834 = vunpack.c.l.b16 %v1126
        %v2835 = vunpack.c.h.b16 %v1126
        %v2836 = vunpack.c.l.b16 %v1127
        %v2837 = vunpack.c.h.b16 %v1127
        %v2838 = vunpack.c.l.b16 %v1128
        %v2839 = vunpack.c.h.b16 %v1128
        %v2840 = vunpack.c.l.b16 %v1129
        %v2841 = vunpack.c.h.b16 %v1129
        %v2842 = vunpack.c.l.b16 %v1130
        %v2843 = vunpack.c.h.b16 %v1130
        %v2844 = vunpack.c.l.b16 %v1131
        %v2845 = vunpack.c.h.b16 %v1131
        %v2846 = vunpack.c.l.b16 %v1132
        %v2847 = vunpack.c.h.b16 %v1132
        %v2848 = vunpack.c.l.b16 %v1133
        %v2849 = vunpack.c.h.b16 %v1133
        %v2850 = vunpack.c.l.b16 %v1134
        %v2851 = vunpack.c.h.b16 %v1134
        %v2852 = vunpack.c.l.b16 %v1135
        %v2853 = vunpack.c.h.b16 %v1135
        %v2854 = vunpack.c.l.b16 %v1136
        %v2855 = vunpack.c.h.b16 %v1136
        %v2856 = vunpack.c.l.b16 %v1137
        %v2857 = vunpack.c.h.b16 %v1137
        %v2858 = vunpack.c.l.b16 %v1138
        %v2859 = vunpack.c.h.b16 %v1138
        %v2860 = vunpack.c.l.b16 %v1139
        %v2861 = vunpack.c.h.b16 %v1139
        %v2862 = vunpack.c.l.b16 %v1140
        %v2863 = vunpack.c.h.b16 %v1140
        %v2864 = vunpack.c.l.b16 %v1141
        %v2865 = vunpack.c.h.b16 %v1141
        %v2866 = vunpack.c.l.b16 %v1142
        %v2867 = vunpack.c.h.b16 %v1142
        %v2868 = vunpack.c.l.b16 %v1143
        %v2869 = vunpack.c.h.b16 %v1143
        %v2870 = vunpack.c.l.b16 %v1144
        %v2871 = vunpack.c.h.b16 %v1144
        %v2872 = vunpack.c.l.b16 %v1145
        %v2873 = vunpack.c.h.b16 %v1145
        %v2874 = vunpack.c.l.b16 %v1146
        %v2875 = vunpack.c.h.b16 %v1146
        %v2876 = vunpack.c.l.b16 %v1147
        %v2877 = vunpack.c.h.b16 %v1147
        %v2878 = vunpack.c.l.b16 %v1148
        %v2879 = vunpack.c.h.b16 %v1148
        %v2880 = vunpack.c.l.b16 %v1149
        %v2881 = vunpack.c.h.b16 %v1149
        %v2882 = vunpack.c.l.b16 %v1150
        %v2883 = vunpack.c.h.b16 %v1150
        %v2884 = vunpack.c.l.b16 %v1151
        %v2885 = vunpack.c.h.b16 %v1151
        %v2886 = vunpack.c.l.b16 %v1152
        %v2887 = vunpack.c.h.b16 %v1152
        %v2888 = vunpack.c.l.b16 %v1153
        %v2889 = vunpack.c.h.b16 %v1153
        %v2890 = vunpack.c.l.b16 %v1154
        %v2891 = vunpack.c.h.b16 %v1154
        %v2892 = vunpack.c.l.b16 %v1155
        %v2893 = vunpack.c.h.b16 %v1155
        %v2894 = vunpack.c.l.b16 %v1156
        %v2895 = vunpack.c.h.b16 %v1156
        %v2896 = vunpack.c.l.b16 %v1157
        %v2897 = vunpack.c.h.b16 %v1157
        %v2898 = vunpack.c.l.b16 %v1158
        %v2899 = vunpack.c.h.b16 %v1158
        %v2900 = vunpack.c.l.b16 %v1159
        %v2901 = vunpack.c.h.b16 %v1159
        %v2902 = vunpack.c.l.b16 %v1160
        %v2903 = vunpack.c.h.b16 %v1160
        %v2904 = vunpack.c.l.b16 %v1161
        %v2905 = vunpack.c.h.b16 %v1161
        %v2906 = vunpack.c.l.b16 %v1162
        %v2907 = vunpack.c.h.b16 %v1162
        %v2908 = vunpack.c.l.b16 %v1163
        %v2909 = vunpack.c.h.b16 %v1163
        %v2910 = vunpack.c.l.b16 %v1164
        %v2911 = vunpack.c.h.b16 %v1164
        %v2912 = vunpack.c.l.b16 %v1165
        %v2913 = vunpack.c.h.b16 %v1165
        %v2914 = vunpack.c.l.b16 %v1166
        %v2915 = vunpack.c.h.b16 %v1166
        %v2916 = vunpack.c.l.b16 %v1167
        %v2917 = vunpack.c.h.b16 %v1167
        %v2918 = vunpack.c.l.b16 %v1168
        %v2919 = vunpack.c.h.b16 %v1168
        %v2920 = vunpack.c.l.b16 %v1169
        %v2921 = vunpack.c.h.b16 %v1169
        %v2922 = vunpack.c.l.b16 %v1170
        %v2923 = vunpack.c.h.b16 %v1170
        %v2924 = vunpack.c.l.b16 %v1171
        %v2925 = vunpack.c.h.b16 %v1171
        %v2926 = vunpack.c.l.b16 %v1172
        %v2927 = vunpack.c.h.b16 %v1172
        %v2928 = vunpack.c.l.b16 %v1173
        %v2929 = vunpack.c.h.b16 %v1173
        %v2930 = vunpack.c.l.b16 %v1174
        %v2931 = vunpack.c.h.b16 %v1174
        %v2932 = vunpack.c.l.b16 %v1175
        %v2933 = vunpack.c.h.b16 %v1175
        %v2934 = vunpack.c.l.b16 %v1176
        %v2935 = vunpack.c.h.b16 %v1176
        %v2936 = vunpack.c.l.b16 %v1177
        %v2937 = vunpack.c.h.b16 %v1177
        %v2938 = vunpack.c.l.b16 %v1178
        %v2939 = vunpack.c.h.b16 %v1178
        %v2940 = vunpack.c.l.b16 %v1179
        %v2941 = vunpack.c.h.b16 %v1179
        %v2942 = vunpack.c.l.b16 %v1180
        %v2943 = vunpack.c.h.b16 %v1180
        %v2944 = vunpack.c.l.b16 %v1181
        %v2945 = vunpack.c.h.b16 %v1181
        %v2946 = vunpack.c.l.b16 %v1182
        %v2947 = vunpack.c.h.b16 %v1182
        %v2948 = vunpack.c.l.b16 %v1183
        %v2949 = vunpack.c.h.b16 %v1183
        %v2950 = vunpack.c.l.b16 %v1184
        %v2951 = vunpack.c.h.b16 %v1184
        %v2952 = vunpack.c.l.b16 %v1185
        %v2953 = vunpack.c.h.b16 %v1185
        %v2954 = vunpack.c.l.b16 %v1186
        %v2955 = vunpack.c.h.b16 %v1186
        %v2956 = vunpack.c.l.b16 %v1187
        %v2957 = vunpack.c.h.b16 %v1187
        %v2958 = vunpack.c.l.b16 %v1188
        %v2959 = vunpack.c.h.b16 %v1188
        %v2960 = vunpack.c.l.b16 %v1189
        %v2961 = vunpack.c.h.b16 %v1189
        %v2962 = vunpack.c.l.b16 %v1190
        %v2963 = vunpack.c.h.b16 %v1190
        %v2964 = vunpack.c.l.b16 %v1191
        %v2965 = vunpack.c.h.b16 %v1191
        %v2966 = vunpack.c.l.b16 %v1192
        %v2967 = vunpack.c.h.b16 %v1192
        %v2968 = vunpack.c.l.b16 %v1193
        %v2969 = vunpack.c.h.b16 %v1193
        %v2970 = vunpack.c.l.b16 %v1194
        %v2971 = vunpack.c.h.b16 %v1194
        %v2972 = vunpack.c.l.b16 %v1195
        %v2973 = vunpack.c.h.b16 %v1195
        %v2974 = vunpack.c.l.b16 %v1196
        %v2975 = vunpack.c.h.b16 %v1196
        %v2976 = vunpack.c.l.b16 %v1197
        %v2977 = vunpack.c.h.b16 %v1197
        %v2978 = vunpack.c.l.b16 %v1198
        %v2979 = vunpack.c.h.b16 %v1198
        %v2980 = vunpack.c.l.b16 %v1199
        %v2981 = vunpack.c.h.b16 %v1199
        %v2982 = vunpack.c.l.b16 %v1200
        %v2983 = vunpack.c.h.b16 %v1200
        %v2984 = vunpack.c.l.b16 %v1201
        %v2985 = vunpack.c.h.b16 %v1201
        %v2986 = vunpack.c.l.b16 %v1202
        %v2987 = vunpack.c.h.b16 %v1202
        %v2988 = vunpack.c.l.b16 %v1203
        %v2989 = vunpack.c.h.b16 %v1203
        %v2990 = vunpack.c.l.b16 %v1204
        %v2991 = vunpack.c.h.b16 %v1204
        %v2992 = vunpack.c.l.b16 %v1205
        %v2993 = vunpack.c.h.b16 %v1205
        %v2994 = vunpack.c.l.b16 %v1206
        %v2995 = vunpack.c.h.b16 %v1206
        %v2996 = vunpack.c.l.b16 %v1207
        %v2997 = vunpack.c.h.b16 %v1207
        %v2998 = vunpack.c.l.b16 %v1208
        %v2999 = vunpack.c.h.b16 %v1208
        %v3000 = vunpack.c.l.b16 %v1209
        %v3001 = vunpack.c.h.b16 %v1209
        %v3002 = vunpack.c.l.b16 %v1210
        %v3003 = vunpack.c.h.b16 %v1210
        %v3004 = vunpack.c.l.b16 %v1211
        %v3005 = vunpack.c.h.b16 %v1211
        %v3006 = vunpack.c.l.b16 %v1212
        %v3007 = vunpack.c.h.b16 %v1212
        %v3008 = vunpack.c.l.b16 %v1213
        %v3009 = vunpack.c.h.b16 %v1213
        %v3010 = vunpack.c.l.b16 %v1214
        %v3011 = vunpack.c.h.b16 %v1214
        %v3012 = vunpack.c.l.b16 %v1215
        %v3013 = vunpack.c.h.b16 %v1215
        %v3014 = vunpack.c.l.b16 %v1216
        %v3015 = vunpack.c.h.b16 %v1216
        %v3016 = vunpack.c.l.b16 %v1217
        %v3017 = vunpack.c.h.b16 %v1217
        %v3018 = vunpack.c.l.b16 %v1218
        %v3019 = vunpack.c.h.b16 %v1218
        %v3020 = vunpack.c.l.b16 %v1219
        %v3021 = vunpack.c.h.b16 %v1219
        %v3022 = vunpack.c.l.b16 %v1220
        %v3023 = vunpack.c.h.b16 %v1220
        %v3024 = vunpack.c.l.b16 %v1221
        %v3025 = vunpack.c.h.b16 %v1221
        %v3026 = vunpack.c.l.b16 %v1222
        %v3027 = vunpack.c.h.b16 %v1222
        %v3028 = vunpack.c.l.b16 %v1223
        %v3029 = vunpack.c.h.b16 %v1223
        %v3030 = vunpack.c.l.b16 %v1224
        %v3031 = vunpack.c.h.b16 %v1224
        %v3032 = vunpack.c.l.b16 %v1225
        %v3033 = vunpack.c.h.b16 %v1225
        %v3034 = vunpack.c.l.b16 %v1226
        %v3035 = vunpack.c.h.b16 %v1226
        %v3036 = vunpack.c.l.b16 %v1227
        %v3037 = vunpack.c.h.b16 %v1227
        %v3038 = vunpack.c.l.b16 %v1228
        %v3039 = vunpack.c.h.b16 %v1228
        %v3040 = vunpack.c.l.b16 %v1229
        %v3041 = vunpack.c.h.b16 %v1229
        %v3042 = vunpack.c.l.b16 %v1230
        %v3043 = vunpack.c.h.b16 %v1230
        %v3044 = vunpack.c.l.b16 %v1231
        %v3045 = vunpack.c.h.b16 %v1231
        %v3046 = vunpack.c.l.b16 %v1232
        %v3047 = vunpack.c.h.b16 %v1232
        %v3048 = vunpack.c.l.b16 %v1233
        %v3049 = vunpack.c.h.b16 %v1233
        %v3050 = vunpack.c.l.b16 %v1234
        %v3051 = vunpack.c.h.b16 %v1234
        %v3052 = vunpack.c.l.b16 %v1235
        %v3053 = vunpack.c.h.b16 %v1235
        %v3054 = vunpack.c.l.b16 %v1236
        %v3055 = vunpack.c.h.b16 %v1236
        %v3056 = vunpack.c.l.b16 %v1237
        %v3057 = vunpack.c.h.b16 %v1237
        %v3058 = vunpack.c.l.b16 %v1238
        %v3059 = vunpack.c.h.b16 %v1238
        %v3060 = vunpack.c.l.b16 %v1239
        %v3061 = vunpack.c.h.b16 %v1239
        %v3062 = vunpack.c.l.b16 %v1240
        %v3063 = vunpack.c.h.b16 %v1240
        %v3064 = vunpack.c.l.b16 %v1241
        %v3065 = vunpack.c.h.b16 %v1241
        %v3066 = vunpack.c.l.b16 %v1242
        %v3067 = vunpack.c.h.b16 %v1242
        %v3068 = vunpack.c.l.b16 %v1243
        %v3069 = vunpack.c.h.b16 %v1243
        %v3070 = vunpack.c.l.b16 %v1244
        %v3071 = vunpack.c.h.b16 %v1244
        %v3072 = vunpack.c.l.b16 %v1245
        %v3073 = vunpack.c.h.b16 %v1245
        %v3074 = vunpack.c.l.b16 %v1246
        %v3075 = vunpack.c.h.b16 %v1246
        %v3076 = vunpack.c.l.b16 %v1247
        %v3077 = vunpack.c.h.b16 %v1247
        %v3078 = vunpack.c.l.b16 %v1248
        %v3079 = vunpack.c.h.b16 %v1248
        %v3080 = vunpack.c.l.b16 %v1249
        %v3081 = vunpack.c.h.b16 %v1249
        %v3082 = vunpack.c.l.b16 %v1250
        %v3083 = vunpack.c.h.b16 %v1250
        %v3084 = vunpack.c.l.b16 %v1251
        %v3085 = vunpack.c.h.b16 %v1251
        %v3086 = vunpack.c.l.b16 %v1252
        %v3087 = vunpack.c.h.b16 %v1252
        %v3088 = vunpack.c.l.b16 %v1253
        %v3089 = vunpack.c.h.b16 %v1253
        %v3090 = vunpack.c.l.b16 %v1254
        %v3091 = vunpack.c.h.b16 %v1254
        %v3092 = vunpack.c.l.b16 %v1255
        %v3093 = vunpack.c.h.b16 %v1255
        %v3094 = vunpack.c.l.b16 %v1256
        %v3095 = vunpack.c.h.b16 %v1256
        %v3096 = vunpack.c.l.b16 %v1257
        %v3097 = vunpack.c.h.b16 %v1257
        %v3098 = vunpack.c.l.b16 %v1258
        %v3099 = vunpack.c.h.b16 %v1258
        %v3100 = vunpack.c.l.b16 %v1259
        %v3101 = vunpack.c.h.b16 %v1259
        %v3102 = vunpack.c.l.b16 %v1260
        %v3103 = vunpack.c.h.b16 %v1260
        %v3104 = vunpack.c.l.b16 %v1261
        %v3105 = vunpack.c.h.b16 %v1261
        %v3106 = vunpack.c.l.b16 %v1262
        %v3107 = vunpack.c.h.b16 %v1262
        %v3108 = vunpack.c.l.b16 %v1263
        %v3109 = vunpack.c.h.b16 %v1263
        %v3110 = vunpack.c.l.b16 %v1264
        %v3111 = vunpack.c.h.b16 %v1264
        %v3112 = vunpack.c.l.b16 %v1265
        %v3113 = vunpack.c.h.b16 %v1265
        %v3114 = vunpack.c.l.b16 %v1266
        %v3115 = vunpack.c.h.b16 %v1266
        %v3116 = vunpack.c.l.b16 %v1267
        %v3117 = vunpack.c.h.b16 %v1267
        %v3118 = vunpack.c.l.b16 %v1268
        %v3119 = vunpack.c.h.b16 %v1268
        %v3120 = vunpack.c.l.b16 %v1269
        %v3121 = vunpack.c.h.b16 %v1269
        %v3122 = vunpack.c.l.b16 %v1270
        %v3123 = vunpack.c.h.b16 %v1270
        %v3124 = vunpack.c.l.b16 %v1271
        %v3125 = vunpack.c.h.b16 %v1271
        %v3126 = vunpack.c.l.b16 %v1272
        %v3127 = vunpack.c.h.b16 %v1272
        %v3128 = vunpack.c.l.b16 %v1273
        %v3129 = vunpack.c.h.b16 %v1273
        %v3130 = vunpack.c.l.b16 %v1274
        %v3131 = vunpack.c.h.b16 %v1274
        %v3132 = vunpack.c.l.b16 %v1275
        %v3133 = vunpack.c.h.b16 %v1275
        %v3134 = vunpack.c.l.b16 %v1276
        %v3135 = vunpack.c.h.b16 %v1276
        %v3136 = vunpack.c.l.b16 %v1277
        %v3137 = vunpack.c.h.b16 %v1277
        %v3138 = vunpack.c.l.b16 %v1278
        %v3139 = vunpack.c.h.b16 %v1278
        %v3140 = vunpack.c.l.b16 %v1279
        %v3141 = vunpack.c.h.b16 %v1279
        %v3142 = vunpack.c.l.b16 %v1280
        %v3143 = vunpack.c.h.b16 %v1280
        %v3144 = vunpack.c.l.b16 %v1281
        %v3145 = vunpack.c.h.b16 %v1281
        %v3146 = vunpack.c.l.b16 %v1282
        %v3147 = vunpack.c.h.b16 %v1282
        %v3148 = vunpack.c.l.b16 %v1283
        %v3149 = vunpack.c.h.b16 %v1283
        %v3150 = vunpack.c.l.b16 %v1284
        %v3151 = vunpack.c.h.b16 %v1284
        %v3152 = vunpack.c.l.b16 %v1285
        %v3153 = vunpack.c.h.b16 %v1285
        %v3154 = vunpack.c.l.b16 %v1286
        %v3155 = vunpack.c.h.b16 %v1286
        %v3156 = vunpack.c.l.b16 %v1287
        %v3157 = vunpack.c.h.b16 %v1287
        %v3158 = vunpack.c.l.b16 %v1288
        %v3159 = vunpack.c.h.b16 %v1288
        %v3160 = vunpack.c.l.b16 %v1289
        %v3161 = vunpack.c.h.b16 %v1289
        %v3162 = vunpack.c.l.b16 %v1290
        %v3163 = vunpack.c.h.b16 %v1290
        %v3164 = vunpack.c.l.b16 %v1291
        %v3165 = vunpack.c.h.b16 %v1291
        %v3166 = vunpack.c.l.b16 %v1292
        %v3167 = vunpack.c.h.b16 %v1292
        %v3168 = vunpack.c.l.b16 %v1293
        %v3169 = vunpack.c.h.b16 %v1293
        %v3170 = vunpack.c.l.b16 %v1294
        %v3171 = vunpack.c.h.b16 %v1294
        %v3172 = vunpack.c.l.b16 %v1295
        %v3173 = vunpack.c.h.b16 %v1295
        %v3174 = vunpack.c.l.b16 %v1296
        %v3175 = vunpack.c.h.b16 %v1296
        %v3176 = vunpack.c.l.b16 %v1297
        %v3177 = vunpack.c.h.b16 %v1297
        %v3178 = vunpack.c.l.b16 %v1298
        %v3179 = vunpack.c.h.b16 %v1298
        %v3180 = vunpack.c.l.b16 %v1299
        %v3181 = vunpack.c.h.b16 %v1299
        %v3182 = vunpack.c.l.b16 %v1300
        %v3183 = vunpack.c.h.b16 %v1300
        %v3184 = vunpack.c.l.b16 %v1301
        %v3185 = vunpack.c.h.b16 %v1301
        %v3186 = vunpack.c.l.b16 %v1302
        %v3187 = vunpack.c.h.b16 %v1302
        %v3188 = vunpack.c.l.b16 %v1303
        %v3189 = vunpack.c.h.b16 %v1303
        %v3190 = vunpack.c.l.b16 %v1304
        %v3191 = vunpack.c.h.b16 %v1304
        %v3192 = vunpack.c.l.b16 %v1305
        %v3193 = vunpack.c.h.b16 %v1305
        %v3194 = vunpack.c.l.b16 %v1306
        %v3195 = vunpack.c.h.b16 %v1306
        %v3196 = vunpack.c.l.b16 %v1307
        %v3197 = vunpack.c.h.b16 %v1307
        %v3198 = vunpack.c.l.b16 %v1308
        %v3199 = vunpack.c.h.b16 %v1308
        %v3200 = vunpack.c.l.b16 %v1309
        %v3201 = vunpack.c.h.b16 %v1309
        %v3202 = vunpack.c.l.b16 %v1310
        %v3203 = vunpack.c.h.b16 %v1310
        %v3204 = vunpack.c.l.b16 %v1311
        %v3205 = vunpack.c.h.b16 %v1311
        %v3206 = vunpack.c.l.b16 %v1312
        %v3207 = vunpack.c.h.b16 %v1312
        %v3208 = vunpack.c.l.b16 %v1313
        %v3209 = vunpack.c.h.b16 %v1313
        %v3210 = vunpack.c.l.b16 %v1314
        %v3211 = vunpack.c.h.b16 %v1314
        %v3212 = vunpack.c.l.b16 %v1315
        %v3213 = vunpack.c.h.b16 %v1315
        %v3214 = vunpack.c.l.b16 %v1316
        %v3215 = vunpack.c.h.b16 %v1316
        %v3216 = vunpack.c.l.b16 %v1317
        %v3217 = vunpack.c.h.b16 %v1317
        %v3218 = vunpack.c.l.b16 %v1318
        %v3219 = vunpack.c.h.b16 %v1318
        %v3220 = vunpack.c.l.b16 %v1319
        %v3221 = vunpack.c.h.b16 %v1319
        %v3222 = vunpack.c.l.b16 %v1320
        %v3223 = vunpack.c.h.b16 %v1320
        %v3224 = vunpack.c.l.b16 %v1321
        %v3225 = vunpack.c.h.b16 %v1321
        %v3226 = vunpack.c.l.b16 %v1322
        %v3227 = vunpack.c.h.b16 %v1322
        %v3228 = vunpack.c.l.b16 %v1323
        %v3229 = vunpack.c.h.b16 %v1323
        %v3230 = vunpack.c.l.b16 %v1324
        %v3231 = vunpack.c.h.b16 %v1324
        %v3232 = vunpack.c.l.b16 %v1325
        %v3233 = vunpack.c.h.b16 %v1325
        %v3234 = vunpack.c.l.b16 %v1326
        %v3235 = vunpack.c.h.b16 %v1326
        %v3236 = vunpack.c.l.b16 %v1327
        %v3237 = vunpack.c.h.b16 %v1327
        %v3238 = vunpack.c.l.b16 %v1328
        %v3239 = vunpack.c.h.b16 %v1328
        %v3240 = vunpack.c.l.b16 %v1329
        %v3241 = vunpack.c.h.b16 %v1329
        %v3242 = vunpack.c.l.b16 %v1330
        %v3243 = vunpack.c.h.b16 %v1330
        %v3244 = vunpack.c.l.b16 %v1331
        %v3245 = vunpack.c.h.b16 %v1331
        %v3246 = vunpack.c.l.b16 %v1332
        %v3247 = vunpack.c.h.b16 %v1332
        %v3248 = vunpack.c.l.b16 %v1333
        %v3249 = vunpack.c.h.b16 %v1333
        %v3250 = vunpack.c.l.b16 %v1334
        %v3251 = vunpack.c.h.b16 %v1334
        %v3252 = vunpack.c.l.b16 %v1335
        %v3253 = vunpack.c.h.b16 %v1335
        %v3254 = vunpack.c.l.b16 %v1336
        %v3255 = vunpack.c.h.b16 %v1336
        %v3256 = vunpack.c.l.b16 %v1337
        %v3257 = vunpack.c.h.b16 %v1337
        %v3258 = vunpack.c.l.b16 %v1338
        %v3259 = vunpack.c.h.b16 %v1338
        %v3260 = vunpack.c.l.b16 %v1339
        %v3261 = vunpack.c.h.b16 %v1339
        %v3262 = vunpack.c.l.b16 %v1340
        %v3263 = vunpack.c.h.b16 %v1340
        %v3264 = vunpack.c.l.b16 %v1341
        %v3265 = vunpack.c.h.b16 %v1341
        %v3266 = vunpack.c.l.b16 %v1342
        %v3267 = vunpack.c.h.b16 %v1342
        %v3268 = vunpack.c.l.b16 %v1343
        %v3269 = vunpack.c.h.b16 %v1343
        %v3270 = vunpack.c.l.b16 %v1344
        %v3271 = vunpack.c.h.b16 %v1344
        %v3272 = vunpack.c.l.b16 %v1345
        %v3273 = vunpack.c.h.b16 %v1345
        %v3274 = vunpack.c.l.b16 %v1346
        %v3275 = vunpack.c.h.b16 %v1346
        %v3276 = vunpack.c.l.b16 %v1347
        %v3277 = vunpack.c.h.b16 %v1347
        %v3278 = vunpack.c.l.b16 %v1348
        %v3279 = vunpack.c.h.b16 %v1348
        %v3280 = vunpack.c.l.b16 %v1349
        %v3281 = vunpack.c.h.b16 %v1349
        %v3282 = vunpack.c.l.b16 %v1350
        %v3283 = vunpack.c.h.b16 %v1350
        %v3284 = vunpack.c.l.b16 %v1351
        %v3285 = vunpack.c.h.b16 %v1351
        %v3286 = vunpack.c.l.b16 %v1352
        %v3287 = vunpack.c.h.b16 %v1352
        %v3288 = vunpack.c.l.b16 %v1353
        %v3289 = vunpack.c.h.b16 %v1353
        %v3290 = vunpack.c.l.b16 %v1354
        %v3291 = vunpack.c.h.b16 %v1354
        %v3292 = vunpack.c.l.b16 %v1355
        %v3293 = vunpack.c.h.b16 %v1355
        %v3294 = vunpack.c.l.b16 %v1356
        %v3295 = vunpack.c.h.b16 %v1356
        %v3296 = vunpack.c.l.b16 %v1357
        %v3297 = vunpack.c.h.b16 %v1357
        %v3298 = vunpack.c.l.b16 %v1358
        %v3299 = vunpack.c.h.b16 %v1358
        %v3300 = vunpack.c.l.b16 %v1359
        %v3301 = vunpack.c.h.b16 %v1359
        %v3302 = vunpack.c.l.b16 %v1360
        %v3303 = vunpack.c.h.b16 %v1360
        %v3304 = vunpack.c.l.b16 %v1361
        %v3305 = vunpack.c.h.b16 %v1361
        %v3306 = vunpack.c.l.b16 %v1362
        %v3307 = vunpack.c.h.b16 %v1362
        %v3308 = vunpack.c.l.b16 %v1363
        %v3309 = vunpack.c.h.b16 %v1363
        %v3310 = vunpack.c.l.b16 %v1364
        %v3311 = vunpack.c.h.b16 %v1364
        %v3312 = vunpack.c.l.b16 %v1365
        %v3313 = vunpack.c.h.b16 %v1365
        %v3314 = vunpack.c.l.b16 %v1366
        %v3315 = vunpack.c.h.b16 %v1366
        %v3316 = vunpack.c.l.b16 %v1367
        %v3317 = vunpack.c.h.b16 %v1367
        %v3318 = vunpack.c.l.b16 %v1368
        %v3319 = vunpack.c.h.b16 %v1368
        %v3320 = vunpack.c.l.b16 %v1369
        %v3321 = vunpack.c.h.b16 %v1369
        %v3322 = vunpack.c.l.b16 %v1370
        %v3323 = vunpack.c.h.b16 %v1370
        %v3324 = vunpack.c.l.b16 %v1371
        %v3325 = vunpack.c.h.b16 %v1371
        %v3326 = vunpack.c.l.b16 %v1372
        %v3327 = vunpack.c.h.b16 %v1372
        %v3328 = vunpack.c.l.b16 %v1373
        %v3329 = vunpack.c.h.b16 %v1373
        %v3330 = vunpack.c.l.b16 %v1374
        %v3331 = vunpack.c.h.b16 %v1374
        %v3332 = vunpack.c.l.b16 %v1375
        %v3333 = vunpack.c.h.b16 %v1375
        %v3334 = vunpack.c.l.b16 %v1376
        %v3335 = vunpack.c.h.b16 %v1376
        %v3336 = vunpack.c.l.b16 %v1377
        %v3337 = vunpack.c.h.b16 %v1377
        %v3338 = vunpack.c.l.b16 %v1378
        %v3339 = vunpack.c.h.b16 %v1378
        %v3340 = vunpack.c.l.b16 %v1379
        %v3341 = vunpack.c.h.b16 %v1379
        %v3342 = vunpack.c.l.b16 %v1380
        %v3343 = vunpack.c.h.b16 %v1380
        %v3344 = vunpack.c.l.b16 %v1381
        %v3345 = vunpack.c.h.b16 %v1381
        %v3346 = vunpack.c.l.b16 %v1382
        %v3347 = vunpack.c.h.b16 %v1382
        %v3348 = vunpack.c.l.b16 %v1383
        %v3349 = vunpack.c.h.b16 %v1383
        %v3350 = vunpack.c.l.b16 %v1384
        %v3351 = vunpack.c.h.b16 %v1384
        %v3352 = vunpack.c.l.b16 %v1385
        %v3353 = vunpack.c.h.b16 %v1385
        %v3354 = vunpack.c.l.b16 %v1386
        %v3355 = vunpack.c.h.b16 %v1386
        %v3356 = vunpack.c.l.b16 %v1387
        %v3357 = vunpack.c.h.b16 %v1387
        %v3358 = vunpack.c.l.b16 %v1388
        %v3359 = vunpack.c.h.b16 %v1388
        %v3360 = vunpack.c.l.b16 %v1389
        %v3361 = vunpack.c.h.b16 %v1389
        %v3362 = vunpack.c.l.b16 %v1390
        %v3363 = vunpack.c.h.b16 %v1390
        %v3364 = vunpack.c.l.b16 %v1391
        %v3365 = vunpack.c.h.b16 %v1391
        %v3366 = vunpack.c.l.b16 %v1392
        %v3367 = vunpack.c.h.b16 %v1392
        %v3368 = vunpack.c.l.b16 %v1393
        %v3369 = vunpack.c.h.b16 %v1393
        %v3370 = vunpack.c.l.b16 %v1394
        %v3371 = vunpack.c.h.b16 %v1394
        %v3372 = vunpack.c.l.b16 %v1395
        %v3373 = vunpack.c.h.b16 %v1395
        %v3374 = vunpack.c.l.b16 %v1396
        %v3375 = vunpack.c.h.b16 %v1396
        %v3376 = vunpack.c.l.b16 %v1397
        %v3377 = vunpack.c.h.b16 %v1397
        %v3378 = vunpack.c.l.b16 %v1398
        %v3379 = vunpack.c.h.b16 %v1398
        %v3380 = vunpack.c.l.b16 %v1399
        %v3381 = vunpack.c.h.b16 %v1399
        %v3382 = vunpack.c.l.b16 %v1400
        %v3383 = vunpack.c.h.b16 %v1400
        %v3384 = vunpack.c.l.b16 %v1401
        %v3385 = vunpack.c.h.b16 %v1401
        %v3386 = vunpack.c.l.b16 %v1402
        %v3387 = vunpack.c.h.b16 %v1402
        %v3388 = vunpack.c.l.b16 %v1403
        %v3389 = vunpack.c.h.b16 %v1403
        %v3390 = vunpack.c.l.b16 %v1404
        %v3391 = vunpack.c.h.b16 %v1404
        %v3392 = vunpack.c.l.b16 %v1405
        %v3393 = vunpack.c.h.b16 %v1405
        %v3394 = vunpack.c.l.b16 %v1406
        %v3395 = vunpack.c.h.b16 %v1406
        %v3396 = vunpack.c.l.b16 %v1407
        %v3397 = vunpack.c.h.b16 %v1407
        %v3398 = vunpack.c.l.b16 %v1408
        %v3399 = vunpack.c.h.b16 %v1408
        %v3400 = vunpack.c.l.b16 %v1409
        %v3401 = vunpack.c.h.b16 %v1409
        %v3402 = vunpack.c.l.b16 %v1410
        %v3403 = vunpack.c.h.b16 %v1410
        %v3404 = vunpack.c.l.b16 %v1411
        %v3405 = vunpack.c.h.b16 %v1411
        %v3406 = vunpack.c.l.b16 %v1412
        %v3407 = vunpack.c.h.b16 %v1412
        %v3408 = vunpack.c.l.b16 %v1413
        %v3409 = vunpack.c.h.b16 %v1413
        %v3410 = vunpack.c.l.b16 %v1414
        %v3411 = vunpack.c.h.b16 %v1414
        %v3412 = vunpack.c.l.b16 %v1415
        %v3413 = vunpack.c.h.b16 %v1415
        %v3414 = vunpack.c.l.b16 %v1416
        %v3415 = vunpack.c.h.b16 %v1416
        %v3416 = vunpack.c.l.b16 %v1417
        %v3417 = vunpack.c.h.b16 %v1417
        %v3418 = vunpack.c.l.b16 %v1418
        %v3419 = vunpack.c.h.b16 %v1418
        %v3420 = vunpack.c.l.b16 %v1419
        %v3421 = vunpack.c.h.b16 %v1419
        %v3422 = vunpack.c.l.b16 %v1420
        %v3423 = vunpack.c.h.b16 %v1420
        %v3424 = vunpack.c.l.b16 %v1421
        %v3425 = vunpack.c.h.b16 %v1421
        %v3426 = vunpack.c.l.b16 %v1422
        %v3427 = vunpack.c.h.b16 %v1422
        %v3428 = vunpack.c.l.b16 %v1423
        %v3429 = vunpack.c.h.b16 %v1423
        %v3430 = vunpack.c.l.b16 %v1424
        %v3431 = vunpack.c.h.b16 %v1424
        %v3432 = vunpack.c.l.b16 %v1425
        %v3433 = vunpack.c.h.b16 %v1425
        %v3434 = vunpack.c.l.b16 %v1426
        %v3435 = vunpack.c.h.b16 %v1426
        %v3436 = vunpack.c.l.b16 %v1427
        %v3437 = vunpack.c.h.b16 %v1427
        %v3438 = vunpack.c.l.b16 %v1428
        %v3439 = vunpack.c.h.b16 %v1428
        %v3440 = vunpack.c.l.b16 %v1429
        %v3441 = vunpack.c.h.b16 %v1429
        %v3442 = vunpack.c.l.b16 %v1430
        %v3443 = vunpack.c.h.b16 %v1430
        %v3444 = vunpack.c.l.b16 %v1431
        %v3445 = vunpack.c.h.b16 %v1431
        %v3446 = vunpack.c.l.b16 %v1432
        %v3447 = vunpack.c.h.b16 %v1432
        %v3448 = vunpack.c.l.b16 %v1433
        %v3449 = vunpack.c.h.b16 %v1433
        %v3450 = vunpack.c.l.b16 %v1434
        %v3451 = vunpack.c.h.b16 %v1434
        %v3452 = vunpack.c.l.b16 %v1435
        %v3453 = vunpack.c.h.b16 %v1435
        %v3454 = vunpack.c.l.b16 %v1436
        %v3455 = vunpack.c.h.b16 %v1436
        %v3456 = vunpack.c.l.b16 %v1437
        %v3457 = vunpack.c.h.b16 %v1437
        %v3458 = vunpack.c.l.b16 %v1438
        %v3459 = vunpack.c.h.b16 %v1438
        %v3460 = vunpack.c.l.b16 %v1439
        %v3461 = vunpack.c.h.b16 %v1439
        %v3462 = vunpack.c.l.b16 %v1440
        %v3463 = vunpack.c.h.b16 %v1440
        %v3464 = vunpack.c.l.b16 %v1441
        %v3465 = vunpack.c.h.b16 %v1441
        %v3466 = vunpack.c.l.b16 %v1442
        %v3467 = vunpack.c.h.b16 %v1442
        %v3468 = vunpack.c.l.b16 %v1443
        %v3469 = vunpack.c.h.b16 %v1443
        %v3470 = vunpack.c.l.b16 %v1444
        %v3471 = vunpack.c.h.b16 %v1444
        %v3472 = vunpack.c.l.b16 %v1445
        %v3473 = vunpack.c.h.b16 %v1445
        %v3474 = vunpack.c.l.b16 %v1446
        %v3475 = vunpack.c.h.b16 %v1446
        %v3476 = vunpack.c.l.b16 %v1447
        %v3477 = vunpack.c.h.b16 %v1447
        %v3478 = vunpack.c.l.b16 %v1448
        %v3479 = vunpack.c.h.b16 %v1448
        %v3480 = vunpack.c.l.b16 %v1449
        %v3481 = vunpack.c.h.b16 %v1449
        %v3482 = vunpack.c.l.b16 %v1450
        %v3483 = vunpack.c.h.b16 %v1450
        %v3484 = vunpack.c.l.b16 %v1451
        %v3485 = vunpack.c.h.b16 %v1451
        %v3486 = vunpack.c.l.b16 %v1452
        %v3487 = vunpack.c.h.b16 %v1452
        %v3488 = vunpack.c.l.b16 %v1453
        %v3489 = vunpack.c.h.b16 %v1453
        %v3490 = vunpack.c.l.b16 %v1454
        %v3491 = vunpack.c.h.b16 %v1454
        %v3492 = vunpack.c.l.b16 %v1455
        %v3493 = vunpack.c.h.b16 %v1455
        %v3494 = vunpack.c.l.b16 %v1456
        %v3495 = vunpack.c.h.b16 %v1456
        %v3496 = vunpack.c.l.b16 %v1457
        %v3497 = vunpack.c.h.b16 %v1457
        %v3498 = vunpack.c.l.b16 %v1458
        %v3499 = vunpack.c.h.b16 %v1458
        %v3500 = vunpack.c.l.b16 %v1459
        %v3501 = vunpack.c.h.b16 %v1459
        %v3502 = vunpack.c.l.b16 %v1460
        %v3503 = vunpack.c.h.b16 %v1460
        %v3504 = vunpack.c.l.b16 %v1461
        %v3505 = vunpack.c.h.b16 %v1461
        %v3506 = vunpack.c.l.b16 %v1462
        %v3507 = vunpack.c.h.b16 %v1462
        %v3508 = vunpack.c.l.b16 %v1463
        %v3509 = vunpack.c.h.b16 %v1463
        %v3510 = vunpack.c.l.b16 %v1464
        %v3511 = vunpack.c.h.b16 %v1464
        %v3512 = vunpack.c.l.b16 %v1465
        %v3513 = vunpack.c.h.b16 %v1465
        %v3514 = vunpack.c.l.b16 %v1466
        %v3515 = vunpack.c.h.b16 %v1466
        %v3516 = vunpack.c.l.b16 %v1467
        %v3517 = vunpack.c.h.b16 %v1467
        %v3518 = vunpack.c.l.b16 %v1468
        %v3519 = vunpack.c.h.b16 %v1468
        %v3520 = vunpack.c.l.b16 %v1469
        %v3521 = vunpack.c.h.b16 %v1469
        %v3522 = vunpack.c.l.b16 %v1470
        %v3523 = vunpack.c.h.b16 %v1470
        %v3524 = vunpack.c.l.b16 %v1471
        %v3525 = vunpack.c.h.b16 %v1471
        %v3526 = vunpack.c.l.b16 %v1472
        %v3527 = vunpack.c.h.b16 %v1472
        %v3528 = vunpack.c.l.b16 %v1473
        %v3529 = vunpack.c.h.b16 %v1473
        %v3530 = vunpack.c.l.b16 %v1474
        %v3531 = vunpack.c.h.b16 %v1474
        %v3532 = vunpack.c.l.b16 %v1475
        %v3533 = vunpack.c.h.b16 %v1475
        %v3534 = vunpack.c.l.b16 %v1476
        %v3535 = vunpack.c.h.b16 %v1476
        %v3536 = vunpack.c.l.b16 %v1477
        %v3537 = vunpack.c.h.b16 %v1477
        %v3538 = vunpack.c.l.b16 %v1478
        %v3539 = vunpack.c.h.b16 %v1478
        %v3540 = vunpack.c.l.b16 %v1479
        %v3541 = vunpack.c.h.b16 %v1479
        %v3542 = vunpack.c.l.b16 %v1480
        %v3543 = vunpack.c.h.b16 %v1480
        %v3544 = vunpack.c.l.b16 %v1481
        %v3545 = vunpack.c.h.b16 %v1481
        %v3546 = vunpack.c.l.b16 %v1482
        %v3547 = vunpack.c.h.b16 %v1482
        %v3548 = vunpack.c.l.b16 %v1483
        %v3549 = vunpack.c.h.b16 %v1483
        %v3550 = vunpack.c.l.b16 %v1484
        %v3551 = vunpack.c.h.b16 %v1484
        %v3552 = vunpack.c.l.b16 %v1485
        %v3553 = vunpack.c.h.b16 %v1485
        %v3554 = vunpack.c.l.b16 %v1486
        %v3555 = vunpack.c.h.b16 %v1486
        %v3556 = vunpack.c.l.b16 %v1487
        %v3557 = vunpack.c.h.b16 %v1487
        %v3558 = vunpack.c.l.b16 %v1488
        %v3559 = vunpack.c.h.b16 %v1488
        %v3560 = vunpack.c.l.b16 %v1489
        %v3561 = vunpack.c.h.b16 %v1489
        %v3562 = vunpack.c.l.b16 %v1490
        %v3563 = vunpack.c.h.b16 %v1490
        %v3564 = vunpack.c.l.b16 %v1491
        %v3565 = vunpack.c.h.b16 %v1491
        %v3566 = vunpack.c.l.b16 %v1492
        %v3567 = vunpack.c.h.b16 %v1492
        %v3568 = vunpack.c.l.b16 %v1493
        %v3569 = vunpack.c.h.b16 %v1493
        %v3570 = vunpack.c.l.b16 %v1494
        %v3571 = vunpack.c.h.b16 %v1494
        %v3572 = vunpack.c.l.b16 %v1495
        %v3573 = vunpack.c.h.b16 %v1495
        %v3574 = vunpack.c.l.b16 %v1496
        %v3575 = vunpack.c.h.b16 %v1496
        %v3576 = vunpack.c.l.b16 %v1497
        %v3577 = vunpack.c.h.b16 %v1497
        %v3578 = vunpack.c.l.b16 %v1498
        %v3579 = vunpack.c.h.b16 %v1498
        %v3580 = vunpack.c.l.b16 %v1499
        %v3581 = vunpack.c.h.b16 %v1499
        %v3582 = vunpack.c.l.b16 %v1500
        %v3583 = vunpack.c.h.b16 %v1500
        %v3584 = vunpack.c.l.b16 %v1501
        %v3585 = vunpack.c.h.b16 %v1501
        %v3586 = vunpack.c.l.b16 %v1502
        %v3587 = vunpack.c.h.b16 %v1502
        %v3588 = vunpack.c.l.b16 %v1503
        %v3589 = vunpack.c.h.b16 %v1503
        %v3590 = vunpack.c.l.b16 %v1504
        %v3591 = vunpack.c.h.b16 %v1504
        %v3592 = vunpack.c.l.b16 %v1505
        %v3593 = vunpack.c.h.b16 %v1505
        %v3594 = vunpack.c.l.b16 %v1506
        %v3595 = vunpack.c.h.b16 %v1506
        %v3596 = vunpack.c.l.b16 %v1507
        %v3597 = vunpack.c.h.b16 %v1507
        %v3598 = vunpack.c.l.b16 %v1508
        %v3599 = vunpack.c.h.b16 %v1508
        %v3600 = vunpack.c.l.b16 %v1509
        %v3601 = vunpack.c.h.b16 %v1509
        %v3602 = vunpack.c.l.b16 %v1510
        %v3603 = vunpack.c.h.b16 %v1510
        %v3604 = vunpack.c.l.b16 %v1511
        %v3605 = vunpack.c.h.b16 %v1511
        %v3606 = vunpack.c.l.b16 %v1512
        %v3607 = vunpack.c.h.b16 %v1512
        %v3608 = vunpack.c.l.b16 %v1513
        %v3609 = vunpack.c.h.b16 %v1513
        %v3610 = vunpack.c.l.b16 %v1514
        %v3611 = vunpack.c.h.b16 %v1514
        %v3612 = vunpack.c.l.b16 %v1515
        %v3613 = vunpack.c.h.b16 %v1515
        %v3614 = vunpack.c.l.b16 %v1516
        %v3615 = vunpack.c.h.b16 %v1516
        %v3616 = vunpack.c.l.b16 %v1517
        %v3617 = vunpack.c.h.b16 %v1517
        %v3618 = vunpack.c.l.b16 %v1518
        %v3619 = vunpack.c.h.b16 %v1518
        %v3620 = vunpack.c.l.b16 %v1519
        %v3621 = vunpack.c.h.b16 %v1519
        %v3622 = vunpack.c.l.b16 %v1520
        %v3623 = vunpack.c.h.b16 %v1520
        %v3624 = vunpack.c.l.b16 %v1521
        %v3625 = vunpack.c.h.b16 %v1521
        %v3626 = vunpack.c.l.b16 %v1522
        %v3627 = vunpack.c.h.b16 %v1522
        %v3628 = vunpack.c.l.b16 %v1523
        %v3629 = vunpack.c.h.b16 %v1523
        %v3630 = vunpack.c.l.b16 %v1524
        %v3631 = vunpack.c.h.b16 %v1524
        %v3632 = vunpack.c.l.b16 %v1525
        %v3633 = vunpack.c.h.b16 %v1525
        %v3634 = vunpack.c.l.b16 %v1526
        %v3635 = vunpack.c.h.b16 %v1526
        %v3636 = vunpack.c.l.b16 %v1527
        %v3637 = vunpack.c.h.b16 %v1527
        %v3638 = vunpack.c.l.b16 %v1528
        %v3639 = vunpack.c.h.b16 %v1528
        %v3640 = vunpack.c.l.b16 %v1529
        %v3641 = vunpack.c.h.b16 %v1529
        %v3642 = vunpack.c.l.b16 %v1530
        %v3643 = vunpack.c.h.b16 %v1530
        %v3644 = vunpack.c.l.b16 %v1531
        %v3645 = vunpack.c.h.b16 %v1531
        %v3646 = vunpack.c.l.b16 %v1532
        %v3647 = vunpack.c.h.b16 %v1532
        %v3648 = vunpack.c.l.b16 %v1533
        %v3649 = vunpack.c.h.b16 %v1533
        %v3650 = vunpack.c.l.b16 %v1534
        %v3651 = vunpack.c.h.b16 %v1534
        %v3652 = vunpack.c.l.b16 %v1535
        %v3653 = vunpack.c.h.b16 %v1535
        %v3654 = vunpack.c.l.b16 %v1536
        %v3655 = vunpack.c.h.b16 %v1536
        %v3656 = vunpack.c.l.b16 %v1537
        %v3657 = vunpack.c.h.b16 %v1537
        %v3658 = vunpack.c.l.b16 %v1538
        %v3659 = vunpack.c.h.b16 %v1538
        %v3660 = vunpack.c.l.b16 %v1539
        %v3661 = vunpack.c.h.b16 %v1539
        %v3662 = vunpack.c.l.b16 %v1540
        %v3663 = vunpack.c.h.b16 %v1540
        %v3664 = vunpack.c.l.b16 %v1541
        %v3665 = vunpack.c.h.b16 %v1541
        %v3666 = vunpack.c.l.b16 %v1542
        %v3667 = vunpack.c.h.b16 %v1542
        %v3668 = vunpack.c.l.b16 %v1543
        %v3669 = vunpack.c.h.b16 %v1543
        %v3670 = vunpack.c.l.b16 %v1544
        %v3671 = vunpack.c.h.b16 %v1544
        %v3672 = vunpack.c.l.b16 %v1545
        %v3673 = vunpack.c.h.b16 %v1545
        %v3674 = vunpack.c.l.b16 %v1546
        %v3675 = vunpack.c.h.b16 %v1546
        %v3676 = vunpack.c.l.b16 %v1547
        %v3677 = vunpack.c.h.b16 %v1547
        %v3678 = vunpack.c.l.b16 %v1548
        %v3679 = vunpack.c.h.b16 %v1548
        %v3680 = vunpack.c.l.b16 %v1549
        %v3681 = vunpack.c.h.b16 %v1549
        %v3682 = vunpack.c.l.b16 %v1550
        %v3683 = vunpack.c.h.b16 %v1550
        %v3684 = vunpack.c.l.b16 %v1551
        %v3685 = vunpack.c.h.b16 %v1551
        %v3686 = vunpack.c.l.b16 %v1552
        %v3687 = vunpack.c.h.b16 %v1552
        %v3688 = vunpack.c.l.b16 %v1553
        %v3689 = vunpack.c.h.b16 %v1553
        %v3690 = vunpack.c.l.b16 %v1554
        %v3691 = vunpack.c.h.b16 %v1554
        %v3692 = vunpack.c.l.b16 %v1555
        %v3693 = vunpack.c.h.b16 %v1555
        %v3694 = vunpack.c.l.b16 %v1556
        %v3695 = vunpack.c.h.b16 %v1556
        %v3696 = vunpack.c.l.b16 %v1557
        %v3697 = vunpack.c.h.b16 %v1557
        %v3698 = vunpack.c.l.b16 %v1558
        %v3699 = vunpack.c.h.b16 %v1558
        %v3700 = vunpack.c.l.b16 %v1559
        %v3701 = vunpack.c.h.b16 %v1559
        %v3702 = vunpack.c.l.b16 %v1560
        %v3703 = vunpack.c.h.b16 %v1560
        %v3704 = vunpack.c.l.b16 %v1561
        %v3705 = vunpack.c.h.b16 %v1561
        %v3706 = vunpack.c.l.b16 %v1562
        %v3707 = vunpack.c.h.b16 %v1562
        %v3708 = vunpack.c.l.b16 %v1563
        %v3709 = vunpack.c.h.b16 %v1563
        %v3710 = vunpack.c.l.b16 %v1564
        %v3711 = vunpack.c.h.b16 %v1564
        %v3712 = vunpack.c.l.b16 %v1565
        %v3713 = vunpack.c.h.b16 %v1565
        %v3714 = vunpack.c.l.b16 %v1566
        %v3715 = vunpack.c.h.b16 %v1566
        %v3716 = vunpack.c.l.b16 %v1567
        %v3717 = vunpack.c.h.b16 %v1567
        %v3718 = vunpack.c.l.b16 %v1568
        %v3719 = vunpack.c.h.b16 %v1568
        %v3720 = vunpack.c.l.b16 %v1569
        %v3721 = vunpack.c.h.b16 %v1569
        %v3722 = vunpack.c.l.b16 %v1570
        %v3723 = vunpack.c.h.b16 %v1570
        %v3724 = vunpack.c.l.b16 %v1571
        %v3725 = vunpack.c.h.b16 %v1571
        %v3726 = vunpack.c.l.b16 %v1572
        %v3727 = vunpack.c.h.b16 %v1572
        %v3728 = vunpack.c.l.b16 %v1573
        %v3729 = vunpack.c.h.b16 %v1573
        %v3730 = vunpack.c.l.b16 %v1574
        %v3731 = vunpack.c.h.b16 %v1574
        %v3732 = vunpack.c.l.b16 %v1575
        %v3733 = vunpack.c.h.b16 %v1575
        %v3734 = vunpack.c.l.b16 %v1576
        %v3735 = vunpack.c.h.b16 %v1576
        %v3736 = vunpack.c.l.b16 %v1577
        %v3737 = vunpack.c.h.b16 %v1577
        %v3738 = vunpack.c.l.b16 %v1578
        %v3739 = vunpack.c.h.b16 %v1578
        %v3740 = vunpack.c.l.b16 %v1579
        %v3741 = vunpack.c.h.b16 %v1579
        %v3742 = vunpack.c.l.b16 %v1580
        %v3743 = vunpack.c.h.b16 %v1580
        %v3744 = vunpack.c.l.b16 %v1581
        %v3745 = vunpack.c.h.b16 %v1581
        %v3746 = vunpack.c.l.b16 %v1582
        %v3747 = vunpack.c.h.b16 %v1582
        %v3748 = vunpack.c.l.b16 %v1583
        %v3749 = vunpack.c.h.b16 %v1583
        %v3750 = vunpack.c.l.b16 %v1584
        %v3751 = vunpack.c.h.b16 %v1584
        %v3752 = vunpack.c.l.b16 %v1585
        %v3753 = vunpack.c.h.b16 %v1585
        %v3754 = vunpack.c.l.b16 %v1586
        %v3755 = vunpack.c.h.b16 %v1586
        %v3756 = vunpack.c.l.b16 %v1587
        %v3757 = vunpack.c.h.b16 %v1587
        %v3758 = vunpack.c.l.b16 %v1588
        %v3759 = vunpack.c.h.b16 %v1588
        %v3760 = vunpack.c.l.b16 %v1589
        %v3761 = vunpack.c.h.b16 %v1589
        %v3762 = vunpack.c.l.b16 %v1590
        %v3763 = vunpack.c.h.b16 %v1590
        %v3764 = vunpack.c.l.b16 %v1591
        %v3765 = vunpack.c.h.b16 %v1591
        %v3766 = vunpack.c.l.b16 %v1592
        %v3767 = vunpack.c.h.b16 %v1592
        %v3768 = vunpack.c.l.b16 %v1593
        %v3769 = vunpack.c.h.b16 %v1593
        %v3770 = vunpack.c.l.b16 %v1594
        %v3771 = vunpack.c.h.b16 %v1594
        %v3772 = vunpack.c.l.b16 %v1595
        %v3773 = vunpack.c.h.b16 %v1595
        %v3774 = vunpack.c.l.b16 %v1596
        %v3775 = vunpack.c.h.b16 %v1596
        %v3776 = vunpack.c.l.b16 %v1597
        %v3777 = vunpack.c.h.b16 %v1597
        %v3778 = vunpack.c.l.b16 %v1598
        %v3779 = vunpack.c.h.b16 %v1598
        %v3780 = vunpack.c.l.b16 %v1599
        %v3781 = vunpack.c.h.b16 %v1599
        %v3782 = vunpack.c.l.b16 %v1600
        %v3783 = vunpack.c.h.b16 %v1600
        %v3784 = vunpack.c.l.b16 %v1601
        %v3785 = vunpack.c.h.b16 %v1601
        %v3786 = vunpack.c.l.b16 %v1602
        %v3787 = vunpack.c.h.b16 %v1602
        %v3788 = vunpack.c.l.b16 %v1603
        %v3789 = vunpack.c.h.b16 %v1603
        %v3790 = vunpack.c.l.b16 %v1604
        %v3791 = vunpack.c.h.b16 %v1604
        %v3792 = vunpack.c.l.b16 %v1605
        %v3793 = vunpack.c.h.b16 %v1605
        %v3794 = vunpack.c.l.b16 %v1606
        %v3795 = vunpack.c.h.b16 %v1606
        %v3796 = vunpack.c.l.b16 %v1607
        %v3797 = vunpack.c.h.b16 %v1607
        %v3798 = vunpack.c.l.b16 %v1608
        %v3799 = vunpack.c.h.b16 %v1608
        %v3800 = vunpack.c.l.b16 %v1609
        %v3801 = vunpack.c.h.b16 %v1609
        %v3802 = vunpack.c.l.b16 %v1610
        %v3803 = vunpack.c.h.b16 %v1610
        %v3804 = vunpack.c.l.b16 %v1611
        %v3805 = vunpack.c.h.b16 %v1611
        %v3806 = vunpack.c.l.b16 %v1612
        %v3807 = vunpack.c.h.b16 %v1612
        %v3808 = vunpack.c.l.b16 %v1613
        %v3809 = vunpack.c.h.b16 %v1613
        %v3810 = vunpack.c.l.b16 %v1614
        %v3811 = vunpack.c.h.b16 %v1614
        %v3812 = vunpack.c.l.b16 %v1615
        %v3813 = vunpack.c.h.b16 %v1615
        %v3814 = vunpack.c.l.b16 %v1616
        %v3815 = vunpack.c.h.b16 %v1616
        %v3816 = vunpack.c.l.b16 %v1617
        %v3817 = vunpack.c.h.b16 %v1617
        %v3818 = vunpack.c.l.b16 %v1618
        %v3819 = vunpack.c.h.b16 %v1618
        %v3820 = vunpack.c.l.b16 %v1619
        %v3821 = vunpack.c.h.b16 %v1619
        %v3822 = vunpack.c.l.b16 %v1620
        %v3823 = vunpack.c.h.b16 %v1620
        %v3824 = vunpack.c.l.b16 %v1621
        %v3825 = vunpack.c.h.b16 %v1621
        %v3826 = vunpack.c.l.b16 %v1622
        %v3827 = vunpack.c.h.b16 %v1622
        %v3828 = vunpack.c.l.b16 %v1623
        %v3829 = vunpack.c.h.b16 %v1623
        %v3830 = vunpack.c.l.b16 %v1624
        %v3831 = vunpack.c.h.b16 %v1624
        %v3832 = vunpack.c.l.b16 %v1625
        %v3833 = vunpack.c.h.b16 %v1625
        %v3834 = vunpack.c.l.b16 %v1626
        %v3835 = vunpack.c.h.b16 %v1626
        %v3836 = vunpack.c.l.b16 %v1627
        %v3837 = vunpack.c.h.b16 %v1627
        %v3838 = vunpack.c.l.b16 %v1628
        %v3839 = vunpack.c.h.b16 %v1628
        %v3840 = vunpack.c.l.b16 %v1629
        %v3841 = vunpack.c.h.b16 %v1629
        %v3842 = vunpack.c.l.b16 %v1630
        %v3843 = vunpack.c.h.b16 %v1630
        %v3844 = vunpack.c.l.b16 %v1631
        %v3845 = vunpack.c.h.b16 %v1631
        %v3846 = vunpack.c.l.b16 %v1632
        %v3847 = vunpack.c.h.b16 %v1632
        %v3848 = vunpack.c.l.b16 %v1633
        %v3849 = vunpack.c.h.b16 %v1633
        %v3850 = vunpack.c.l.b16 %v1634
        %v3851 = vunpack.c.h.b16 %v1634
        %v3852 = vunpack.c.l.b16 %v1635
        %v3853 = vunpack.c.h.b16 %v1635
        %v3854 = vunpack.c.l.b16 %v1636
        %v3855 = vunpack.c.h.b16 %v1636
        %v3856 = vunpack.c.l.b16 %v1637
        %v3857 = vunpack.c.h.b16 %v1637
        %v3858 = vunpack.c.l.b16 %v1638
        %v3859 = vunpack.c.h.b16 %v1638
        %v3860 = vunpack.c.l.b16 %v1639
        %v3861 = vunpack.c.h.b16 %v1639
        %v3862 = vunpack.c.l.b16 %v1640
        %v3863 = vunpack.c.h.b16 %v1640
        %v3864 = vunpack.c.l.b16 %v1641
        %v3865 = vunpack.c.h.b16 %v1641
        %v3866 = vunpack.c.l.b16 %v1642
        %v3867 = vunpack.c.h.b16 %v1642
        %v3868 = vunpack.c.l.b16 %v1643
        %v3869 = vunpack.c.h.b16 %v1643
        %v3870 = vunpack.c.l.b16 %v1644
        %v3871 = vunpack.c.h.b16 %v1644
        %v3872 = vunpack.c.l.b16 %v1645
        %v3873 = vunpack.c.h.b16 %v1645
        %v3874 = vunpack.c.l.b16 %v1646
        %v3875 = vunpack.c.h.b16 %v1646
        %v3876 = vunpack.c.l.b16 %v1647
        %v3877 = vunpack.c.h.b16 %v1647
        %v3878 = vunpack.c.l.b16 %v1648
        %v3879 = vunpack.c.h.b16 %v1648
        %v3880 = vunpack.c.l.b16 %v1649
        %v3881 = vunpack.c.h.b16 %v1649
        %v3882 = vunpack.c.l.b16 %v1650
        %v3883 = vunpack.c.h.b16 %v1650
        %v3884 = vunpack.c.l.b16 %v1651
        %v3885 = vunpack.c.h.b16 %v1651
        %v3886 = vunpack.c.l.b16 %v1652
        %v3887 = vunpack.c.h.b16 %v1652
        %v3888 = vunpack.c.l.b16 %v1653
        %v3889 = vunpack.c.h.b16 %v1653
        %v3890 = vunpack.c.l.b16 %v1654
        %v3891 = vunpack.c.h.b16 %v1654
        %v3892 = vunpack.c.l.b16 %v1655
        %v3893 = vunpack.c.h.b16 %v1655
        %v3894 = vunpack.c.l.b16 %v1656
        %v3895 = vunpack.c.h.b16 %v1656
        %v3896 = vunpack.c.l.b16 %v1657
        %v3897 = vunpack.c.h.b16 %v1657
        %v3898 = vunpack.c.l.b16 %v1658
        %v3899 = vunpack.c.h.b16 %v1658
        %v3900 = vunpack.c.l.b16 %v1659
        %v3901 = vunpack.c.h.b16 %v1659
        %v3902 = vunpack.c.l.b16 %v1660
        %v3903 = vunpack.c.h.b16 %v1660
        %v3904 = vunpack.c.l.b16 %v1661
        %v3905 = vunpack.c.h.b16 %v1661
        %v3906 = vunpack.c.l.b16 %v1662
        %v3907 = vunpack.c.h.b16 %v1662
        %v3908 = vunpack.c.l.b16 %v1663
        %v3909 = vunpack.c.h.b16 %v1663
        %v3910 = vunpack.c.l.b16 %v1664
        %v3911 = vunpack.c.h.b16 %v1664
        %v3912 = vunpack.c.l.b16 %v1665
        %v3913 = vunpack.c.h.b16 %v1665
        %v3914 = vunpack.c.l.b16 %v1666
        %v3915 = vunpack.c.h.b16 %v1666
        %v3916 = vunpack.c.l.b16 %v1667
        %v3917 = vunpack.c.h.b16 %v1667
        %v3918 = vunpack.c.l.b16 %v1668
        %v3919 = vunpack.c.h.b16 %v1668
        %v3920 = vunpack.c.l.b16 %v1669
        %v3921 = vunpack.c.h.b16 %v1669
        %v3922 = vunpack.c.l.b16 %v1670
        %v3923 = vunpack.c.h.b16 %v1670
        %v3924 = vunpack.c.l.b16 %v1671
        %v3925 = vunpack.c.h.b16 %v1671
        %v3926 = vunpack.c.l.b16 %v1672
        %v3927 = vunpack.c.h.b16 %v1672
        %v3928 = vunpack.c.l.b16 %v1673
        %v3929 = vunpack.c.h.b16 %v1673
        %v3930 = vunpack.c.l.b16 %v1674
        %v3931 = vunpack.c.h.b16 %v1674
        %v3932 = vunpack.c.l.b16 %v1675
        %v3933 = vunpack.c.h.b16 %v1675
        %v3934 = vunpack.c.l.b16 %v1676
        %v3935 = vunpack.c.h.b16 %v1676
        %v3936 = vunpack.c.l.b16 %v1677
        %v3937 = vunpack.c.h.b16 %v1677
        %v3938 = vunpack.c.l.b16 %v1678
        %v3939 = vunpack.c.h.b16 %v1678
        %v3940 = vunpack.c.l.b16 %v1679
        %v3941 = vunpack.c.h.b16 %v1679
        %v3942 = vunpack.c.l.b16 %v1680
        %v3943 = vunpack.c.h.b16 %v1680
        %v3944 = vunpack.c.l.b16 %v1681
        %v3945 = vunpack.c.h.b16 %v1681
        %v3946 = vunpack.c.l.b16 %v1682
        %v3947 = vunpack.c.h.b16 %v1682
        %v3948 = vunpack.c.l.b16 %v1683
        %v3949 = vunpack.c.h.b16 %v1683
        %v3950 = vunpack.c.l.b16 %v1684
        %v3951 = vunpack.c.h.b16 %v1684
        %v3952 = vunpack.c.l.b16 %v1685
        %v3953 = vunpack.c.h.b16 %v1685
        %v3954 = vunpack.c.l.b16 %v1686
        %v3955 = vunpack.c.h.b16 %v1686
        %v3956 = vunpack.c.l.b16 %v1687
        %v3957 = vunpack.c.h.b16 %v1687
        %v3958 = vunpack.c.l.b16 %v1688
        %v3959 = vunpack.c.h.b16 %v1688
        %v3960 = vunpack.c.l.b16 %v1689
        %v3961 = vunpack.c.h.b16 %v1689
        %v3962 = vunpack.c.l.b16 %v1690
        %v3963 = vunpack.c.h.b16 %v1690
        %v3964 = vunpack.c.l.b16 %v1691
        %v3965 = vunpack.c.h.b16 %v1691
        %v3966 = vunpack.c.l.b16 %v1692
        %v3967 = vunpack.c.h.b16 %v1692
        %v3968 = vunpack.c.l.b16 %v1693
        %v3969 = vunpack.c.h.b16 %v1693
        %v3970 = vunpack.c.l.b16 %v1694
        %v3971 = vunpack.c.h.b16 %v1694
        %v3972 = vunpack.c.l.b16 %v1695
        %v3973 = vunpack.c.h.b16 %v1695
        %v3974 = vunpack.c.l.b16 %v1696
        %v3975 = vunpack.c.h.b16 %v1696
        %v3976 = vunpack.c.l.b16 %v1697
        %v3977 = vunpack.c.h.b16 %v1697
        %v3978 = vunpack.c.l.b16 %v1698
        %v3979 = vunpack.c.h.b16 %v1698
        %v3980 = vunpack.c.l.b16 %v1699
        %v3981 = vunpack.c.h.b16 %v1699
        %v3982 = vunpack.c.l.b16 %v1700
        %v3983 = vunpack.c.h.b16 %v1700
        %v3984 = vunpack.c.l.b16 %v1701
        %v3985 = vunpack.c.h.b16 %v1701
        %v3986 = vunpack.c.l.b16 %v1702
        %v3987 = vunpack.c.h.b16 %v1702
        %v3988 = vunpack.c.l.b16 %v1703
        %v3989 = vunpack.c.h.b16 %v1703
        %v3990 = vunpack.c.l.b16 %v1704
        %v3991 = vunpack.c.h.b16 %v1704
        %v3992 = vunpack.c.l.b16 %v1705
        %v3993 = vunpack.c.h.b16 %v1705
        %v3994 = vunpack.c.l.b16 %v1706
        %v3995 = vunpack.c.h.b16 %v1706
        %v3996 = vunpack.c.l.b16 %v1707
        %v3997 = vunpack.c.h.b16 %v1707
        %v3998 = vunpack.c.l.b16 %v1708
        %v3999 = vunpack.c.h.b16 %v1708
        %v4000 = vunpack.c.l.b16 %v1709
        %v4001 = vunpack.c.h.b16 %v1709
        %v4002 = vunpack.c.l.b16 %v1710
        %v4003 = vunpack.c.h.b16 %v1710
        %v4004 = vunpack.c.l.b16 %v1711
        %v4005 = vunpack.c.h.b16 %v1711
        %v4006 = vunpack.c.l.b16 %v1712
        %v4007 = vunpack.c.h.b16 %v1712
        %v4008 = vunpack.c.l.b16 %v1713
        %v4009 = vunpack.c.h.b16 %v1713
        %v4010 = vunpack.c.l.b16 %v1714
        %v4011 = vunpack.c.h.b16 %v1714
        %v4012 = vunpack.c.l.b16 %v1715
        %v4013 = vunpack.c.h.b16 %v1715
        %v4014 = vunpack.c.l.b16 %v1716
        %v4015 = vunpack.c.h.b16 %v1716
        %v4016 = vunpack.c.l.b16 %v1717
        %v4017 = vunpack.c.h.b16 %v1717
        %v4018 = vunpack.c.l.b16 %v1718
        %v4019 = vunpack.c.h.b16 %v1718
        %v4020 = vunpack.c.l.b16 %v1719
        %v4021 = vunpack.c.h.b16 %v1719
        %v4022 = vunpack.c.l.b16 %v1720
        %v4023 = vunpack.c.h.b16 %v1720
        %v4024 = vunpack.c.l.b16 %v1721
        %v4025 = vunpack.c.h.b16 %v1721
        %v4026 = vpack.c.b16 %v2494, %v2490
        %v4027 = vpack.c.b16 %v2495, %v2491
        %v4028 = vpack.c.b16 %v2496, %v2492
        %v4029 = vpack.c.b16 %v2497, %v2493
        %v4030 = vpack.c.b16 %v2502, %v2498
        %v4031 = vpack.c.b16 %v2503, %v2499
        %v4032 = vpack.c.b16 %v2504, %v2500
        %v4033 = vpack.c.b16 %v2505, %v2501
        %v4034 = vpack.c.b16 %v2510, %v2506
        %v4035 = vpack.c.b16 %v2511, %v2507
        %v4036 = vpack.c.b16 %v2512, %v2508
        %v4037 = vpack.c.b16 %v2513, %v2509
        %v4038 = vpack.c.b16 %v2518, %v2514
        %v4039 = vpack.c.b16 %v2519, %v2515
        %v4040 = vpack.c.b16 %v2520, %v2516
        %v4041 = vpack.c.b16 %v2521, %v2517
        %v4042 = vpack.c.b16 %v2526, %v2522
        %v4043 = vpack.c.b16 %v2527, %v2523
        %v4044 = vpack.c.b16 %v2528, %v2524
        %v4045 = vpack.c.b16 %v2529, %v2525
        %v4046 = vpack.c.b16 %v2534, %v2530
        %v4047 = vpack.c.b16 %v2535, %v2531
        %v4048 = vpack.c.b16 %v2536, %v2532
        %v4049 = vpack.c.b16 %v2537, %v2533
        %v4050 = vpack.c.b16 %v2542, %v2538
        %v4051 = vpack.c.b16 %v2543, %v2539
        %v4052 = vpack.c.b16 %v2544, %v2540
        %v4053 = vpack.c.b16 %v2545, %v2541
        %v4054 = vpack.c.b16 %v2550, %v2546
        %v4055 = vpack.c.b16 %v2551, %v2547
        %v4056 = vpack.c.b16 %v2552, %v2548
        %v4057 = vpack.c.b16 %v2553, %v2549
        %v4058 = vpack.c.b16 %v2558, %v2554
        %v4059 = vpack.c.b16 %v2559, %v2555
        %v4060 = vpack.c.b16 %v2560, %v2556
        %v4061 = vpack.c.b16 %v2561, %v2557
        %v4062 = vpack.c.b16 %v2566, %v2562
        %v4063 = vpack.c.b16 %v2567, %v2563
        %v4064 = vpack.c.b16 %v2568, %v2564
        %v4065 = vpack.c.b16 %v2569, %v2565
        %v4066 = vpack.c.b16 %v2574, %v2570
        %v4067 = vpack.c.b16 %v2575, %v2571
        %v4068 = vpack.c.b16 %v2576, %v2572
        %v4069 = vpack.c.b16 %v2577, %v2573
        %v4070 = vpack.c.b16 %v2582, %v2578
        %v4071 = vpack.c.b16 %v2583, %v2579
        %v4072 = vpack.c.b16 %v2584, %v2580
        %v4073 = vpack.c.b16 %v2585, %v2581
        %v4074 = vpack.c.b16 %v2590, %v2586
        %v4075 = vpack.c.b16 %v2591, %v2587
        %v4076 = vpack.c.b16 %v2592, %v2588
        %v4077 = vpack.c.b16 %v2593, %v2589
        %v4078 = vpack.c.b16 %v2598, %v2594
        %v4079 = vpack.c.b16 %v2599, %v2595
        %v4080 = vpack.c.b16 %v2600, %v2596
        %v4081 = vpack.c.b16 %v2601, %v2597
        %v4082 = vpack.c.b16 %v2606, %v2602
        %v4083 = vpack.c.b16 %v2607, %v2603
        %v4084 = vpack.c.b16 %v2608, %v2604
        %v4085 = vpack.c.b16 %v2609, %v2605
        %v4086 = vpack.c.b16 %v2614, %v2610
        %v4087 = vpack.c.b16 %v2615, %v2611
        %v4088 = vpack.c.b16 %v2616, %v2612
        %v4089 = vpack.c.b16 %v2617, %v2613
        %v4090 = vpack.c.b16 %v2622, %v2618
        %v4091 = vpack.c.b16 %v2623, %v2619
        %v4092 = vpack.c.b16 %v2624, %v2620
        %v4093 = vpack.c.b16 %v2625, %v2621
        %v4094 = vpack.c.b16 %v2630, %v2626
        %v4095 = vpack.c.b16 %v2631, %v2627
        %v4096 = vpack.c.b16 %v2632, %v2628
        %v4097 = vpack.c.b16 %v2633, %v2629
        %v4098 = vpack.c.b16 %v2638, %v2634
        %v4099 = vpack.c.b16 %v2639, %v2635
        %v4100 = vpack.c.b16 %v2640, %v2636
        %v4101 = vpack.c.b16 %v2641, %v2637
        %v4102 = vpack.c.b16 %v2646, %v2642
        %v4103 = vpack.c.b16 %v2647, %v2643
        %v4104 = vpack.c.b16 %v2648, %v2644
        %v4105 = vpack.c.b16 %v2649, %v2645
        %v4106 = vpack.c.b16 %v2654, %v2650
        %v4107 = vpack.c.b16 %v2655, %v2651
        %v4108 = vpack.c.b16 %v2656, %v2652
        %v4109 = vpack.c.b16 %v2657, %v2653
        %v4110 = vpack.c.b16 %v2662, %v2658
        %v4111 = vpack.c.b16 %v2663, %v2659
        %v4112 = vpack.c.b16 %v2664, %v2660
        %v4113 = vpack.c.b16 %v2665, %v2661
        %v4114 = vpack.c.b16 %v2670, %v2666
        %v4115 = vpack.c.b16 %v2671, %v2667
        %v4116 = vpack.c.b16 %v2672, %v2668
        %v4117 = vpack.c.b16 %v2673, %v2669
        %v4118 = vpack.c.b16 %v2678, %v2674
        %v4119 = vpack.c.b16 %v2679, %v2675
        %v4120 = vpack.c.b16 %v2680, %v2676
        %v4121 = vpack.c.b16 %v2681, %v2677
        %v4122 = vpack.c.b16 %v2686, %v2682
        %v4123 = vpack.c.b16 %v2687, %v2683
        %v4124 = vpack.c.b16 %v2688, %v2684
        %v4125 = vpack.c.b16 %v2689, %v2685
        %v4126 = vpack.c.b16 %v2694, %v2690
        %v4127 = vpack.c.b16 %v2695, %v2691
        %v4128 = vpack.c.b16 %v2696, %v2692
        %v4129 = vpack.c.b16 %v2697, %v2693
        %v4130 = vpack.c.b16 %v2702, %v2698
        %v4131 = vpack.c.b16 %v2703, %v2699
        %v4132 = vpack.c.b16 %v2704, %v2700
        %v4133 = vpack.c.b16 %v2705, %v2701
        %v4134 = vpack.c.b16 %v2710, %v2706
        %v4135 = vpack.c.b16 %v2711, %v2707
        %v4136 = vpack.c.b16 %v2712, %v2708
        %v4137 = vpack.c.b16 %v2713, %v2709
        %v4138 = vpack.c.b16 %v2718, %v2714
        %v4139 = vpack.c.b16 %v2719, %v2715
        %v4140 = vpack.c.b16 %v2720, %v2716
        %v4141 = vpack.c.b16 %v2721, %v2717
        %v4142 = vpack.c.b16 %v2726, %v2722
        %v4143 = vpack.c.b16 %v2727, %v2723
        %v4144 = vpack.c.b16 %v2728, %v2724
        %v4145 = vpack.c.b16 %v2729, %v2725
        %v4146 = vpack.c.b16 %v2734, %v2730
        %v4147 = vpack.c.b16 %v2735, %v2731
        %v4148 = vpack.c.b16 %v2736, %v2732
        %v4149 = vpack.c.b16 %v2737, %v2733
        %v4150 = vpack.c.b16 %v2742, %v2738
        %v4151 = vpack.c.b16 %v2743, %v2739
        %v4152 = vpack.c.b16 %v2744, %v2740
        %v4153 = vpack.c.b16 %v2745, %v2741
        %v4154 = vpack.c.b16 %v2750, %v2746
        %v4155 = vpack.c.b16 %v2751, %v2747
        %v4156 = vpack.c.b16 %v2752, %v2748
        %v4157 = vpack.c.b16 %v2753, %v2749
        %v4158 = vpack.c.b16 %v2758, %v2754
        %v4159 = vpack.c.b16 %v2759, %v2755
        %v4160 = vpack.c.b16 %v2760, %v2756
        %v4161 = vpack.c.b16 %v2761, %v2757
        %v4162 = vpack.c.b16 %v2766, %v2762
        %v4163 = vpack.c.b16 %v2767, %v2763
        %v4164 = vpack.c.b16 %v2768, %v2764
        %v4165 = vpack.c.b16 %v2769, %v2765
        %v4166 = vpack.c.b16 %v2774, %v2770
        %v4167 = vpack.c.b16 %v2775, %v2771
        %v4168 = vpack.c.b16 %v2776, %v2772
        %v4169 = vpack.c.b16 %v2777, %v2773
        %v4170 = vpack.c.b16 %v2782, %v2778
        %v4171 = vpack.c.b16 %v2783, %v2779
        %v4172 = vpack.c.b16 %v2784, %v2780
        %v4173 = vpack.c.b16 %v2785, %v2781
        %v4174 = vpack.c.b16 %v2790, %v2786
        %v4175 = vpack.c.b16 %v2791, %v2787
        %v4176 = vpack.c.b16 %v2792, %v2788
        %v4177 = vpack.c.b16 %v2793, %v2789
        %v4178 = vpack.c.b16 %v2798, %v2794
        %v4179 = vpack.c.b16 %v2799, %v2795
        %v4180 = vpack.c.b16 %v2800, %v2796
        %v4181 = vpack.c.b16 %v2801, %v2797
        %v4182 = vpack.c.b16 %v2806, %v2802
        %v4183 = vpack.c.b16 %v2807, %v2803
        %v4184 = vpack.c.b16 %v2808, %v2804
        %v4185 = vpack.c.b16 %v2809, %v2805
        %v4186 = vpack.c.b16 %v2814, %v2810
        %v4187 = vpack.c.b16 %v2815, %v2811
        %v4188 = vpack.c.b16 %v2816, %v2812
        %v4189 = vpack.c.b16 %v2817, %v2813
        %v4190 = vpack.c.b16 %v2822, %v2818
        %v4191 = vpack.c.b16 %v2823, %v2819
        %v4192 = vpack.c.b16 %v2824, %v2820
        %v4193 = vpack.c.b16 %v2825, %v2821
        %v4194 = vpack.c.b16 %v2830, %v2826
        %v4195 = vpack.c.b16 %v2831, %v2827
        %v4196 = vpack.c.b16 %v2832, %v2828
        %v4197 = vpack.c.b16 %v2833, %v2829
        %v4198 = vpack.c.b16 %v2838, %v2834
        %v4199 = vpack.c.b16 %v2839, %v2835
        %v4200 = vpack.c.b16 %v2840, %v2836
        %v4201 = vpack.c.b16 %v2841, %v2837
        %v4202 = vpack.c.b16 %v2846, %v2842
        %v4203 = vpack.c.b16 %v2847, %v2843
        %v4204 = vpack.c.b16 %v2848, %v2844
        %v4205 = vpack.c.b16 %v2849, %v2845
        %v4206 = vpack.c.b16 %v2854, %v2850
        %v4207 = vpack.c.b16 %v2855, %v2851
        %v4208 = vpack.c.b16 %v2856, %v2852
        %v4209 = vpack.c.b16 %v2857, %v2853
        %v4210 = vpack.c.b16 %v2862, %v2858
        %v4211 = vpack.c.b16 %v2863, %v2859
        %v4212 = vpack.c.b16 %v2864, %v2860
        %v4213 = vpack.c.b16 %v2865, %v2861
        %v4214 = vpack.c.b16 %v2870, %v2866
        %v4215 = vpack.c.b16 %v2871, %v2867
        %v4216 = vpack.c.b16 %v2872, %v2868
        %v4217 = vpack.c.b16 %v2873, %v2869
        %v4218 = vpack.c.b16 %v2878, %v2874
        %v4219 = vpack.c.b16 %v2879, %v2875
        %v4220 = vpack.c.b16 %v2880, %v2876
        %v4221 = vpack.c.b16 %v2881, %v2877
        %v4222 = vpack.c.b16 %v2886, %v2882
        %v4223 = vpack.c.b16 %v2887, %v2883
        %v4224 = vpack.c.b16 %v2888, %v2884
        %v4225 = vpack.c.b16 %v2889, %v2885
        %v4226 = vpack.c.b16 %v2894, %v2890
        %v4227 = vpack.c.b16 %v2895, %v2891
        %v4228 = vpack.c.b16 %v2896, %v2892
        %v4229 = vpack.c.b16 %v2897, %v2893
        %v4230 = vpack.c.b16 %v2902, %v2898
        %v4231 = vpack.c.b16 %v2903, %v2899
        %v4232 = vpack.c.b16 %v2904, %v2900
        %v4233 = vpack.c.b16 %v2905, %v2901
        %v4234 = vpack.c.b16 %v2910, %v2906
        %v4235 = vpack.c.b16 %v2911, %v2907
        %v4236 = vpack.c.b16 %v2912, %v2908
        %v4237 = vpack.c.b16 %v2913, %v2909
        %v4238 = vpack.c.b16 %v2918, %v2914
        %v4239 = vpack.c.b16 %v2919, %v2915
        %v4240 = vpack.c.b16 %v2920, %v2916
        %v4241 = vpack.c.b16 %v2921, %v2917
        %v4242 = vpack.c.b16 %v2926, %v2922
        %v4243 = vpack.c.b16 %v2927, %v2923
        %v4244 = vpack.c.b16 %v2928, %v2924
        %v4245 = vpack.c.b16 %v2929, %v2925
        %v4246 = vpack.c.b16 %v2934, %v2930
        %v4247 = vpack.c.b16 %v2935, %v2931
        %v4248 = vpack.c.b16 %v2936, %v2932
        %v4249 = vpack.c.b16 %v2937, %v2933
        %v4250 = vpack.c.b16 %v2942, %v2938
        %v4251 = vpack.c.b16 %v2943, %v2939
        %v4252 = vpack.c.b16 %v2944, %v2940
        %v4253 = vpack.c.b16 %v2945, %v2941
        %v4254 = vpack.c.b16 %v2950, %v2946
        %v4255 = vpack.c.b16 %v2951, %v2947
        %v4256 = vpack.c.b16 %v2952, %v2948
        %v4257 = vpack.c.b16 %v2953, %v2949
        %v4258 = vpack.c.b16 %v2958, %v2954
        %v4259 = vpack.c.b16 %v2959, %v2955
        %v4260 = vpack.c.b16 %v2960, %v2956
        %v4261 = vpack.c.b16 %v2961, %v2957
        %v4262 = vpack.c.b16 %v2966, %v2962
        %v4263 = vpack.c.b16 %v2967, %v2963
        %v4264 = vpack.c.b16 %v2968, %v2964
        %v4265 = vpack.c.b16 %v2969, %v2965
        %v4266 = vpack.c.b16 %v2974, %v2970
        %v4267 = vpack.c.b16 %v2975, %v2971
        %v4268 = vpack.c.b16 %v2976, %v2972
        %v4269 = vpack.c.b16 %v2977, %v2973
        %v4270 = vpack.c.b16 %v2982, %v2978
        %v4271 = vpack.c.b16 %v2983, %v2979
        %v4272 = vpack.c.b16 %v2984, %v2980
        %v4273 = vpack.c.b16 %v2985, %v2981
        %v4274 = vpack.c.b16 %v2990, %v2986
        %v4275 = vpack.c.b16 %v2991, %v2987
        %v4276 = vpack.c.b16 %v2992, %v2988
        %v4277 = vpack.c.b16 %v2993, %v2989
        %v4278 = vpack.c.b16 %v2998, %v2994
        %v4279 = vpack.c.b16 %v2999, %v2995
        %v4280 = vpack.c.b16 %v3000, %v2996
        %v4281 = vpack.c.b16 %v3001, %v2997
        %v4282 = vpack.c.b16 %v3006, %v3002
        %v4283 = vpack.c.b16 %v3007, %v3003
        %v4284 = vpack.c.b16 %v3008, %v3004
        %v4285 = vpack.c.b16 %v3009, %v3005
        %v4286 = vpack.c.b16 %v3014, %v3010
        %v4287 = vpack.c.b16 %v3015, %v3011
        %v4288 = vpack.c.b16 %v3016, %v3012
        %v4289 = vpack.c.b16 %v3017, %v3013
        %v4290 = vpack.c.b16 %v3022, %v3018
        %v4291 = vpack.c.b16 %v3023, %v3019
        %v4292 = vpack.c.b16 %v3024, %v3020
        %v4293 = vpack.c.b16 %v3025, %v3021
        %v4294 = vpack.c.b16 %v3030, %v3026
        %v4295 = vpack.c.b16 %v3031, %v3027
        %v4296 = vpack.c.b16 %v3032, %v3028
        %v4297 = vpack.c.b16 %v3033, %v3029
        %v4298 = vpack.c.b16 %v3038, %v3034
        %v4299 = vpack.c.b16 %v3039, %v3035
        %v4300 = vpack.c.b16 %v3040, %v3036
        %v4301 = vpack.c.b16 %v3041, %v3037
        %v4302 = vpack.c.b16 %v3046, %v3042
        %v4303 = vpack.c.b16 %v3047, %v3043
        %v4304 = vpack.c.b16 %v3048, %v3044
        %v4305 = vpack.c.b16 %v3049, %v3045
        %v4306 = vpack.c.b16 %v3054, %v3050
        %v4307 = vpack.c.b16 %v3055, %v3051
        %v4308 = vpack.c.b16 %v3056, %v3052
        %v4309 = vpack.c.b16 %v3057, %v3053
        %v4310 = vpack.c.b16 %v3062, %v3058
        %v4311 = vpack.c.b16 %v3063, %v3059
        %v4312 = vpack.c.b16 %v3064, %v3060
        %v4313 = vpack.c.b16 %v3065, %v3061
        %v4314 = vpack.c.b16 %v3070, %v3066
        %v4315 = vpack.c.b16 %v3071, %v3067
        %v4316 = vpack.c.b16 %v3072, %v3068
        %v4317 = vpack.c.b16 %v3073, %v3069
        %v4318 = vpack.c.b16 %v3078, %v3074
        %v4319 = vpack.c.b16 %v3079, %v3075
        %v4320 = vpack.c.b16 %v3080, %v3076
        %v4321 = vpack.c.b16 %v3081, %v3077
        %v4322 = vpack.c.b16 %v3086, %v3082
        %v4323 = vpack.c.b16 %v3087, %v3083
        %v4324 = vpack.c.b16 %v3088, %v3084
        %v4325 = vpack.c.b16 %v3089, %v3085
        %v4326 = vpack.c.b16 %v3094, %v3090
        %v4327 = vpack.c.b16 %v3095, %v3091
        %v4328 = vpack.c.b16 %v3096, %v3092
        %v4329 = vpack.c.b16 %v3097, %v3093
        %v4330 = vpack.c.b16 %v3102, %v3098
        %v4331 = vpack.c.b16 %v3103, %v3099
        %v4332 = vpack.c.b16 %v3104, %v3100
        %v4333 = vpack.c.b16 %v3105, %v3101
        %v4334 = vpack.c.b16 %v3110, %v3106
        %v4335 = vpack.c.b16 %v3111, %v3107
        %v4336 = vpack.c.b16 %v3112, %v3108
        %v4337 = vpack.c.b16 %v3113, %v3109
        %v4338 = vpack.c.b16 %v3118, %v3114
        %v4339 = vpack.c.b16 %v3119, %v3115
        %v4340 = vpack.c.b16 %v3120, %v3116
        %v4341 = vpack.c.b16 %v3121, %v3117
        %v4342 = vpack.c.b16 %v3126, %v3122
        %v4343 = vpack.c.b16 %v3127, %v3123
        %v4344 = vpack.c.b16 %v3128, %v3124
        %v4345 = vpack.c.b16 %v3129, %v3125
        %v4346 = vpack.c.b16 %v3134, %v3130
        %v4347 = vpack.c.b16 %v3135, %v3131
        %v4348 = vpack.c.b16 %v3136, %v3132
        %v4349 = vpack.c.b16 %v3137, %v3133
        %v4350 = vpack.c.b16 %v3142, %v3138
        %v4351 = vpack.c.b16 %v3143, %v3139
        %v4352 = vpack.c.b16 %v3144, %v3140
        %v4353 = vpack.c.b16 %v3145, %v3141
        %v4354 = vpack.c.b16 %v3150, %v3146
        %v4355 = vpack.c.b16 %v3151, %v3147
        %v4356 = vpack.c.b16 %v3152, %v3148
        %v4357 = vpack.c.b16 %v3153, %v3149
        %v4358 = vpack.c.b16 %v3158, %v3154
        %v4359 = vpack.c.b16 %v3159, %v3155
        %v4360 = vpack.c.b16 %v3160, %v3156
        %v4361 = vpack.c.b16 %v3161, %v3157
        %v4362 = vpack.c.b16 %v3166, %v3162
        %v4363 = vpack.c.b16 %v3167, %v3163
        %v4364 = vpack.c.b16 %v3168, %v3164
        %v4365 = vpack.c.b16 %v3169, %v3165
        %v4366 = vpack.c.b16 %v3174, %v3170
        %v4367 = vpack.c.b16 %v3175, %v3171
        %v4368 = vpack.c.b16 %v3176, %v3172
        %v4369 = vpack.c.b16 %v3177, %v3173
        %v4370 = vpack.c.b16 %v3182, %v3178
        %v4371 = vpack.c.b16 %v3183, %v3179
        %v4372 = vpack.c.b16 %v3184, %v3180
        %v4373 = vpack.c.b16 %v3185, %v3181
        %v4374 = vpack.c.b16 %v3190, %v3186
        %v4375 = vpack.c.b16 %v3191, %v3187
        %v4376 = vpack.c.b16 %v3192, %v3188
        %v4377 = vpack.c.b16 %v3193, %v3189
        %v4378 = vpack.c.b16 %v3198, %v3194
        %v4379 = vpack.c.b16 %v3199, %v3195
        %v4380 = vpack.c.b16 %v3200, %v3196
        %v4381 = vpack.c.b16 %v3201, %v3197
        %v4382 = vpack.c.b16 %v3206, %v3202
        %v4383 = vpack.c.b16 %v3207, %v3203
        %v4384 = vpack.c.b16 %v3208, %v3204
        %v4385 = vpack.c.b16 %v3209, %v3205
        %v4386 = vpack.c.b16 %v3214, %v3210
        %v4387 = vpack.c.b16 %v3215, %v3211
        %v4388 = vpack.c.b16 %v3216, %v3212
        %v4389 = vpack.c.b16 %v3217, %v3213
        %v4390 = vpack.c.b16 %v3222, %v3218
        %v4391 = vpack.c.b16 %v3223, %v3219
        %v4392 = vpack.c.b16 %v3224, %v3220
        %v4393 = vpack.c.b16 %v3225, %v3221
        %v4394 = vpack.c.b16 %v3230, %v3226
        %v4395 = vpack.c.b16 %v3231, %v3227
        %v4396 = vpack.c.b16 %v3232, %v3228
        %v4397 = vpack.c.b16 %v3233, %v3229
        %v4398 = vpack.c.b16 %v3238, %v3234
        %v4399 = vpack.c.b16 %v3239, %v3235
        %v4400 = vpack.c.b16 %v3240, %v3236
        %v4401 = vpack.c.b16 %v3241, %v3237
        %v4402 = vpack.c.b16 %v3246, %v3242
        %v4403 = vpack.c.b16 %v3247, %v3243
        %v4404 = vpack.c.b16 %v3248, %v3244
        %v4405 = vpack.c.b16 %v3249, %v3245
        %v4406 = vpack.c.b16 %v3254, %v3250
        %v4407 = vpack.c.b16 %v3255, %v3251
        %v4408 = vpack.c.b16 %v3256, %v3252
        %v4409 = vpack.c.b16 %v3257, %v3253
        %v4410 = vpack.c.b16 %v3262, %v3258
        %v4411 = vpack.c.b16 %v3263, %v3259
        %v4412 = vpack.c.b16 %v3264, %v3260
        %v4413 = vpack.c.b16 %v3265, %v3261
        %v4414 = vpack.c.b16 %v3270, %v3266
        %v4415 = vpack.c.b16 %v3271, %v3267
        %v4416 = vpack.c.b16 %v3272, %v3268
        %v4417 = vpack.c.b16 %v3273, %v3269
        %v4418 = vpack.c.b16 %v3278, %v3274
        %v4419 = vpack.c.b16 %v3279, %v3275
        %v4420 = vpack.c.b16 %v3280, %v3276
        %v4421 = vpack.c.b16 %v3281, %v3277
        %v4422 = vpack.c.b16 %v3286, %v3282
        %v4423 = vpack.c.b16 %v3287, %v3283
        %v4424 = vpack.c.b16 %v3288, %v3284
        %v4425 = vpack.c.b16 %v3289, %v3285
        %v4426 = vpack.c.b16 %v3294, %v3290
        %v4427 = vpack.c.b16 %v3295, %v3291
        %v4428 = vpack.c.b16 %v3296, %v3292
        %v4429 = vpack.c.b16 %v3297, %v3293
        %v4430 = vpack.c.b16 %v3302, %v3298
        %v4431 = vpack.c.b16 %v3303, %v3299
        %v4432 = vpack.c.b16 %v3304, %v3300
        %v4433 = vpack.c.b16 %v3305, %v3301
        %v4434 = vpack.c.b16 %v3310, %v3306
        %v4435 = vpack.c.b16 %v3311, %v3307
        %v4436 = vpack.c.b16 %v3312, %v3308
        %v4437 = vpack.c.b16 %v3313, %v3309
        %v4438 = vpack.c.b16 %v3318, %v3314
        %v4439 = vpack.c.b16 %v3319, %v3315
        %v4440 = vpack.c.b16 %v3320, %v3316
        %v4441 = vpack.c.b16 %v3321, %v3317
        %v4442 = vpack.c.b16 %v3326, %v3322
        %v4443 = vpack.c.b16 %v3327, %v3323
        %v4444 = vpack.c.b16 %v3328, %v3324
        %v4445 = vpack.c.b16 %v3329, %v3325
        %v4446 = vpack.c.b16 %v3334, %v3330
        %v4447 = vpack.c.b16 %v3335, %v3331
        %v4448 = vpack.c.b16 %v3336, %v3332
        %v4449 = vpack.c.b16 %v3337, %v3333
        %v4450 = vpack.c.b16 %v3342, %v3338
        %v4451 = vpack.c.b16 %v3343, %v3339
        %v4452 = vpack.c.b16 %v3344, %v3340
        %v4453 = vpack.c.b16 %v3345, %v3341
        %v4454 = vpack.c.b16 %v3350, %v3346
        %v4455 = vpack.c.b16 %v3351, %v3347
        %v4456 = vpack.c.b16 %v3352, %v3348
        %v4457 = vpack.c.b16 %v3353, %v3349
        %v4458 = vpack.c.b16 %v3358, %v3354
        %v4459 = vpack.c.b16 %v3359, %v3355
        %v4460 = vpack.c.b16 %v3360, %v3356
        %v4461 = vpack.c.b16 %v3361, %v3357
        %v4462 = vpack.c.b16 %v3366, %v3362
        %v4463 = vpack.c.b16 %v3367, %v3363
        %v4464 = vpack.c.b16 %v3368, %v3364
        %v4465 = vpack.c.b16 %v3369, %v3365
        %v4466 = vpack.c.b16 %v3374, %v3370
        %v4467 = vpack.c.b16 %v3375, %v3371
        %v4468 = vpack.c.b16 %v3376, %v3372
        %v4469 = vpack.c.b16 %v3377, %v3373
        %v4470 = vpack.c.b16 %v3382, %v3378
        %v4471 = vpack.c.b16 %v3383, %v3379
        %v4472 = vpack.c.b16 %v3384, %v3380
        %v4473 = vpack.c.b16 %v3385, %v3381
        %v4474 = vpack.c.b16 %v3390, %v3386
        %v4475 = vpack.c.b16 %v3391, %v3387
        %v4476 = vpack.c.b16 %v3392, %v3388
        %v4477 = vpack.c.b16 %v3393, %v3389
        %v4478 = vpack.c.b16 %v3398, %v3394
        %v4479 = vpack.c.b16 %v3399, %v3395
        %v4480 = vpack.c.b16 %v3400, %v3396
        %v4481 = vpack.c.b16 %v3401, %v3397
        %v4482 = vpack.c.b16 %v3406, %v3402
        %v4483 = vpack.c.b16 %v3407, %v3403
        %v4484 = vpack.c.b16 %v3408, %v3404
        %v4485 = vpack.c.b16 %v3409, %v3405
        %v4486 = vpack.c.b16 %v3414, %v3410
        %v4487 = vpack.c.b16 %v3415, %v3411
        %v4488 = vpack.c.b16 %v3416, %v3412
        %v4489 = vpack.c.b16 %v3417, %v3413
        %v4490 = vpack.c.b16 %v3422, %v3418
        %v4491 = vpack.c.b16 %v3423, %v3419
        %v4492 = vpack.c.b16 %v3424, %v3420
        %v4493 = vpack.c.b16 %v3425, %v3421
        %v4494 = vpack.c.b16 %v3430, %v3426
        %v4495 = vpack.c.b16 %v3431, %v3427
        %v4496 = vpack.c.b16 %v3432, %v3428
        %v4497 = vpack.c.b16 %v3433, %v3429
        %v4498 = vpack.c.b16 %v3438, %v3434
        %v4499 = vpack.c.b16 %v3439, %v3435
        %v4500 = vpack.c.b16 %v3440, %v3436
        %v4501 = vpack.c.b16 %v3441, %v3437
        %v4502 = vpack.c.b16 %v3446, %v3442
        %v4503 = vpack.c.b16 %v3447, %v3443
        %v4504 = vpack.c.b16 %v3448, %v3444
        %v4505 = vpack.c.b16 %v3449, %v3445
        %v4506 = vpack.c.b16 %v3454, %v3450
        %v4507 = vpack.c.b16 %v3455, %v3451
        %v4508 = vpack.c.b16 %v3456, %v3452
        %v4509 = vpack.c.b16 %v3457, %v3453
        %v4510 = vpack.c.b16 %v3462, %v3458
        %v4511 = vpack.c.b16 %v3463, %v3459
        %v4512 = vpack.c.b16 %v3464, %v3460
        %v4513 = vpack.c.b16 %v3465, %v3461
        %v4514 = vpack.c.b16 %v3470, %v3466
        %v4515 = vpack.c.b16 %v3471, %v3467
        %v4516 = vpack.c.b16 %v3472, %v3468
        %v4517 = vpack.c.b16 %v3473, %v3469
        %v4518 = vpack.c.b16 %v3478, %v3474
        %v4519 = vpack.c.b16 %v3479, %v3475
        %v4520 = vpack.c.b16 %v3480, %v3476
        %v4521 = vpack.c.b16 %v3481, %v3477
        %v4522 = vpack.c.b16 %v3486, %v3482
        %v4523 = vpack.c.b16 %v3487, %v3483
        %v4524 = vpack.c.b16 %v3488, %v3484
        %v4525 = vpack.c.b16 %v3489, %v3485
        %v4526 = vpack.c.b16 %v3494, %v3490
        %v4527 = vpack.c.b16 %v3495, %v3491
        %v4528 = vpack.c.b16 %v3496, %v3492
        %v4529 = vpack.c.b16 %v3497, %v3493
        %v4530 = vpack.c.b16 %v3502, %v3498
        %v4531 = vpack.c.b16 %v3503, %v3499
        %v4532 = vpack.c.b16 %v3504, %v3500
        %v4533 = vpack.c.b16 %v3505, %v3501
        %v4534 = vpack.c.b16 %v3510, %v3506
        %v4535 = vpack.c.b16 %v3511, %v3507
        %v4536 = vpack.c.b16 %v3512, %v3508
        %v4537 = vpack.c.b16 %v3513, %v3509
        %v4538 = vpack.c.b16 %v3518, %v3514
        %v4539 = vpack.c.b16 %v3519, %v3515
        %v4540 = vpack.c.b16 %v3520, %v3516
        %v4541 = vpack.c.b16 %v3521, %v3517
        %v4542 = vpack.c.b16 %v3526, %v3522
        %v4543 = vpack.c.b16 %v3527, %v3523
        %v4544 = vpack.c.b16 %v3528, %v3524
        %v4545 = vpack.c.b16 %v3529, %v3525
        %v4546 = vpack.c.b16 %v3534, %v3530
        %v4547 = vpack.c.b16 %v3535, %v3531
        %v4548 = vpack.c.b16 %v3536, %v3532
        %v4549 = vpack.c.b16 %v3537, %v3533
        %v4550 = vpack.c.b16 %v3542, %v3538
        %v4551 = vpack.c.b16 %v3543, %v3539
        %v4552 = vpack.c.b16 %v3544, %v3540
        %v4553 = vpack.c.b16 %v3545, %v3541
        %v4554 = vpack.c.b16 %v3550, %v3546
        %v4555 = vpack.c.b16 %v3551, %v3547
        %v4556 = vpack.c.b16 %v3552, %v3548
        %v4557 = vpack.c.b16 %v3553, %v3549
        %v4558 = vpack.c.b16 %v3558, %v3554
        %v4559 = vpack.c.b16 %v3559, %v3555
        %v4560 = vpack.c.b16 %v3560, %v3556
        %v4561 = vpack.c.b16 %v3561, %v3557
        %v4562 = vpack.c.b16 %v3566, %v3562
        %v4563 = vpack.c.b16 %v3567, %v3563
        %v4564 = vpack.c.b16 %v3568, %v3564
        %v4565 = vpack.c.b16 %v3569, %v3565
        %v4566 = vpack.c.b16 %v3574, %v3570
        %v4567 = vpack.c.b16 %v3575, %v3571
        %v4568 = vpack.c.b16 %v3576, %v3572
        %v4569 = vpack.c.b16 %v3577, %v3573
        %v4570 = vpack.c.b16 %v3582, %v3578
        %v4571 = vpack.c.b16 %v3583, %v3579
        %v4572 = vpack.c.b16 %v3584, %v3580
        %v4573 = vpack.c.b16 %v3585, %v3581
        %v4574 = vpack.c.b16 %v3590, %v3586
        %v4575 = vpack.c.b16 %v3591, %v3587
        %v4576 = vpack.c.b16 %v3592, %v3588
        %v4577 = vpack.c.b16 %v3593, %v3589
        %v4578 = vpack.c.b16 %v3598, %v3594
        %v4579 = vpack.c.b16 %v3599, %v3595
        %v4580 = vpack.c.b16 %v3600, %v3596
        %v4581 = vpack.c.b16 %v3601, %v3597
        %v4582 = vpack.c.b16 %v3606, %v3602
        %v4583 = vpack.c.b16 %v3607, %v3603
        %v4584 = vpack.c.b16 %v3608, %v3604
        %v4585 = vpack.c.b16 %v3609, %v3605
        %v4586 = vpack.c.b16 %v3614, %v3610
        %v4587 = vpack.c.b16 %v3615, %v3611
        %v4588 = vpack.c.b16 %v3616, %v3612
        %v4589 = vpack.c.b16 %v3617, %v3613
        %v4590 = vpack.c.b16 %v3622, %v3618
        %v4591 = vpack.c.b16 %v3623, %v3619
        %v4592 = vpack.c.b16 %v3624, %v3620
        %v4593 = vpack.c.b16 %v3625, %v3621
        %v4594 = vpack.c.b16 %v3630, %v3626
        %v4595 = vpack.c.b16 %v3631, %v3627
        %v4596 = vpack.c.b16 %v3632, %v3628
        %v4597 = vpack.c.b16 %v3633, %v3629
        %v4598 = vpack.c.b16 %v3638, %v3634
        %v4599 = vpack.c.b16 %v3639, %v3635
        %v4600 = vpack.c.b16 %v3640, %v3636
        %v4601 = vpack.c.b16 %v3641, %v3637
        %v4602 = vpack.c.b16 %v3646, %v3642
        %v4603 = vpack.c.b16 %v3647, %v3643
        %v4604 = vpack.c.b16 %v3648, %v3644
        %v4605 = vpack.c.b16 %v3649, %v3645
        %v4606 = vpack.c.b16 %v3654, %v3650
        %v4607 = vpack.c.b16 %v3655, %v3651
        %v4608 = vpack.c.b16 %v3656, %v3652
        %v4609 = vpack.c.b16 %v3657, %v3653
        %v4610 = vpack.c.b16 %v3662, %v3658
        %v4611 = vpack.c.b16 %v3663, %v3659
        %v4612 = vpack.c.b16 %v3664, %v3660
        %v4613 = vpack.c.b16 %v3665, %v3661
        %v4614 = vpack.c.b16 %v3670, %v3666
        %v4615 = vpack.c.b16 %v3671, %v3667
        %v4616 = vpack.c.b16 %v3672, %v3668
        %v4617 = vpack.c.b16 %v3673, %v3669
        %v4618 = vpack.c.b16 %v3678, %v3674
        %v4619 = vpack.c.b16 %v3679, %v3675
        %v4620 = vpack.c.b16 %v3680, %v3676
        %v4621 = vpack.c.b16 %v3681, %v3677
        %v4622 = vpack.c.b16 %v3686, %v3682
        %v4623 = vpack.c.b16 %v3687, %v3683
        %v4624 = vpack.c.b16 %v3688, %v3684
        %v4625 = vpack.c.b16 %v3689, %v3685
        %v4626 = vpack.c.b16 %v3694, %v3690
        %v4627 = vpack.c.b16 %v3695, %v3691
        %v4628 = vpack.c.b16 %v3696, %v3692
        %v4629 = vpack.c.b16 %v3697, %v3693
        %v4630 = vpack.c.b16 %v3702, %v3698
        %v4631 = vpack.c.b16 %v3703, %v3699
        %v4632 = vpack.c.b16 %v3704, %v3700
        %v4633 = vpack.c.b16 %v3705, %v3701
        %v4634 = vpack.c.b16 %v3710, %v3706
        %v4635 = vpack.c.b16 %v3711, %v3707
        %v4636 = vpack.c.b16 %v3712, %v3708
        %v4637 = vpack.c.b16 %v3713, %v3709
        %v4638 = vpack.c.b16 %v3718, %v3714
        %v4639 = vpack.c.b16 %v3719, %v3715
        %v4640 = vpack.c.b16 %v3720, %v3716
        %v4641 = vpack.c.b16 %v3721, %v3717
        %v4642 = vpack.c.b16 %v3726, %v3722
        %v4643 = vpack.c.b16 %v3727, %v3723
        %v4644 = vpack.c.b16 %v3728, %v3724
        %v4645 = vpack.c.b16 %v3729, %v3725
        %v4646 = vpack.c.b16 %v3734, %v3730
        %v4647 = vpack.c.b16 %v3735, %v3731
        %v4648 = vpack.c.b16 %v3736, %v3732
        %v4649 = vpack.c.b16 %v3737, %v3733
        %v4650 = vpack.c.b16 %v3742, %v3738
        %v4651 = vpack.c.b16 %v3743, %v3739
        %v4652 = vpack.c.b16 %v3744, %v3740
        %v4653 = vpack.c.b16 %v3745, %v3741
        %v4654 = vpack.c.b16 %v3750, %v3746
        %v4655 = vpack.c.b16 %v3751, %v3747
        %v4656 = vpack.c.b16 %v3752, %v3748
        %v4657 = vpack.c.b16 %v3753, %v3749
        %v4658 = vpack.c.b16 %v3758, %v3754
        %v4659 = vpack.c.b16 %v3759, %v3755
        %v4660 = vpack.c.b16 %v3760, %v3756
        %v4661 = vpack.c.b16 %v3761, %v3757
        %v4662 = vpack.c.b16 %v3766, %v3762
        %v4663 = vpack.c.b16 %v3767, %v3763
        %v4664 = vpack.c.b16 %v3768, %v3764
        %v4665 = vpack.c.b16 %v3769, %v3765
        %v4666 = vpack.c.b16 %v3774, %v3770
        %v4667 = vpack.c.b16 %v3775, %v3771
        %v4668 = vpack.c.b16 %v3776, %v3772
        %v4669 = vpack.c.b16 %v3777, %v3773
        %v4670 = vpack.c.b16 %v3782, %v3778
        %v4671 = vpack.c.b16 %v3783, %v3779
        %v4672 = vpack.c.b16 %v3784, %v3780
        %v4673 = vpack.c.b16 %v3785, %v3781
        %v4674 = vpack.c.b16 %v3790, %v3786
        %v4675 = vpack.c.b16 %v3791, %v3787
        %v4676 = vpack.c.b16 %v3792, %v3788
        %v4677 = vpack.c.b16 %v3793, %v3789
        %v4678 = vpack.c.b16 %v3798, %v3794
        %v4679 = vpack.c.b16 %v3799, %v3795
        %v4680 = vpack.c.b16 %v3800, %v3796
        %v4681 = vpack.c.b16 %v3801, %v3797
        %v4682 = vpack.c.b16 %v3806, %v3802
        %v4683 = vpack.c.b16 %v3807, %v3803
        %v4684 = vpack.c.b16 %v3808, %v3804
        %v4685 = vpack.c.b16 %v3809, %v3805
        %v4686 = vpack.c.b16 %v3814, %v3810
        %v4687 = vpack.c.b16 %v3815, %v3811
        %v4688 = vpack.c.b16 %v3816, %v3812
        %v4689 = vpack.c.b16 %v3817, %v3813
        %v4690 = vpack.c.b16 %v3822, %v3818
        %v4691 = vpack.c.b16 %v3823, %v3819
        %v4692 = vpack.c.b16 %v3824, %v3820
        %v4693 = vpack.c.b16 %v3825, %v3821
        %v4694 = vpack.c.b16 %v3830, %v3826
        %v4695 = vpack.c.b16 %v3831, %v3827
        %v4696 = vpack.c.b16 %v3832, %v3828
        %v4697 = vpack.c.b16 %v3833, %v3829
        %v4698 = vpack.c.b16 %v3838, %v3834
        %v4699 = vpack.c.b16 %v3839, %v3835
        %v4700 = vpack.c.b16 %v3840, %v3836
        %v4701 = vpack.c.b16 %v3841, %v3837
        %v4702 = vpack.c.b16 %v3846, %v3842
        %v4703 = vpack.c.b16 %v3847, %v3843
        %v4704 = vpack.c.b16 %v3848, %v3844
        %v4705 = vpack.c.b16 %v3849, %v3845
        %v4706 = vpack.c.b16 %v3854, %v3850
        %v4707 = vpack.c.b16 %v3855, %v3851
        %v4708 = vpack.c.b16 %v3856, %v3852
        %v4709 = vpack.c.b16 %v3857, %v3853
        %v4710 = vpack.c.b16 %v3862, %v3858
        %v4711 = vpack.c.b16 %v3863, %v3859
        %v4712 = vpack.c.b16 %v3864, %v3860
        %v4713 = vpack.c.b16 %v3865, %v3861
        %v4714 = vpack.c.b16 %v3870, %v3866
        %v4715 = vpack.c.b16 %v3871, %v3867
        %v4716 = vpack.c.b16 %v3872, %v3868
        %v4717 = vpack.c.b16 %v3873, %v3869
        %v4718 = vpack.c.b16 %v3878, %v3874
        %v4719 = vpack.c.b16 %v3879, %v3875
        %v4720 = vpack.c.b16 %v3880, %v3876
        %v4721 = vpack.c.b16 %v3881, %v3877
        %v4722 = vpack.c.b16 %v3886, %v3882
        %v4723 = vpack.c.b16 %v3887, %v3883
        %v4724 = vpack.c.b16 %v3888, %v3884
        %v4725 = vpack.c.b16 %v3889, %v3885
        %v4726 = vpack.c.b16 %v3894, %v3890
        %v4727 = vpack.c.b16 %v3895, %v3891
        %v4728 = vpack.c.b16 %v3896, %v3892
        %v4729 = vpack.c.b16 %v3897, %v3893
        %v4730 = vpack.c.b16 %v3902, %v3898
        %v4731 = vpack.c.b16 %v3903, %v3899
        %v4732 = vpack.c.b16 %v3904, %v3900
        %v4733 = vpack.c.b16 %v3905, %v3901
        %v4734 = vpack.c.b16 %v3910, %v3906
        %v4735 = vpack.c.b16 %v3911, %v3907
        %v4736 = vpack.c.b16 %v3912, %v3908
        %v4737 = vpack.c.b16 %v3913, %v3909
        %v4738 = vpack.c.b16 %v3918, %v3914
        %v4739 = vpack.c.b16 %v3919, %v3915
        %v4740 = vpack.c.b16 %v3920, %v3916
        %v4741 = vpack.c.b16 %v3921, %v3917
        %v4742 = vpack.c.b16 %v3926, %v3922
        %v4743 = vpack.c.b16 %v3927, %v3923
        %v4744 = vpack.c.b16 %v3928, %v3924
        %v4745 = vpack.c.b16 %v3929, %v3925
        %v4746 = vpack.c.b16 %v3934, %v3930
        %v4747 = vpack.c.b16 %v3935, %v3931
        %v4748 = vpack.c.b16 %v3936, %v3932
        %v4749 = vpack.c.b16 %v3937, %v3933
        %v4750 = vpack.c.b16 %v3942, %v3938
        %v4751 = vpack.c.b16 %v3943, %v3939
        %v4752 = vpack.c.b16 %v3944, %v3940
        %v4753 = vpack.c.b16 %v3945, %v3941
        %v4754 = vpack.c.b16 %v3950, %v3946
        %v4755 = vpack.c.b16 %v3951, %v3947
        %v4756 = vpack.c.b16 %v3952, %v3948
        %v4757 = vpack.c.b16 %v3953, %v3949
        %v4758 = vpack.c.b16 %v3958, %v3954
        %v4759 = vpack.c.b16 %v3959, %v3955
        %v4760 = vpack.c.b16 %v3960, %v3956
        %v4761 = vpack.c.b16 %v3961, %v3957
        %v4762 = vpack.c.b16 %v3966, %v3962
        %v4763 = vpack.c.b16 %v3967, %v3963
        %v4764 = vpack.c.b16 %v3968, %v3964
        %v4765 = vpack.c.b16 %v3969, %v3965
        %v4766 = vpack.c.b16 %v3974, %v3970
        %v4767 = vpack.c.b16 %v3975, %v3971
        %v4768 = vpack.c.b16 %v3976, %v3972
        %v4769 = vpack.c.b16 %v3977, %v3973
        %v4770 = vpack.c.b16 %v3982, %v3978
        %v4771 = vpack.c.b16 %v3983, %v3979
        %v4772 = vpack.c.b16 %v3984, %v3980
        %v4773 = vpack.c.b16 %v3985, %v3981
        %v4774 = vpack.c.b16 %v3990, %v3986
        %v4775 = vpack.c.b16 %v3991, %v3987
        %v4776 = vpack.c.b16 %v3992, %v3988
        %v4777 = vpack.c.b16 %v3993, %v3989
        %v4778 = vpack.c.b16 %v3998, %v3994
        %v4779 = vpack.c.b16 %v3999, %v3995
        %v4780 = vpack.c.b16 %v4000, %v3996
        %v4781 = vpack.c.b16 %v4001, %v3997
        %v4782 = vpack.c.b16 %v4006, %v4002
        %v4783 = vpack.c.b16 %v4007, %v4003
        %v4784 = vpack.c.b16 %v4008, %v4004
        %v4785 = vpack.c.b16 %v4009, %v4005
        %v4786 = vpack.c.b16 %v4014, %v4010
        %v4787 = vpack.c.b16 %v4015, %v4011
        %v4788 = vpack.c.b16 %v4016, %v4012
        %v4789 = vpack.c.b16 %v4017, %v4013
        %v4790 = vpack.c.b16 %v4022, %v4018
        %v4791 = vpack.c.b16 %v4023, %v4019
        %v4792 = vpack.c.b16 %v4024, %v4020
        %v4793 = vpack.c.b16 %v4025, %v4021
        %5562 = vmatprep.subr.bf16.mxu0 %v4027
        %5563 = vmatpush1.bf16.msra.mxu0 %v4026
        %5564 = vmatprep.subr.bf16.mxu0 %v4031
        %5565 = vmatpush1.bf16.msra.mxu0 %v4030
        %5566 = vmatprep.subr.bf16.mxu0 %v4035
        %5567 = vmatpush1.bf16.msra.mxu0 %v4034
        %5568 = vmatprep.subr.bf16.mxu0 %v4039
        %5569 = vmatpush1.bf16.msra.mxu0 %v4038
        %5570 = vmatprep.subr.bf16.mxu0 %v4043
        %5571 = vmatpush1.bf16.msra.mxu0 %v4042
        %5572 = vmatprep.subr.bf16.mxu0 %v4047
        %5573 = vmatpush1.bf16.msra.mxu0 %v4046
        %5574 = vmatprep.subr.bf16.mxu0 %v4051
        %5575 = vmatpush1.bf16.msra.mxu0 %v4050
        %5576 = vmatprep.subr.bf16.mxu0 %v4055
        %5577 = vmatpush1.bf16.msra.mxu0 %v4054
        %5578 = vmatprep.subr.bf16.mxu0 %v4059
        %5579 = vmatpush1.bf16.msra.mxu0 %v4058
        %5580 = vmatprep.subr.bf16.mxu0 %v4063
        %5581 = vmatpush1.bf16.msra.mxu0 %v4062
        %5582 = vmatprep.subr.bf16.mxu0 %v4067
        %5583 = vmatpush1.bf16.msra.mxu0 %v4066
        %5584 = vmatprep.subr.bf16.mxu0 %v4071
        %5585 = vmatpush1.bf16.msra.mxu0 %v4070
        %5586 = vmatprep.subr.bf16.mxu0 %v4075
        %5587 = vmatpush1.bf16.msra.mxu0 %v4074
        %5588 = vmatprep.subr.bf16.mxu0 %v4079
        %5589 = vmatpush1.bf16.msra.mxu0 %v4078
        %5590 = vmatprep.subr.bf16.mxu0 %v4083
        %5591 = vmatpush1.bf16.msra.mxu0 %v4082
        %5592 = vmatprep.subr.bf16.mxu0 %v4087
        %5593 = vmatpush1.bf16.msra.mxu0 %v4086
        %5594 = vmatprep.mubr.bf16.mxu0 %v930
        %5595 = vmatmul.mubr.bf16.gmra.mrb[0].mxu0 %v929
        %v5596 = vpop.f32.mrb[0].mxu0
        %v5597 = vadd.f32 0.0, %v5596
        %v5598 = vpop.f32.mrb[0].mxu0
        %v5599 = vadd.f32 0.0, %v5598
        %v5600 = vpop.f32.mrb[0].mxu0
        %v5601 = vpop.f32.mrb[0].mxu0
        %5602 = vdwg.mxu0
        %5603 = vmatprep.subr.bf16.mxu0 %v4091
        %5604 = vmatpush1.bf16.msra.mxu0 %v4090
        %5605 = vmatprep.subr.bf16.mxu0 %v4095
        %5606 = vmatpush1.bf16.msra.mxu0 %v4094
        %5607 = vmatprep.subr.bf16.mxu0 %v4099
        %5608 = vmatpush1.bf16.msra.mxu0 %v4098
        %5609 = vmatprep.subr.bf16.mxu0 %v4103
        %5610 = vmatpush1.bf16.msra.mxu0 %v4102
        %5611 = vmatprep.subr.bf16.mxu0 %v4107
        %5612 = vmatpush1.bf16.msra.mxu0 %v4106
        %5613 = vmatprep.subr.bf16.mxu0 %v4111
        %5614 = vmatpush1.bf16.msra.mxu0 %v4110
        %5615 = vmatprep.subr.bf16.mxu0 %v4115
        %5616 = vmatpush1.bf16.msra.mxu0 %v4114
        %5617 = vmatprep.subr.bf16.mxu0 %v4119
        %5618 = vmatpush1.bf16.msra.mxu0 %v4118
        %5619 = vmatprep.subr.bf16.mxu0 %v4123
        %5620 = vmatpush1.bf16.msra.mxu0 %v4122
        %5621 = vmatprep.subr.bf16.mxu0 %v4127
        %5622 = vmatpush1.bf16.msra.mxu0 %v4126
        %5623 = vmatprep.subr.bf16.mxu0 %v4131
        %5624 = vmatpush1.bf16.msra.mxu0 %v4130
        %5625 = vmatprep.subr.bf16.mxu0 %v4135
        %5626 = vmatpush1.bf16.msra.mxu0 %v4134
        %5627 = vmatprep.subr.bf16.mxu0 %v4139
        %5628 = vmatpush1.bf16.msra.mxu0 %v4138
        %5629 = vmatprep.subr.bf16.mxu0 %v4143
        %5630 = vmatpush1.bf16.msra.mxu0 %v4142
        %5631 = vmatprep.subr.bf16.mxu0 %v4147
        %5632 = vmatpush1.bf16.msra.mxu0 %v4146
        %5633 = vmatprep.subr.bf16.mxu0 %v4151
        %5634 = vmatpush1.bf16.msra.mxu0 %v4150
        %5635 = vmatprep.mubr.bf16.mxu0 %v932
        %5636 = vmatmul.mubr.bf16.gmra.mrb[0].mxu0 %v931
        %v5637 = vpop.f32.mrb[0].mxu0
        %v5638 = vadd.f32 %v5597, %v5637
        %v5639 = vpop.f32.mrb[0].mxu0
        %v5640 = vadd.f32 %v5599, %v5639
        %v5641 = vpop.f32.mrb[0].mxu0
        %v5642 = vpop.f32.mrb[0].mxu0
        %5643 = vdwg.mxu0
        %5644 = vmatprep.subr.bf16.mxu0 %v4155
        %5645 = vmatpush1.bf16.msra.mxu0 %v4154
        %5646 = vmatprep.subr.bf16.mxu0 %v4159
        %5647 = vmatpush1.bf16.msra.mxu0 %v4158
        %5648 = vmatprep.subr.bf16.mxu0 %v4163
        %5649 = vmatpush1.bf16.msra.mxu0 %v4162
        %5650 = vmatprep.subr.bf16.mxu0 %v4167
        %5651 = vmatpush1.bf16.msra.mxu0 %v4166
        %5652 = vmatprep.subr.bf16.mxu0 %v4171
        %5653 = vmatpush1.bf16.msra.mxu0 %v4170
        %5654 = vmatprep.subr.bf16.mxu0 %v4175
        %5655 = vmatpush1.bf16.msra.mxu0 %v4174
        %5656 = vmatprep.subr.bf16.mxu0 %v4179
        %5657 = vmatpush1.bf16.msra.mxu0 %v4178
        %5658 = vmatprep.subr.bf16.mxu0 %v4183
        %5659 = vmatpush1.bf16.msra.mxu0 %v4182
        %5660 = vmatprep.subr.bf16.mxu0 %v4187
        %5661 = vmatpush1.bf16.msra.mxu0 %v4186
        %5662 = vmatprep.subr.bf16.mxu0 %v4191
        %5663 = vmatpush1.bf16.msra.mxu0 %v4190
        %5664 = vmatprep.subr.bf16.mxu0 %v4195
        %5665 = vmatpush1.bf16.msra.mxu0 %v4194
        %5666 = vmatprep.subr.bf16.mxu0 %v4199
        %5667 = vmatpush1.bf16.msra.mxu0 %v4198
        %5668 = vmatprep.subr.bf16.mxu0 %v4203
        %5669 = vmatpush1.bf16.msra.mxu0 %v4202
        %5670 = vmatprep.subr.bf16.mxu0 %v4207
        %5671 = vmatpush1.bf16.msra.mxu0 %v4206
        %5672 = vmatprep.subr.bf16.mxu0 %v4211
        %5673 = vmatpush1.bf16.msra.mxu0 %v4210
        %5674 = vmatprep.subr.bf16.mxu0 %v4215
        %5675 = vmatpush1.bf16.msra.mxu0 %v4214
        %5676 = vmatprep.mubr.bf16.mxu0 %v934
        %5677 = vmatmul.mubr.bf16.gmra.mrb[0].mxu0 %v933
        %v5678 = vpop.f32.mrb[0].mxu0
        %v5679 = vadd.f32 %v5638, %v5678
        %v5680 = vpop.f32.mrb[0].mxu0
        %v5681 = vadd.f32 %v5640, %v5680
        %v5682 = vpop.f32.mrb[0].mxu0
        %v5683 = vpop.f32.mrb[0].mxu0
        %5684 = vdwg.mxu0
        %5685 = vmatprep.subr.bf16.mxu0 %v4219
        %5686 = vmatpush1.bf16.msra.mxu0 %v4218
        %5687 = vmatprep.subr.bf16.mxu0 %v4223
        %5688 = vmatpush1.bf16.msra.mxu0 %v4222
        %5689 = vmatprep.subr.bf16.mxu0 %v4227
        %5690 = vmatpush1.bf16.msra.mxu0 %v4226
        %5691 = vmatprep.subr.bf16.mxu0 %v4231
        %5692 = vmatpush1.bf16.msra.mxu0 %v4230
        %5693 = vmatprep.subr.bf16.mxu0 %v4235
        %5694 = vmatpush1.bf16.msra.mxu0 %v4234
        %5695 = vmatprep.subr.bf16.mxu0 %v4239
        %5696 = vmatpush1.bf16.msra.mxu0 %v4238
        %5697 = vmatprep.subr.bf16.mxu0 %v4243
        %5698 = vmatpush1.bf16.msra.mxu0 %v4242
        %5699 = vmatprep.subr.bf16.mxu0 %v4247
        %5700 = vmatpush1.bf16.msra.mxu0 %v4246
        %5701 = vmatprep.subr.bf16.mxu0 %v4251
        %5702 = vmatpush1.bf16.msra.mxu0 %v4250
        %5703 = vmatprep.subr.bf16.mxu0 %v4255
        %5704 = vmatpush1.bf16.msra.mxu0 %v4254
        %5705 = vmatprep.subr.bf16.mxu0 %v4259
        %5706 = vmatpush1.bf16.msra.mxu0 %v4258
        %5707 = vmatprep.subr.bf16.mxu0 %v4263
        %5708 = vmatpush1.bf16.msra.mxu0 %v4262
        %5709 = vmatprep.subr.bf16.mxu0 %v4267
        %5710 = vmatpush1.bf16.msra.mxu0 %v4266
        %5711 = vmatprep.subr.bf16.mxu0 %v4271
        %5712 = vmatpush1.bf16.msra.mxu0 %v4270
        %5713 = vmatprep.subr.bf16.mxu0 %v4275
        %5714 = vmatpush1.bf16.msra.mxu0 %v4274
        %5715 = vmatprep.subr.bf16.mxu0 %v4279
        %5716 = vmatpush1.bf16.msra.mxu0 %v4278
        %5717 = vmatprep.mubr.bf16.mxu0 %v936
        %5718 = vmatmul.mubr.bf16.gmra.mrb[0].mxu0 %v935
        %v5719 = vpop.f32.mrb[0].mxu0
        %v5720 = vadd.f32 %v5679, %v5719
        %v5721 = vpop.f32.mrb[0].mxu0
        %v5722 = vadd.f32 %v5681, %v5721
        %v5723 = vpop.f32.mrb[0].mxu0
        %v5724 = vpop.f32.mrb[0].mxu0
        %5725 = vdwg.mxu0
        %5726 = vmatprep.subr.bf16.mxu0 %v4283
        %5727 = vmatpush1.bf16.msra.mxu0 %v4282
        %5728 = vmatprep.subr.bf16.mxu0 %v4287
        %5729 = vmatpush1.bf16.msra.mxu0 %v4286
        %5730 = vmatprep.subr.bf16.mxu0 %v4291
        %5731 = vmatpush1.bf16.msra.mxu0 %v4290
        %5732 = vmatprep.subr.bf16.mxu0 %v4295
        %5733 = vmatpush1.bf16.msra.mxu0 %v4294
        %5734 = vmatprep.subr.bf16.mxu0 %v4299
        %5735 = vmatpush1.bf16.msra.mxu0 %v4298
        %5736 = vmatprep.subr.bf16.mxu0 %v4303
        %5737 = vmatpush1.bf16.msra.mxu0 %v4302
        %5738 = vmatprep.subr.bf16.mxu0 %v4307
        %5739 = vmatpush1.bf16.msra.mxu0 %v4306
        %5740 = vmatprep.subr.bf16.mxu0 %v4311
        %5741 = vmatpush1.bf16.msra.mxu0 %v4310
        %5742 = vmatprep.subr.bf16.mxu0 %v4315
        %5743 = vmatpush1.bf16.msra.mxu0 %v4314
        %5744 = vmatprep.subr.bf16.mxu0 %v4319
        %5745 = vmatpush1.bf16.msra.mxu0 %v4318
        %5746 = vmatprep.subr.bf16.mxu0 %v4323
        %5747 = vmatpush1.bf16.msra.mxu0 %v4322
        %5748 = vmatprep.subr.bf16.mxu0 %v4327
        %5749 = vmatpush1.bf16.msra.mxu0 %v4326
        %5750 = vmatprep.subr.bf16.mxu0 %v4331
        %5751 = vmatpush1.bf16.msra.mxu0 %v4330
        %5752 = vmatprep.subr.bf16.mxu0 %v4335
        %5753 = vmatpush1.bf16.msra.mxu0 %v4334
        %5754 = vmatprep.subr.bf16.mxu0 %v4339
        %5755 = vmatpush1.bf16.msra.mxu0 %v4338
        %5756 = vmatprep.subr.bf16.mxu0 %v4343
        %5757 = vmatpush1.bf16.msra.mxu0 %v4342
        %5758 = vmatprep.mubr.bf16.mxu0 %v938
        %5759 = vmatmul.mubr.bf16.gmra.mrb[0].mxu0 %v937
        %v5760 = vpop.f32.mrb[0].mxu0
        %v5761 = vadd.f32 %v5720, %v5760
        %v5762 = vpop.f32.mrb[0].mxu0
        %v5763 = vadd.f32 %v5722, %v5762
        %v5764 = vpop.f32.mrb[0].mxu0
        %v5765 = vpop.f32.mrb[0].mxu0
        %5766 = vdwg.mxu0
        %5767 = vmatprep.subr.bf16.mxu0 %v4347
        %5768 = vmatpush1.bf16.msra.mxu0 %v4346
        %5769 = vmatprep.subr.bf16.mxu0 %v4351
        %5770 = vmatpush1.bf16.msra.mxu0 %v4350
        %5771 = vmatprep.subr.bf16.mxu0 %v4355
        %5772 = vmatpush1.bf16.msra.mxu0 %v4354
        %5773 = vmatprep.subr.bf16.mxu0 %v4359
        %5774 = vmatpush1.bf16.msra.mxu0 %v4358
        %5775 = vmatprep.subr.bf16.mxu0 %v4363
        %5776 = vmatpush1.bf16.msra.mxu0 %v4362
        %5777 = vmatprep.subr.bf16.mxu0 %v4367
        %5778 = vmatpush1.bf16.msra.mxu0 %v4366
        %5779 = vmatprep.subr.bf16.mxu0 %v4371
        %5780 = vmatpush1.bf16.msra.mxu0 %v4370
        %5781 = vmatprep.subr.bf16.mxu0 %v4375
        %5782 = vmatpush1.bf16.msra.mxu0 %v4374
        %5783 = vmatprep.subr.bf16.mxu0 %v4379
        %5784 = vmatpush1.bf16.msra.mxu0 %v4378
        %5785 = vmatprep.subr.bf16.mxu0 %v4383
        %5786 = vmatpush1.bf16.msra.mxu0 %v4382
        %5787 = vmatprep.subr.bf16.mxu0 %v4387
        %5788 = vmatpush1.bf16.msra.mxu0 %v4386
        %5789 = vmatprep.subr.bf16.mxu0 %v4391
        %5790 = vmatpush1.bf16.msra.mxu0 %v4390
        %5791 = vmatprep.subr.bf16.mxu0 %v4395
        %5792 = vmatpush1.bf16.msra.mxu0 %v4394
        %5793 = vmatprep.subr.bf16.mxu0 %v4399
        %5794 = vmatpush1.bf16.msra.mxu0 %v4398
        %5795 = vmatprep.subr.bf16.mxu0 %v4403
        %5796 = vmatpush1.bf16.msra.mxu0 %v4402
        %5797 = vmatprep.subr.bf16.mxu0 %v4407
        %5798 = vmatpush1.bf16.msra.mxu0 %v4406
        %5799 = vmatprep.mubr.bf16.mxu0 %v940
        %5800 = vmatmul.mubr.bf16.gmra.mrb[0].mxu0 %v939
        %v5801 = vpop.f32.mrb[0].mxu0
        %v5802 = vadd.f32 %v5761, %v5801
        %v5803 = vpop.f32.mrb[0].mxu0
        %v5804 = vadd.f32 %v5763, %v5803
        %v5805 = vpop.f32.mrb[0].mxu0
        %v5806 = vpop.f32.mrb[0].mxu0
        %5807 = vdwg.mxu0
        %5808 = vmatprep.subr.bf16.mxu0 %v4411
        %5809 = vmatpush1.bf16.msra.mxu0 %v4410
        %5810 = vmatprep.subr.bf16.mxu0 %v4415
        %5811 = vmatpush1.bf16.msra.mxu0 %v4414
        %5812 = vmatprep.subr.bf16.mxu0 %v4419
        %5813 = vmatpush1.bf16.msra.mxu0 %v4418
        %5814 = vmatprep.subr.bf16.mxu0 %v4423
        %5815 = vmatpush1.bf16.msra.mxu0 %v4422
        %5816 = vmatprep.subr.bf16.mxu0 %v4427
        %5817 = vmatpush1.bf16.msra.mxu0 %v4426
        %5818 = vmatprep.subr.bf16.mxu0 %v4431
        %5819 = vmatpush1.bf16.msra.mxu0 %v4430
        %5820 = vmatprep.subr.bf16.mxu0 %v4435
        %5821 = vmatpush1.bf16.msra.mxu0 %v4434
        %5822 = vmatprep.subr.bf16.mxu0 %v4439
        %5823 = vmatpush1.bf16.msra.mxu0 %v4438
        %5824 = vmatprep.subr.bf16.mxu0 %v4443
        %5825 = vmatpush1.bf16.msra.mxu0 %v4442
        %5826 = vmatprep.subr.bf16.mxu0 %v4447
        %5827 = vmatpush1.bf16.msra.mxu0 %v4446
        %5828 = vmatprep.subr.bf16.mxu0 %v4451
        %5829 = vmatpush1.bf16.msra.mxu0 %v4450
        %5830 = vmatprep.subr.bf16.mxu0 %v4455
        %5831 = vmatpush1.bf16.msra.mxu0 %v4454
        %5832 = vmatprep.subr.bf16.mxu0 %v4459
        %5833 = vmatpush1.bf16.msra.mxu0 %v4458
        %5834 = vmatprep.subr.bf16.mxu0 %v4463
        %5835 = vmatpush1.bf16.msra.mxu0 %v4462
        %5836 = vmatprep.subr.bf16.mxu0 %v4467
        %5837 = vmatpush1.bf16.msra.mxu0 %v4466
        %5838 = vmatprep.subr.bf16.mxu0 %v4471
        %5839 = vmatpush1.bf16.msra.mxu0 %v4470
        %5840 = vmatprep.mubr.bf16.mxu0 %v942
        %5841 = vmatmul.mubr.bf16.gmra.mrb[0].mxu0 %v941
        %v5842 = vpop.f32.mrb[0].mxu0
        %v5843 = vadd.f32 %v5802, %v5842
        %v5844 = vpop.f32.mrb[0].mxu0
        %v5845 = vadd.f32 %v5804, %v5844
        %v5846 = vpop.f32.mrb[0].mxu0
        %v5847 = vpop.f32.mrb[0].mxu0
        %5848 = vdwg.mxu0
        %5849 = vmatprep.subr.bf16.mxu0 %v4475
        %5850 = vmatpush1.bf16.msra.mxu0 %v4474
        %5851 = vmatprep.subr.bf16.mxu0 %v4479
        %5852 = vmatpush1.bf16.msra.mxu0 %v4478
        %5853 = vmatprep.subr.bf16.mxu0 %v4483
        %5854 = vmatpush1.bf16.msra.mxu0 %v4482
        %5855 = vmatprep.subr.bf16.mxu0 %v4487
        %5856 = vmatpush1.bf16.msra.mxu0 %v4486
        %5857 = vmatprep.subr.bf16.mxu0 %v4491
        %5858 = vmatpush1.bf16.msra.mxu0 %v4490
        %5859 = vmatprep.subr.bf16.mxu0 %v4495
        %5860 = vmatpush1.bf16.msra.mxu0 %v4494
        %5861 = vmatprep.subr.bf16.mxu0 %v4499
        %5862 = vmatpush1.bf16.msra.mxu0 %v4498
        %5863 = vmatprep.subr.bf16.mxu0 %v4503
        %5864 = vmatpush1.bf16.msra.mxu0 %v4502
        %5865 = vmatprep.subr.bf16.mxu0 %v4507
        %5866 = vmatpush1.bf16.msra.mxu0 %v4506
        %5867 = vmatprep.subr.bf16.mxu0 %v4511
        %5868 = vmatpush1.bf16.msra.mxu0 %v4510
        %5869 = vmatprep.subr.bf16.mxu0 %v4515
        %5870 = vmatpush1.bf16.msra.mxu0 %v4514
        %5871 = vmatprep.subr.bf16.mxu0 %v4519
        %5872 = vmatpush1.bf16.msra.mxu0 %v4518
        %5873 = vmatprep.subr.bf16.mxu0 %v4523
        %5874 = vmatpush1.bf16.msra.mxu0 %v4522
        %5875 = vmatprep.subr.bf16.mxu0 %v4527
        %5876 = vmatpush1.bf16.msra.mxu0 %v4526
        %5877 = vmatprep.subr.bf16.mxu0 %v4531
        %5878 = vmatpush1.bf16.msra.mxu0 %v4530
        %5879 = vmatprep.subr.bf16.mxu0 %v4535
        %5880 = vmatpush1.bf16.msra.mxu0 %v4534
        %5881 = vmatprep.mubr.bf16.mxu0 %v944
        %5882 = vmatmul.mubr.bf16.gmra.mrb[0].mxu0 %v943
        %v5883 = vpop.f32.mrb[0].mxu0
        %v5884 = vadd.f32 %v5843, %v5883
        %v5885 = vpop.f32.mrb[0].mxu0
        %v5886 = vadd.f32 %v5845, %v5885
        %v5887 = vpop.f32.mrb[0].mxu0
        %v5888 = vpop.f32.mrb[0].mxu0
        %5889 = vdwg.mxu0
        %5890 = vmatprep.subr.bf16.mxu0 %v4539
        %5891 = vmatpush1.bf16.msra.mxu0 %v4538
        %5892 = vmatprep.subr.bf16.mxu0 %v4543
        %5893 = vmatpush1.bf16.msra.mxu0 %v4542
        %5894 = vmatprep.subr.bf16.mxu0 %v4547
        %5895 = vmatpush1.bf16.msra.mxu0 %v4546
        %5896 = vmatprep.subr.bf16.mxu0 %v4551
        %5897 = vmatpush1.bf16.msra.mxu0 %v4550
        %5898 = vmatprep.subr.bf16.mxu0 %v4555
        %5899 = vmatpush1.bf16.msra.mxu0 %v4554
        %5900 = vmatprep.subr.bf16.mxu0 %v4559
        %5901 = vmatpush1.bf16.msra.mxu0 %v4558
        %5902 = vmatprep.subr.bf16.mxu0 %v4563
        %5903 = vmatpush1.bf16.msra.mxu0 %v4562
        %5904 = vmatprep.subr.bf16.mxu0 %v4567
        %5905 = vmatpush1.bf16.msra.mxu0 %v4566
        %5906 = vmatprep.subr.bf16.mxu0 %v4571
        %5907 = vmatpush1.bf16.msra.mxu0 %v4570
        %5908 = vmatprep.subr.bf16.mxu0 %v4575
        %5909 = vmatpush1.bf16.msra.mxu0 %v4574
        %5910 = vmatprep.subr.bf16.mxu0 %v4579
        %5911 = vmatpush1.bf16.msra.mxu0 %v4578
        %5912 = vmatprep.subr.bf16.mxu0 %v4583
        %5913 = vmatpush1.bf16.msra.mxu0 %v4582
        %5914 = vmatprep.subr.bf16.mxu0 %v4587
        %5915 = vmatpush1.bf16.msra.mxu0 %v4586
        %5916 = vmatprep.subr.bf16.mxu0 %v4591
        %5917 = vmatpush1.bf16.msra.mxu0 %v4590
        %5918 = vmatprep.subr.bf16.mxu0 %v4595
        %5919 = vmatpush1.bf16.msra.mxu0 %v4594
        %5920 = vmatprep.subr.bf16.mxu0 %v4599
        %5921 = vmatpush1.bf16.msra.mxu0 %v4598
        %5922 = vmatprep.mubr.bf16.mxu0 %v946
        %5923 = vmatmul.mubr.bf16.gmra.mrb[0].mxu0 %v945
        %v5924 = vpop.f32.mrb[0].mxu0
        %v5925 = vadd.f32 %v5884, %v5924
        %v5926 = vpop.f32.mrb[0].mxu0
        %v5927 = vadd.f32 %v5886, %v5926
        %v5928 = vpop.f32.mrb[0].mxu0
        %v5929 = vpop.f32.mrb[0].mxu0
        %5930 = vdwg.mxu0
        %5931 = vmatprep.subr.bf16.mxu0 %v4603
        %5932 = vmatpush1.bf16.msra.mxu0 %v4602
        %5933 = vmatprep.subr.bf16.mxu0 %v4607
        %5934 = vmatpush1.bf16.msra.mxu0 %v4606
        %5935 = vmatprep.subr.bf16.mxu0 %v4611
        %5936 = vmatpush1.bf16.msra.mxu0 %v4610
        %5937 = vmatprep.subr.bf16.mxu0 %v4615
        %5938 = vmatpush1.bf16.msra.mxu0 %v4614
        %5939 = vmatprep.subr.bf16.mxu0 %v4619
        %5940 = vmatpush1.bf16.msra.mxu0 %v4618
        %5941 = vmatprep.subr.bf16.mxu0 %v4623
        %5942 = vmatpush1.bf16.msra.mxu0 %v4622
        %5943 = vmatprep.subr.bf16.mxu0 %v4627
        %5944 = vmatpush1.bf16.msra.mxu0 %v4626
        %5945 = vmatprep.subr.bf16.mxu0 %v4631
        %5946 = vmatpush1.bf16.msra.mxu0 %v4630
        %5947 = vmatprep.subr.bf16.mxu0 %v4635
        %5948 = vmatpush1.bf16.msra.mxu0 %v4634
        %5949 = vmatprep.subr.bf16.mxu0 %v4639
        %5950 = vmatpush1.bf16.msra.mxu0 %v4638
        %5951 = vmatprep.subr.bf16.mxu0 %v4643
        %5952 = vmatpush1.bf16.msra.mxu0 %v4642
        %5953 = vmatprep.subr.bf16.mxu0 %v4647
        %5954 = vmatpush1.bf16.msra.mxu0 %v4646
        %5955 = vmatprep.subr.bf16.mxu0 %v4651
        %5956 = vmatpush1.bf16.msra.mxu0 %v4650
        %5957 = vmatprep.subr.bf16.mxu0 %v4655
        %5958 = vmatpush1.bf16.msra.mxu0 %v4654
        %5959 = vmatprep.subr.bf16.mxu0 %v4659
        %5960 = vmatpush1.bf16.msra.mxu0 %v4658
        %5961 = vmatprep.subr.bf16.mxu0 %v4663
        %5962 = vmatpush1.bf16.msra.mxu0 %v4662
        %5963 = vmatprep.mubr.bf16.mxu0 %v948
        %5964 = vmatmul.mubr.bf16.gmra.mrb[0].mxu0 %v947
        %v5965 = vpop.f32.mrb[0].mxu0
        %v5966 = vadd.f32 %v5925, %v5965
        %v5967 = vpop.f32.mrb[0].mxu0
        %v5968 = vadd.f32 %v5927, %v5967
        %v5969 = vpop.f32.mrb[0].mxu0
        %v5970 = vpop.f32.mrb[0].mxu0
        %5971 = vdwg.mxu0
        %5972 = vmatprep.subr.bf16.mxu0 %v4667
        %5973 = vmatpush1.bf16.msra.mxu0 %v4666
        %5974 = vmatprep.subr.bf16.mxu0 %v4671
        %5975 = vmatpush1.bf16.msra.mxu0 %v4670
        %5976 = vmatprep.subr.bf16.mxu0 %v4675
        %5977 = vmatpush1.bf16.msra.mxu0 %v4674
        %5978 = vmatprep.subr.bf16.mxu0 %v4679
        %5979 = vmatpush1.bf16.msra.mxu0 %v4678
        %5980 = vmatprep.subr.bf16.mxu0 %v4683
        %5981 = vmatpush1.bf16.msra.mxu0 %v4682
        %5982 = vmatprep.subr.bf16.mxu0 %v4687
        %5983 = vmatpush1.bf16.msra.mxu0 %v4686
        %5984 = vmatprep.subr.bf16.mxu0 %v4691
        %5985 = vmatpush1.bf16.msra.mxu0 %v4690
        %5986 = vmatprep.subr.bf16.mxu0 %v4695
        %5987 = vmatpush1.bf16.msra.mxu0 %v4694
        %5988 = vmatprep.subr.bf16.mxu0 %v4699
        %5989 = vmatpush1.bf16.msra.mxu0 %v4698
        %5990 = vmatprep.subr.bf16.mxu0 %v4703
        %5991 = vmatpush1.bf16.msra.mxu0 %v4702
        %5992 = vmatprep.subr.bf16.mxu0 %v4707
        %5993 = vmatpush1.bf16.msra.mxu0 %v4706
        %5994 = vmatprep.subr.bf16.mxu0 %v4711
        %5995 = vmatpush1.bf16.msra.mxu0 %v4710
        %5996 = vmatprep.subr.bf16.mxu0 %v4715
        %5997 = vmatpush1.bf16.msra.mxu0 %v4714
        %5998 = vmatprep.subr.bf16.mxu0 %v4719
        %5999 = vmatpush1.bf16.msra.mxu0 %v4718
        %6000 = vmatprep.subr.bf16.mxu0 %v4723
        %6001 = vmatpush1.bf16.msra.mxu0 %v4722
        %6002 = vmatprep.subr.bf16.mxu0 %v4727
        %6003 = vmatpush1.bf16.msra.mxu0 %v4726
        %6004 = vmatprep.mubr.bf16.mxu0 %v950
        %6005 = vmatmul.mubr.bf16.gmra.mrb[0].mxu0 %v949
        %v6006 = vpop.f32.mrb[0].mxu0
        %v6007 = vadd.f32 %v5966, %v6006
        %v6008 = vpop.f32.mrb[0].mxu0
        %v6009 = vadd.f32 %v5968, %v6008
        %v6010 = vpop.f32.mrb[0].mxu0
        %v6011 = vpop.f32.mrb[0].mxu0
        %6012 = vdwg.mxu0
        %6013 = vmatprep.subr.bf16.mxu0 %v4731
        %6014 = vmatpush1.bf16.msra.mxu0 %v4730
        %6015 = vmatprep.subr.bf16.mxu0 %v4735
        %6016 = vmatpush1.bf16.msra.mxu0 %v4734
        %6017 = vmatprep.subr.bf16.mxu0 %v4739
        %6018 = vmatpush1.bf16.msra.mxu0 %v4738
        %6019 = vmatprep.subr.bf16.mxu0 %v4743
        %6020 = vmatpush1.bf16.msra.mxu0 %v4742
        %6021 = vmatprep.subr.bf16.mxu0 %v4747
        %6022 = vmatpush1.bf16.msra.mxu0 %v4746
        %6023 = vmatprep.subr.bf16.mxu0 %v4751
        %6024 = vmatpush1.bf16.msra.mxu0 %v4750
        %6025 = vmatprep.subr.bf16.mxu0 %v4755
        %6026 = vmatpush1.bf16.msra.mxu0 %v4754
        %6027 = vmatprep.subr.bf16.mxu0 %v4759
        %6028 = vmatpush1.bf16.msra.mxu0 %v4758
        %6029 = vmatprep.subr.bf16.mxu0 %v4763
        %6030 = vmatpush1.bf16.msra.mxu0 %v4762
        %6031 = vmatprep.subr.bf16.mxu0 %v4767
        %6032 = vmatpush1.bf16.msra.mxu0 %v4766
        %6033 = vmatprep.subr.bf16.mxu0 %v4771
        %6034 = vmatpush1.bf16.msra.mxu0 %v4770
        %6035 = vmatprep.subr.bf16.mxu0 %v4775
        %6036 = vmatpush1.bf16.msra.mxu0 %v4774
        %6037 = vmatprep.subr.bf16.mxu0 %v4779
        %6038 = vmatpush1.bf16.msra.mxu0 %v4778
        %6039 = vmatprep.subr.bf16.mxu0 %v4783
        %6040 = vmatpush1.bf16.msra.mxu0 %v4782
        %6041 = vmatprep.subr.bf16.mxu0 %v4787
        %6042 = vmatpush1.bf16.msra.mxu0 %v4786
        %6043 = vmatprep.subr.bf16.mxu0 %v4791
        %6044 = vmatpush1.bf16.msra.mxu0 %v4790
        %6045 = vmatprep.mubr.bf16.mxu0 %v952
        %6046 = vmatmul.mubr.bf16.gmra.mrb[0].mxu0 %v951
        %v6047 = vpop.f32.mrb[0].mxu0
        %v6048 = vadd.f32 %v6007, %v6047
        %v6049 = vpop.f32.mrb[0].mxu0
        %v6050 = vadd.f32 %v6009, %v6049
        %v6051 = vpop.f32.mrb[0].mxu0
        %v6052 = vpop.f32.mrb[0].mxu0
        %6053 = vdwg.mxu0
        %6054 = vmatprep.subr.bf16.mxu0 %v4029
        %6055 = vmatpush1.bf16.msra.mxu0 %v4028
        %6056 = vmatprep.subr.bf16.mxu0 %v4033
        %6057 = vmatpush1.bf16.msra.mxu0 %v4032
        %6058 = vmatprep.subr.bf16.mxu0 %v4037
        %6059 = vmatpush1.bf16.msra.mxu0 %v4036
        %6060 = vmatprep.subr.bf16.mxu0 %v4041
        %6061 = vmatpush1.bf16.msra.mxu0 %v4040
        %6062 = vmatprep.subr.bf16.mxu0 %v4045
        %6063 = vmatpush1.bf16.msra.mxu0 %v4044
        %6064 = vmatprep.subr.bf16.mxu0 %v4049
        %6065 = vmatpush1.bf16.msra.mxu0 %v4048
        %6066 = vmatprep.subr.bf16.mxu0 %v4053
        %6067 = vmatpush1.bf16.msra.mxu0 %v4052
        %6068 = vmatprep.subr.bf16.mxu0 %v4057
        %6069 = vmatpush1.bf16.msra.mxu0 %v4056
        %6070 = vmatprep.subr.bf16.mxu0 %v4061
        %6071 = vmatpush1.bf16.msra.mxu0 %v4060
        %6072 = vmatprep.subr.bf16.mxu0 %v4065
        %6073 = vmatpush1.bf16.msra.mxu0 %v4064
        %6074 = vmatprep.subr.bf16.mxu0 %v4069
        %6075 = vmatpush1.bf16.msra.mxu0 %v4068
        %6076 = vmatprep.subr.bf16.mxu0 %v4073
        %6077 = vmatpush1.bf16.msra.mxu0 %v4072
        %6078 = vmatprep.subr.bf16.mxu0 %v4077
        %6079 = vmatpush1.bf16.msra.mxu0 %v4076
        %6080 = vmatprep.subr.bf16.mxu0 %v4081
        %6081 = vmatpush1.bf16.msra.mxu0 %v4080
        %6082 = vmatprep.subr.bf16.mxu0 %v4085
        %6083 = vmatpush1.bf16.msra.mxu0 %v4084
        %6084 = vmatprep.subr.bf16.mxu0 %v4089
        %6085 = vmatpush1.bf16.msra.mxu0 %v4088
        %6086 = vmatprep.mubr.bf16.mxu0 %v930
        %6087 = vmatmul.mubr.bf16.gmra.mrb[0].mxu0 %v929
        %v6088 = vpop.f32.mrb[0].mxu0
        %v6089 = vadd.f32 0.0, %v6088
        %v6090 = vpop.f32.mrb[0].mxu0
        %v6091 = vadd.f32 0.0, %v6090
        %v6092 = vpop.f32.mrb[0].mxu0
        %v6093 = vpop.f32.mrb[0].mxu0
        %6094 = vdwg.mxu0
        %6095 = vmatprep.subr.bf16.mxu0 %v4093
        %6096 = vmatpush1.bf16.msra.mxu0 %v4092
        %6097 = vmatprep.subr.bf16.mxu0 %v4097
        %6098 = vmatpush1.bf16.msra.mxu0 %v4096
        %6099 = vmatprep.subr.bf16.mxu0 %v4101
        %6100 = vmatpush1.bf16.msra.mxu0 %v4100
        %6101 = vmatprep.subr.bf16.mxu0 %v4105
        %6102 = vmatpush1.bf16.msra.mxu0 %v4104
        %6103 = vmatprep.subr.bf16.mxu0 %v4109
        %6104 = vmatpush1.bf16.msra.mxu0 %v4108
        %6105 = vmatprep.subr.bf16.mxu0 %v4113
        %6106 = vmatpush1.bf16.msra.mxu0 %v4112
        %6107 = vmatprep.subr.bf16.mxu0 %v4117
        %6108 = vmatpush1.bf16.msra.mxu0 %v4116
        %6109 = vmatprep.subr.bf16.mxu0 %v4121
        %6110 = vmatpush1.bf16.msra.mxu0 %v4120
        %6111 = vmatprep.subr.bf16.mxu0 %v4125
        %6112 = vmatpush1.bf16.msra.mxu0 %v4124
        %6113 = vmatprep.subr.bf16.mxu0 %v4129
        %6114 = vmatpush1.bf16.msra.mxu0 %v4128
        %6115 = vmatprep.subr.bf16.mxu0 %v4133
        %6116 = vmatpush1.bf16.msra.mxu0 %v4132
        %6117 = vmatprep.subr.bf16.mxu0 %v4137
        %6118 = vmatpush1.bf16.msra.mxu0 %v4136
        %6119 = vmatprep.subr.bf16.mxu0 %v4141
        %6120 = vmatpush1.bf16.msra.mxu0 %v4140
        %6121 = vmatprep.subr.bf16.mxu0 %v4145
        %6122 = vmatpush1.bf16.msra.mxu0 %v4144
        %6123 = vmatprep.subr.bf16.mxu0 %v4149
        %6124 = vmatpush1.bf16.msra.mxu0 %v4148
        %6125 = vmatprep.subr.bf16.mxu0 %v4153
        %6126 = vmatpush1.bf16.msra.mxu0 %v4152
        %6127 = vmatprep.mubr.bf16.mxu0 %v932
        %6128 = vmatmul.mubr.bf16.gmra.mrb[0].mxu0 %v931
        %v6129 = vpop.f32.mrb[0].mxu0
        %v6130 = vadd.f32 %v6089, %v6129
        %v6131 = vpop.f32.mrb[0].mxu0
        %v6132 = vadd.f32 %v6091, %v6131
        %v6133 = vpop.f32.mrb[0].mxu0
        %v6134 = vpop.f32.mrb[0].mxu0
        %6135 = vdwg.mxu0
        %6136 = vmatprep.subr.bf16.mxu0 %v4157
        %6137 = vmatpush1.bf16.msra.mxu0 %v4156
        %6138 = vmatprep.subr.bf16.mxu0 %v4161
        %6139 = vmatpush1.bf16.msra.mxu0 %v4160
        %6140 = vmatprep.subr.bf16.mxu0 %v4165
        %6141 = vmatpush1.bf16.msra.mxu0 %v4164
        %6142 = vmatprep.subr.bf16.mxu0 %v4169
        %6143 = vmatpush1.bf16.msra.mxu0 %v4168
        %6144 = vmatprep.subr.bf16.mxu0 %v4173
        %6145 = vmatpush1.bf16.msra.mxu0 %v4172
        %6146 = vmatprep.subr.bf16.mxu0 %v4177
        %6147 = vmatpush1.bf16.msra.mxu0 %v4176
        %6148 = vmatprep.subr.bf16.mxu0 %v4181
        %6149 = vmatpush1.bf16.msra.mxu0 %v4180
        %6150 = vmatprep.subr.bf16.mxu0 %v4185
        %6151 = vmatpush1.bf16.msra.mxu0 %v4184
        %6152 = vmatprep.subr.bf16.mxu0 %v4189
        %6153 = vmatpush1.bf16.msra.mxu0 %v4188
        %6154 = vmatprep.subr.bf16.mxu0 %v4193
        %6155 = vmatpush1.bf16.msra.mxu0 %v4192
        %6156 = vmatprep.subr.bf16.mxu0 %v4197
        %6157 = vmatpush1.bf16.msra.mxu0 %v4196
        %6158 = vmatprep.subr.bf16.mxu0 %v4201
        %6159 = vmatpush1.bf16.msra.mxu0 %v4200
        %6160 = vmatprep.subr.bf16.mxu0 %v4205
        %6161 = vmatpush1.bf16.msra.mxu0 %v4204
        %6162 = vmatprep.subr.bf16.mxu0 %v4209
        %6163 = vmatpush1.bf16.msra.mxu0 %v4208
        %6164 = vmatprep.subr.bf16.mxu0 %v4213
        %6165 = vmatpush1.bf16.msra.mxu0 %v4212
        %6166 = vmatprep.subr.bf16.mxu0 %v4217
        %6167 = vmatpush1.bf16.msra.mxu0 %v4216
        %6168 = vmatprep.mubr.bf16.mxu0 %v934
        %6169 = vmatmul.mubr.bf16.gmra.mrb[0].mxu0 %v933
        %v6170 = vpop.f32.mrb[0].mxu0
        %v6171 = vadd.f32 %v6130, %v6170
        %v6172 = vpop.f32.mrb[0].mxu0
        %v6173 = vadd.f32 %v6132, %v6172
        %v6174 = vpop.f32.mrb[0].mxu0
        %v6175 = vpop.f32.mrb[0].mxu0
        %6176 = vdwg.mxu0
        %6177 = vmatprep.subr.bf16.mxu0 %v4221
        %6178 = vmatpush1.bf16.msra.mxu0 %v4220
        %6179 = vmatprep.subr.bf16.mxu0 %v4225
        %6180 = vmatpush1.bf16.msra.mxu0 %v4224
        %6181 = vmatprep.subr.bf16.mxu0 %v4229
        %6182 = vmatpush1.bf16.msra.mxu0 %v4228
        %6183 = vmatprep.subr.bf16.mxu0 %v4233
        %6184 = vmatpush1.bf16.msra.mxu0 %v4232
        %6185 = vmatprep.subr.bf16.mxu0 %v4237
        %6186 = vmatpush1.bf16.msra.mxu0 %v4236
        %6187 = vmatprep.subr.bf16.mxu0 %v4241
        %6188 = vmatpush1.bf16.msra.mxu0 %v4240
        %6189 = vmatprep.subr.bf16.mxu0 %v4245
        %6190 = vmatpush1.bf16.msra.mxu0 %v4244
        %6191 = vmatprep.subr.bf16.mxu0 %v4249
        %6192 = vmatpush1.bf16.msra.mxu0 %v4248
        %6193 = vmatprep.subr.bf16.mxu0 %v4253
        %6194 = vmatpush1.bf16.msra.mxu0 %v4252
        %6195 = vmatprep.subr.bf16.mxu0 %v4257
        %6196 = vmatpush1.bf16.msra.mxu0 %v4256
        %6197 = vmatprep.subr.bf16.mxu0 %v4261
        %6198 = vmatpush1.bf16.msra.mxu0 %v4260
        %6199 = vmatprep.subr.bf16.mxu0 %v4265
        %6200 = vmatpush1.bf16.msra.mxu0 %v4264
        %6201 = vmatprep.subr.bf16.mxu0 %v4269
        %6202 = vmatpush1.bf16.msra.mxu0 %v4268
        %6203 = vmatprep.subr.bf16.mxu0 %v4273
        %6204 = vmatpush1.bf16.msra.mxu0 %v4272
        %6205 = vmatprep.subr.bf16.mxu0 %v4277
        %6206 = vmatpush1.bf16.msra.mxu0 %v4276
        %6207 = vmatprep.subr.bf16.mxu0 %v4281
        %6208 = vmatpush1.bf16.msra.mxu0 %v4280
        %6209 = vmatprep.mubr.bf16.mxu0 %v936
        %6210 = vmatmul.mubr.bf16.gmra.mrb[0].mxu0 %v935
        %v6211 = vpop.f32.mrb[0].mxu0
        %v6212 = vadd.f32 %v6171, %v6211
        %v6213 = vpop.f32.mrb[0].mxu0
        %v6214 = vadd.f32 %v6173, %v6213
        %v6215 = vpop.f32.mrb[0].mxu0
        %v6216 = vpop.f32.mrb[0].mxu0
        %6217 = vdwg.mxu0
        %6218 = vmatprep.subr.bf16.mxu0 %v4285
        %6219 = vmatpush1.bf16.msra.mxu0 %v4284
        %6220 = vmatprep.subr.bf16.mxu0 %v4289
        %6221 = vmatpush1.bf16.msra.mxu0 %v4288
        %6222 = vmatprep.subr.bf16.mxu0 %v4293
        %6223 = vmatpush1.bf16.msra.mxu0 %v4292
        %6224 = vmatprep.subr.bf16.mxu0 %v4297
        %6225 = vmatpush1.bf16.msra.mxu0 %v4296
        %6226 = vmatprep.subr.bf16.mxu0 %v4301
        %6227 = vmatpush1.bf16.msra.mxu0 %v4300
        %6228 = vmatprep.subr.bf16.mxu0 %v4305
        %6229 = vmatpush1.bf16.msra.mxu0 %v4304
        %6230 = vmatprep.subr.bf16.mxu0 %v4309
        %6231 = vmatpush1.bf16.msra.mxu0 %v4308
        %6232 = vmatprep.subr.bf16.mxu0 %v4313
        %6233 = vmatpush1.bf16.msra.mxu0 %v4312
        %6234 = vmatprep.subr.bf16.mxu0 %v4317
        %6235 = vmatpush1.bf16.msra.mxu0 %v4316
        %6236 = vmatprep.subr.bf16.mxu0 %v4321
        %6237 = vmatpush1.bf16.msra.mxu0 %v4320
        %6238 = vmatprep.subr.bf16.mxu0 %v4325
        %6239 = vmatpush1.bf16.msra.mxu0 %v4324
        %6240 = vmatprep.subr.bf16.mxu0 %v4329
        %6241 = vmatpush1.bf16.msra.mxu0 %v4328
        %6242 = vmatprep.subr.bf16.mxu0 %v4333
        %6243 = vmatpush1.bf16.msra.mxu0 %v4332
        %6244 = vmatprep.subr.bf16.mxu0 %v4337
        %6245 = vmatpush1.bf16.msra.mxu0 %v4336
        %6246 = vmatprep.subr.bf16.mxu0 %v4341
        %6247 = vmatpush1.bf16.msra.mxu0 %v4340
        %6248 = vmatprep.subr.bf16.mxu0 %v4345
        %6249 = vmatpush1.bf16.msra.mxu0 %v4344
        %6250 = vmatprep.mubr.bf16.mxu0 %v938
        %6251 = vmatmul.mubr.bf16.gmra.mrb[0].mxu0 %v937
        %v6252 = vpop.f32.mrb[0].mxu0
        %v6253 = vadd.f32 %v6212, %v6252
        %v6254 = vpop.f32.mrb[0].mxu0
        %v6255 = vadd.f32 %v6214, %v6254
        %v6256 = vpop.f32.mrb[0].mxu0
        %v6257 = vpop.f32.mrb[0].mxu0
        %6258 = vdwg.mxu0
        %6259 = vmatprep.subr.bf16.mxu0 %v4349
        %6260 = vmatpush1.bf16.msra.mxu0 %v4348
        %6261 = vmatprep.subr.bf16.mxu0 %v4353
        %6262 = vmatpush1.bf16.msra.mxu0 %v4352
        %6263 = vmatprep.subr.bf16.mxu0 %v4357
        %6264 = vmatpush1.bf16.msra.mxu0 %v4356
        %6265 = vmatprep.subr.bf16.mxu0 %v4361
        %6266 = vmatpush1.bf16.msra.mxu0 %v4360
        %6267 = vmatprep.subr.bf16.mxu0 %v4365
        %6268 = vmatpush1.bf16.msra.mxu0 %v4364
        %6269 = vmatprep.subr.bf16.mxu0 %v4369
        %6270 = vmatpush1.bf16.msra.mxu0 %v4368
        %6271 = vmatprep.subr.bf16.mxu0 %v4373
        %6272 = vmatpush1.bf16.msra.mxu0 %v4372
        %6273 = vmatprep.subr.bf16.mxu0 %v4377
        %6274 = vmatpush1.bf16.msra.mxu0 %v4376
        %6275 = vmatprep.subr.bf16.mxu0 %v4381
        %6276 = vmatpush1.bf16.msra.mxu0 %v4380
        %6277 = vmatprep.subr.bf16.mxu0 %v4385
        %6278 = vmatpush1.bf16.msra.mxu0 %v4384
        %6279 = vmatprep.subr.bf16.mxu0 %v4389
        %6280 = vmatpush1.bf16.msra.mxu0 %v4388
        %6281 = vmatprep.subr.bf16.mxu0 %v4393
        %6282 = vmatpush1.bf16.msra.mxu0 %v4392
        %6283 = vmatprep.subr.bf16.mxu0 %v4397
        %6284 = vmatpush1.bf16.msra.mxu0 %v4396
        %6285 = vmatprep.subr.bf16.mxu0 %v4401
        %6286 = vmatpush1.bf16.msra.mxu0 %v4400
        %6287 = vmatprep.subr.bf16.mxu0 %v4405
        %6288 = vmatpush1.bf16.msra.mxu0 %v4404
        %6289 = vmatprep.subr.bf16.mxu0 %v4409
        %6290 = vmatpush1.bf16.msra.mxu0 %v4408
        %6291 = vmatprep.mubr.bf16.mxu0 %v940
        %6292 = vmatmul.mubr.bf16.gmra.mrb[0].mxu0 %v939
        %v6293 = vpop.f32.mrb[0].mxu0
        %v6294 = vadd.f32 %v6253, %v6293
        %v6295 = vpop.f32.mrb[0].mxu0
        %v6296 = vadd.f32 %v6255, %v6295
        %v6297 = vpop.f32.mrb[0].mxu0
        %v6298 = vpop.f32.mrb[0].mxu0
        %6299 = vdwg.mxu0
        %6300 = vmatprep.subr.bf16.mxu0 %v4413
        %6301 = vmatpush1.bf16.msra.mxu0 %v4412
        %6302 = vmatprep.subr.bf16.mxu0 %v4417
        %6303 = vmatpush1.bf16.msra.mxu0 %v4416
        %6304 = vmatprep.subr.bf16.mxu0 %v4421
        %6305 = vmatpush1.bf16.msra.mxu0 %v4420
        %6306 = vmatprep.subr.bf16.mxu0 %v4425
        %6307 = vmatpush1.bf16.msra.mxu0 %v4424
        %6308 = vmatprep.subr.bf16.mxu0 %v4429
        %6309 = vmatpush1.bf16.msra.mxu0 %v4428
        %6310 = vmatprep.subr.bf16.mxu0 %v4433
        %6311 = vmatpush1.bf16.msra.mxu0 %v4432
        %6312 = vmatprep.subr.bf16.mxu0 %v4437
        %6313 = vmatpush1.bf16.msra.mxu0 %v4436
        %6314 = vmatprep.subr.bf16.mxu0 %v4441
        %6315 = vmatpush1.bf16.msra.mxu0 %v4440
        %6316 = vmatprep.subr.bf16.mxu0 %v4445
        %6317 = vmatpush1.bf16.msra.mxu0 %v4444
        %6318 = vmatprep.subr.bf16.mxu0 %v4449
        %6319 = vmatpush1.bf16.msra.mxu0 %v4448
        %6320 = vmatprep.subr.bf16.mxu0 %v4453
        %6321 = vmatpush1.bf16.msra.mxu0 %v4452
        %6322 = vmatprep.subr.bf16.mxu0 %v4457
        %6323 = vmatpush1.bf16.msra.mxu0 %v4456
        %6324 = vmatprep.subr.bf16.mxu0 %v4461
        %6325 = vmatpush1.bf16.msra.mxu0 %v4460
        %6326 = vmatprep.subr.bf16.mxu0 %v4465
        %6327 = vmatpush1.bf16.msra.mxu0 %v4464
        %6328 = vmatprep.subr.bf16.mxu0 %v4469
        %6329 = vmatpush1.bf16.msra.mxu0 %v4468
        %6330 = vmatprep.subr.bf16.mxu0 %v4473
        %6331 = vmatpush1.bf16.msra.mxu0 %v4472
        %6332 = vmatprep.mubr.bf16.mxu0 %v942
        %6333 = vmatmul.mubr.bf16.gmra.mrb[0].mxu0 %v941
        %v6334 = vpop.f32.mrb[0].mxu0
        %v6335 = vadd.f32 %v6294, %v6334
        %v6336 = vpop.f32.mrb[0].mxu0
        %v6337 = vadd.f32 %v6296, %v6336
        %v6338 = vpop.f32.mrb[0].mxu0
        %v6339 = vpop.f32.mrb[0].mxu0
        %6340 = vdwg.mxu0
        %6341 = vmatprep.subr.bf16.mxu0 %v4477
        %6342 = vmatpush1.bf16.msra.mxu0 %v4476
        %6343 = vmatprep.subr.bf16.mxu0 %v4481
        %6344 = vmatpush1.bf16.msra.mxu0 %v4480
        %6345 = vmatprep.subr.bf16.mxu0 %v4485
        %6346 = vmatpush1.bf16.msra.mxu0 %v4484
        %6347 = vmatprep.subr.bf16.mxu0 %v4489
        %6348 = vmatpush1.bf16.msra.mxu0 %v4488
        %6349 = vmatprep.subr.bf16.mxu0 %v4493
        %6350 = vmatpush1.bf16.msra.mxu0 %v4492
        %6351 = vmatprep.subr.bf16.mxu0 %v4497
        %6352 = vmatpush1.bf16.msra.mxu0 %v4496
        %6353 = vmatprep.subr.bf16.mxu0 %v4501
        %6354 = vmatpush1.bf16.msra.mxu0 %v4500
        %6355 = vmatprep.subr.bf16.mxu0 %v4505
        %6356 = vmatpush1.bf16.msra.mxu0 %v4504
        %6357 = vmatprep.subr.bf16.mxu0 %v4509
        %6358 = vmatpush1.bf16.msra.mxu0 %v4508
        %6359 = vmatprep.subr.bf16.mxu0 %v4513
        %6360 = vmatpush1.bf16.msra.mxu0 %v4512
        %6361 = vmatprep.subr.bf16.mxu0 %v4517
        %6362 = vmatpush1.bf16.msra.mxu0 %v4516
        %6363 = vmatprep.subr.bf16.mxu0 %v4521
        %6364 = vmatpush1.bf16.msra.mxu0 %v4520
        %6365 = vmatprep.subr.bf16.mxu0 %v4525
        %6366 = vmatpush1.bf16.msra.mxu0 %v4524
        %6367 = vmatprep.subr.bf16.mxu0 %v4529
        %6368 = vmatpush1.bf16.msra.mxu0 %v4528
        %6369 = vmatprep.subr.bf16.mxu0 %v4533
        %6370 = vmatpush1.bf16.msra.mxu0 %v4532
        %6371 = vmatprep.subr.bf16.mxu0 %v4537
        %6372 = vmatpush1.bf16.msra.mxu0 %v4536
        %6373 = vmatprep.mubr.bf16.mxu0 %v944
        %6374 = vmatmul.mubr.bf16.gmra.mrb[0].mxu0 %v943
        %v6375 = vpop.f32.mrb[0].mxu0
        %v6376 = vadd.f32 %v6335, %v6375
        %v6377 = vpop.f32.mrb[0].mxu0
        %v6378 = vadd.f32 %v6337, %v6377
        %v6379 = vpop.f32.mrb[0].mxu0
        %v6380 = vpop.f32.mrb[0].mxu0
        %6381 = vdwg.mxu0
        %6382 = vmatprep.subr.bf16.mxu0 %v4541
        %6383 = vmatpush1.bf16.msra.mxu0 %v4540
        %6384 = vmatprep.subr.bf16.mxu0 %v4545
        %6385 = vmatpush1.bf16.msra.mxu0 %v4544
        %6386 = vmatprep.subr.bf16.mxu0 %v4549
        %6387 = vmatpush1.bf16.msra.mxu0 %v4548
        %6388 = vmatprep.subr.bf16.mxu0 %v4553
        %6389 = vmatpush1.bf16.msra.mxu0 %v4552
        %6390 = vmatprep.subr.bf16.mxu0 %v4557
        %6391 = vmatpush1.bf16.msra.mxu0 %v4556
        %6392 = vmatprep.subr.bf16.mxu0 %v4561
        %6393 = vmatpush1.bf16.msra.mxu0 %v4560
        %6394 = vmatprep.subr.bf16.mxu0 %v4565
        %6395 = vmatpush1.bf16.msra.mxu0 %v4564
        %6396 = vmatprep.subr.bf16.mxu0 %v4569
        %6397 = vmatpush1.bf16.msra.mxu0 %v4568
        %6398 = vmatprep.subr.bf16.mxu0 %v4573
        %6399 = vmatpush1.bf16.msra.mxu0 %v4572
        %6400 = vmatprep.subr.bf16.mxu0 %v4577
        %6401 = vmatpush1.bf16.msra.mxu0 %v4576
        %6402 = vmatprep.subr.bf16.mxu0 %v4581
        %6403 = vmatpush1.bf16.msra.mxu0 %v4580
        %6404 = vmatprep.subr.bf16.mxu0 %v4585
        %6405 = vmatpush1.bf16.msra.mxu0 %v4584
        %6406 = vmatprep.subr.bf16.mxu0 %v4589
        %6407 = vmatpush1.bf16.msra.mxu0 %v4588
        %6408 = vmatprep.subr.bf16.mxu0 %v4593
        %6409 = vmatpush1.bf16.msra.mxu0 %v4592
        %6410 = vmatprep.subr.bf16.mxu0 %v4597
        %6411 = vmatpush1.bf16.msra.mxu0 %v4596
        %6412 = vmatprep.subr.bf16.mxu0 %v4601
        %6413 = vmatpush1.bf16.msra.mxu0 %v4600
        %6414 = vmatprep.mubr.bf16.mxu0 %v946
        %6415 = vmatmul.mubr.bf16.gmra.mrb[0].mxu0 %v945
        %v6416 = vpop.f32.mrb[0].mxu0
        %v6417 = vadd.f32 %v6376, %v6416
        %v6418 = vpop.f32.mrb[0].mxu0
        %v6419 = vadd.f32 %v6378, %v6418
        %v6420 = vpop.f32.mrb[0].mxu0
        %v6421 = vpop.f32.mrb[0].mxu0
        %6422 = vdwg.mxu0
        %6423 = vmatprep.subr.bf16.mxu0 %v4605
        %6424 = vmatpush1.bf16.msra.mxu0 %v4604
        %6425 = vmatprep.subr.bf16.mxu0 %v4609
        %6426 = vmatpush1.bf16.msra.mxu0 %v4608
        %6427 = vmatprep.subr.bf16.mxu0 %v4613
        %6428 = vmatpush1.bf16.msra.mxu0 %v4612
        %6429 = vmatprep.subr.bf16.mxu0 %v4617
        %6430 = vmatpush1.bf16.msra.mxu0 %v4616
        %6431 = vmatprep.subr.bf16.mxu0 %v4621
        %6432 = vmatpush1.bf16.msra.mxu0 %v4620
        %6433 = vmatprep.subr.bf16.mxu0 %v4625
        %6434 = vmatpush1.bf16.msra.mxu0 %v4624
        %6435 = vmatprep.subr.bf16.mxu0 %v4629
        %6436 = vmatpush1.bf16.msra.mxu0 %v4628
        %6437 = vmatprep.subr.bf16.mxu0 %v4633
        %6438 = vmatpush1.bf16.msra.mxu0 %v4632
        %6439 = vmatprep.subr.bf16.mxu0 %v4637
        %6440 = vmatpush1.bf16.msra.mxu0 %v4636
        %6441 = vmatprep.subr.bf16.mxu0 %v4641
        %6442 = vmatpush1.bf16.msra.mxu0 %v4640
        %6443 = vmatprep.subr.bf16.mxu0 %v4645
        %6444 = vmatpush1.bf16.msra.mxu0 %v4644
        %6445 = vmatprep.subr.bf16.mxu0 %v4649
        %6446 = vmatpush1.bf16.msra.mxu0 %v4648
        %6447 = vmatprep.subr.bf16.mxu0 %v4653
        %6448 = vmatpush1.bf16.msra.mxu0 %v4652
        %6449 = vmatprep.subr.bf16.mxu0 %v4657
        %6450 = vmatpush1.bf16.msra.mxu0 %v4656
        %6451 = vmatprep.subr.bf16.mxu0 %v4661
        %6452 = vmatpush1.bf16.msra.mxu0 %v4660
        %6453 = vmatprep.subr.bf16.mxu0 %v4665
        %6454 = vmatpush1.bf16.msra.mxu0 %v4664
        %6455 = vmatprep.mubr.bf16.mxu0 %v948
        %6456 = vmatmul.mubr.bf16.gmra.mrb[0].mxu0 %v947
        %v6457 = vpop.f32.mrb[0].mxu0
        %v6458 = vadd.f32 %v6417, %v6457
        %v6459 = vpop.f32.mrb[0].mxu0
        %v6460 = vadd.f32 %v6419, %v6459
        %v6461 = vpop.f32.mrb[0].mxu0
        %v6462 = vpop.f32.mrb[0].mxu0
        %6463 = vdwg.mxu0
        %6464 = vmatprep.subr.bf16.mxu0 %v4669
        %6465 = vmatpush1.bf16.msra.mxu0 %v4668
        %6466 = vmatprep.subr.bf16.mxu0 %v4673
        %6467 = vmatpush1.bf16.msra.mxu0 %v4672
        %6468 = vmatprep.subr.bf16.mxu0 %v4677
        %6469 = vmatpush1.bf16.msra.mxu0 %v4676
        %6470 = vmatprep.subr.bf16.mxu0 %v4681
        %6471 = vmatpush1.bf16.msra.mxu0 %v4680
        %6472 = vmatprep.subr.bf16.mxu0 %v4685
        %6473 = vmatpush1.bf16.msra.mxu0 %v4684
        %6474 = vmatprep.subr.bf16.mxu0 %v4689
        %6475 = vmatpush1.bf16.msra.mxu0 %v4688
        %6476 = vmatprep.subr.bf16.mxu0 %v4693
        %6477 = vmatpush1.bf16.msra.mxu0 %v4692
        %6478 = vmatprep.subr.bf16.mxu0 %v4697
        %6479 = vmatpush1.bf16.msra.mxu0 %v4696
        %6480 = vmatprep.subr.bf16.mxu0 %v4701
        %6481 = vmatpush1.bf16.msra.mxu0 %v4700
        %6482 = vmatprep.subr.bf16.mxu0 %v4705
        %6483 = vmatpush1.bf16.msra.mxu0 %v4704
        %6484 = vmatprep.subr.bf16.mxu0 %v4709
        %6485 = vmatpush1.bf16.msra.mxu0 %v4708
        %6486 = vmatprep.subr.bf16.mxu0 %v4713
        %6487 = vmatpush1.bf16.msra.mxu0 %v4712
        %6488 = vmatprep.subr.bf16.mxu0 %v4717
        %6489 = vmatpush1.bf16.msra.mxu0 %v4716
        %6490 = vmatprep.subr.bf16.mxu0 %v4721
        %6491 = vmatpush1.bf16.msra.mxu0 %v4720
        %6492 = vmatprep.subr.bf16.mxu0 %v4725
        %6493 = vmatpush1.bf16.msra.mxu0 %v4724
        %6494 = vmatprep.subr.bf16.mxu0 %v4729
        %6495 = vmatpush1.bf16.msra.mxu0 %v4728
        %6496 = vmatprep.mubr.bf16.mxu0 %v950
        %6497 = vmatmul.mubr.bf16.gmra.mrb[0].mxu0 %v949
        %v6498 = vpop.f32.mrb[0].mxu0
        %v6499 = vadd.f32 %v6458, %v6498
        %v6500 = vpop.f32.mrb[0].mxu0
        %v6501 = vadd.f32 %v6460, %v6500
        %v6502 = vpop.f32.mrb[0].mxu0
        %v6503 = vpop.f32.mrb[0].mxu0
        %6504 = vdwg.mxu0
        %6505 = vmatprep.subr.bf16.mxu0 %v4733
        %6506 = vmatpush1.bf16.msra.mxu0 %v4732
        %6507 = vmatprep.subr.bf16.mxu0 %v4737
        %6508 = vmatpush1.bf16.msra.mxu0 %v4736
        %6509 = vmatprep.subr.bf16.mxu0 %v4741
        %6510 = vmatpush1.bf16.msra.mxu0 %v4740
        %6511 = vmatprep.subr.bf16.mxu0 %v4745
        %6512 = vmatpush1.bf16.msra.mxu0 %v4744
        %6513 = vmatprep.subr.bf16.mxu0 %v4749
        %6514 = vmatpush1.bf16.msra.mxu0 %v4748
        %6515 = vmatprep.subr.bf16.mxu0 %v4753
        %6516 = vmatpush1.bf16.msra.mxu0 %v4752
        %6517 = vmatprep.subr.bf16.mxu0 %v4757
        %6518 = vmatpush1.bf16.msra.mxu0 %v4756
        %6519 = vmatprep.subr.bf16.mxu0 %v4761
        %6520 = vmatpush1.bf16.msra.mxu0 %v4760
        %6521 = vmatprep.subr.bf16.mxu0 %v4765
        %6522 = vmatpush1.bf16.msra.mxu0 %v4764
        %6523 = vmatprep.subr.bf16.mxu0 %v4769
        %6524 = vmatpush1.bf16.msra.mxu0 %v4768
        %6525 = vmatprep.subr.bf16.mxu0 %v4773
        %6526 = vmatpush1.bf16.msra.mxu0 %v4772
        %6527 = vmatprep.subr.bf16.mxu0 %v4777
        %6528 = vmatpush1.bf16.msra.mxu0 %v4776
        %6529 = vmatprep.subr.bf16.mxu0 %v4781
        %6530 = vmatpush1.bf16.msra.mxu0 %v4780
        %6531 = vmatprep.subr.bf16.mxu0 %v4785
        %6532 = vmatpush1.bf16.msra.mxu0 %v4784
        %6533 = vmatprep.subr.bf16.mxu0 %v4789
        %6534 = vmatpush1.bf16.msra.mxu0 %v4788
        %6535 = vmatprep.subr.bf16.mxu0 %v4793
        %6536 = vmatpush1.bf16.msra.mxu0 %v4792
        %6537 = vmatprep.mubr.bf16.mxu0 %v952
        %6538 = vmatmul.mubr.bf16.gmra.mrb[0].mxu0 %v951
        %v6539 = vpop.f32.mrb[0].mxu0
        %v6540 = vadd.f32 %v6499, %v6539
        %v6541 = vpop.f32.mrb[0].mxu0
        %v6542 = vadd.f32 %v6501, %v6541
        %v6543 = vpop.f32.mrb[0].mxu0
        %v6544 = vpop.f32.mrb[0].mxu0
        %6545 = vdwg.mxu0
        %v6550 = vcombine.low %v6048, %v6050
        %v6551 = vcombine.low %v6540, %v6542
        %v6553 = vunpack.c.l.s4 1983009808
        %v6554 = vunpack.c.0.s8 %v6553
        %v6555 = vlaneseq
        %v6556 = vshrl.u32 %v6555, 7
        %v6557 = vsub.s32 %v6554, %v6556
        %v6558 = vrot.slane %v6550, %v6557
        %v6560 = vunpack.c.l.s4 1983009808
        %v6561 = vunpack.c.0.s8 %v6560
        %v6562 = vlaneseq
        %v6563 = vshrl.u32 %v6562, 7
        %v6564 = vsub.s32 %v6561, %v6563
        %v6565 = vrot.slane %v6551, %v6564
        %v6566 = vcombine.low %v6558, %v6565
        %v6568 = vadd.f32 %v953, %v6566
        %6569 = vst [vmem:[#allocation2] sm:$0xff] %v6568
        %p6570 = scmp.eq.s32.totalorder %s30, 3
        // Predicated region
        $region113: #{tpu_custom_call.1} parent=63 // pred_check
          %p6571 = pneg %p6570
        $region114: #{tpu_custom_call.1} parent=63 // pred_check_branch
          %6573 = sbr.rel (%p6571) target = $region116
        $region115: #{tpu_custom_call.1} parent=63 // pred_region
          %v6574 = vld [vmem:[#allocation2] sm:$0xff]
          %v6575 = vld [vmem:[#allocation18] sm:$0xf]
          %v6577 = vlaneseq
          %v6578 = vshrl.u32 %v6577, 7
          %v6579 = vsub.s32 0, %v6578
          %v6580 = vrot.slane %v6575, %v6579
          %v6581 = vlaneseq
          %v6582 = vshrl.u32 %v6581, 7
          %v6583 = vsub.s32 1, %v6582
          %v6584 = vrot.slane %v6575, %v6583
          %v6585 = vlaneseq
          %v6586 = vshrl.u32 %v6585, 7
          %v6587 = vsub.s32 2, %v6586
          %v6588 = vrot.slane %v6575, %v6587
          %v6589 = vlaneseq
          %v6590 = vshrl.u32 %v6589, 7
          %v6591 = vsub.s32 3, %v6590
          %v6592 = vrot.slane %v6575, %v6591
          %v6593 = vcombine.low %v6580, %v6584
          %v6594 = vcombine.low %v6588, %v6592
          %v6596 = vunpack.c.l.s4 1983009808
          %v6597 = vunpack.c.0.s8 %v6596
          %v6598 = vlaneseq
          %v6599 = vshrl.u32 %v6598, 7
          %v6600 = vsub.s32 %v6597, %v6599
          %v6601 = vrot.slane %v6593, %v6600
          %v6603 = vunpack.c.l.s4 1983009808
          %v6604 = vunpack.c.0.s8 %v6603
          %v6605 = vlaneseq
          %v6606 = vshrl.u32 %v6605, 7
          %v6607 = vsub.s32 %v6604, %v6606
          %v6608 = vrot.slane %v6594, %v6607
          %v6609 = vcombine.low %v6601, %v6608
          %v6611 = vadd.f32 %v6574, %v6609
          %v6612 = vmax.f32 %v6611, 0.0
          %v6613 = vld [vmem:[#allocation19] sm:$0xff]
          %v6614 = vld [vmem:[#allocation19 + $0x8] sm:$0xff]
          %v6615 = vld [vmem:[#allocation19 + $0x10] sm:$0xff]
          %v6616 = vld [vmem:[#allocation19 + $0x18] sm:$0xff]
          %v6617 = vld [vmem:[#allocation19 + $0x20] sm:$0xff]
          %v6618 = vld [vmem:[#allocation19 + $0x28] sm:$0xff]
          %v6619 = vld [vmem:[#allocation19 + $0x30] sm:$0xff]
          %v6620 = vld [vmem:[#allocation19 + $0x38] sm:$0xff]
          %v6621 = vld [vmem:[#allocation19 + $0x40] sm:$0xff]
          %v6622 = vld [vmem:[#allocation19 + $0x48] sm:$0xff]
          %v6623 = vld [vmem:[#allocation19 + $0x50] sm:$0xff]
          %v6624 = vld [vmem:[#allocation19 + $0x58] sm:$0xff]
          %v6625 = vld [vmem:[#allocation19 + $0x60] sm:$0xff]
          %v6626 = vld [vmem:[#allocation19 + $0x68] sm:$0xff]
          %v6627 = vld [vmem:[#allocation19 + $0x70] sm:$0xff]
          %v6628 = vld [vmem:[#allocation19 + $0x78] sm:$0xff]
          %v6629 = vld [vmem:[#allocation19 + $0x80] sm:$0xff]
          %v6630 = vld [vmem:[#allocation19 + $0x88] sm:$0xff]
          %v6631 = vld [vmem:[#allocation19 + $0x90] sm:$0xff]
          %v6632 = vld [vmem:[#allocation19 + $0x98] sm:$0xff]
          %v6633 = vld [vmem:[#allocation19 + $0xa0] sm:$0xff]
          %v6634 = vld [vmem:[#allocation19 + $0xa8] sm:$0xff]
          %v6635 = vld [vmem:[#allocation19 + $0xb0] sm:$0xff]
          %v6636 = vld [vmem:[#allocation19 + $0xb8] sm:$0xff]
          %v6637 = vld [vmem:[#allocation19 + $0xc0] sm:$0xff]
          %v6638 = vld [vmem:[#allocation19 + $0xc8] sm:$0xff]
          %v6639 = vld [vmem:[#allocation19 + $0xd0] sm:$0xff]
          %v6640 = vld [vmem:[#allocation19 + $0xd8] sm:$0xff]
          %v6641 = vld [vmem:[#allocation19 + $0xe0] sm:$0xff]
          %v6642 = vld [vmem:[#allocation19 + $0xe8] sm:$0xff]
          %v6643 = vld [vmem:[#allocation19 + $0xf0] sm:$0xff]
          %v6644 = vld [vmem:[#allocation19 + $0xf8] sm:$0xff]
          %v6645 = vld [vmem:[#allocation19 + $0x100] sm:$0xff]
          %v6646 = vld [vmem:[#allocation19 + $0x108] sm:$0xff]
          %v6647 = vld [vmem:[#allocation19 + $0x110] sm:$0xff]
          %v6648 = vld [vmem:[#allocation19 + $0x118] sm:$0xff]
          %v6649 = vld [vmem:[#allocation19 + $0x120] sm:$0xff]
          %v6650 = vld [vmem:[#allocation19 + $0x128] sm:$0xff]
          %v6651 = vld [vmem:[#allocation19 + $0x130] sm:$0xff]
          %v6652 = vld [vmem:[#allocation19 + $0x138] sm:$0xff]
          %v6653 = vld [vmem:[#allocation19 + $0x140] sm:$0xff]
          %v6654 = vld [vmem:[#allocation19 + $0x148] sm:$0xff]
          %v6655 = vld [vmem:[#allocation19 + $0x150] sm:$0xff]
          %v6656 = vld [vmem:[#allocation19 + $0x158] sm:$0xff]
          %v6657 = vld [vmem:[#allocation19 + $0x160] sm:$0xff]
          %v6658 = vld [vmem:[#allocation19 + $0x168] sm:$0xff]
          %v6659 = vld [vmem:[#allocation19 + $0x170] sm:$0xff]
          %v6660 = vld [vmem:[#allocation19 + $0x178] sm:$0xff]
          %v6661 = vld [vmem:[#allocation19 + $0x180] sm:$0xff]
          %v6662 = vld [vmem:[#allocation19 + $0x188] sm:$0xff]
          %v6663 = vld [vmem:[#allocation19 + $0x190] sm:$0xff]
          %v6664 = vld [vmem:[#allocation19 + $0x198] sm:$0xff]
          %v6665 = vld [vmem:[#allocation19 + $0x1a0] sm:$0xff]
          %v6666 = vld [vmem:[#allocation19 + $0x1a8] sm:$0xff]
          %v6667 = vld [vmem:[#allocation19 + $0x1b0] sm:$0xff]
          %v6668 = vld [vmem:[#allocation19 + $0x1b8] sm:$0xff]
          %v6669 = vld [vmem:[#allocation19 + $0x1c0] sm:$0xff]
          %v6670 = vld [vmem:[#allocation19 + $0x1c8] sm:$0xff]
          %v6671 = vld [vmem:[#allocation19 + $0x1d0] sm:$0xff]
          %v6672 = vld [vmem:[#allocation19 + $0x1d8] sm:$0xff]
          %v6673 = vld [vmem:[#allocation19 + $0x1e0] sm:$0xff]
          %v6674 = vld [vmem:[#allocation19 + $0x1e8] sm:$0xff]
          %v6675 = vld [vmem:[#allocation19 + $0x1f0] sm:$0xff]
          %v6676 = vld [vmem:[#allocation19 + $0x1f8] sm:$0xff]
          %v6677 = vld [vmem:[#allocation20] sm:$0x1]
          %v6679 = vlaneseq
          %v6680 = vshrl.u32 %v6679, 7
          %v6681 = vsub.s32 0, %v6680
          %v6682 = vrot.slane %v6677, %v6681
          %v6685 = vcombine.high %v6612, %v6612
          %v6687 = vunpack.c.l.s4 1983009808
          %v6688 = vunpack.c.0.s8 %v6687
          %v6689 = vlaneseq
          %v6690 = vshrl.u32 %v6689, 7
          %v6691 = vsub.s32 %v6688, %v6690
          %v6692 = vrot.slane %v6612, %v6691
          %v6694 = vunpack.c.l.s4 1983009808
          %v6695 = vunpack.c.0.s8 %v6694
          %v6696 = vlaneseq
          %v6697 = vshrl.u32 %v6696, 7
          %v6698 = vsub.s32 %v6695, %v6697
          %v6699 = vrot.slane %v6685, %v6698
          %v6700 = vcombine.high %v6692, %v6692
          %v6701 = vcombine.high %v6699, %v6699
          %6706 = vmatprep.subr.mxu0 0.0
          %6707 = vmatpush1.msra.mxu0 %v6613
          %6708 = vmatprep.subr.mxu0 0.0
          %6709 = vmatpush1.msra.mxu0 %v6614
          %6710 = vmatprep.subr.mxu0 0.0
          %6711 = vmatpush1.msra.mxu0 %v6615
          %6712 = vmatprep.subr.mxu0 0.0
          %6713 = vmatpush1.msra.mxu0 %v6616
          %6714 = vmatprep.subr.mxu0 0.0
          %6715 = vmatpush1.msra.mxu0 %v6617
          %6716 = vmatprep.subr.mxu0 0.0
          %6717 = vmatpush1.msra.mxu0 %v6618
          %6718 = vmatprep.subr.mxu0 0.0
          %6719 = vmatpush1.msra.mxu0 %v6619
          %6720 = vmatprep.subr.mxu0 0.0
          %6721 = vmatpush1.msra.mxu0 %v6620
          %6722 = vmatprep.subr.mxu0 0.0
          %6723 = vmatpush1.msra.mxu0 %v6621
          %6724 = vmatprep.subr.mxu0 0.0
          %6725 = vmatpush1.msra.mxu0 %v6622
          %6726 = vmatprep.subr.mxu0 0.0
          %6727 = vmatpush1.msra.mxu0 %v6623
          %6728 = vmatprep.subr.mxu0 0.0
          %6729 = vmatpush1.msra.mxu0 %v6624
          %6730 = vmatprep.subr.mxu0 0.0
          %6731 = vmatpush1.msra.mxu0 %v6625
          %6732 = vmatprep.subr.mxu0 0.0
          %6733 = vmatpush1.msra.mxu0 %v6626
          %6734 = vmatprep.subr.mxu0 0.0
          %6735 = vmatpush1.msra.mxu0 %v6627
          %6736 = vmatprep.subr.mxu0 0.0
          %6737 = vmatpush1.msra.mxu0 %v6628
          %6738 = vmatprep.subr.mxu0 0.0
          %6739 = vmatpush1.msra.mxu0 %v6629
          %6740 = vmatprep.subr.mxu0 0.0
          %6741 = vmatpush1.msra.mxu0 %v6630
          %6742 = vmatprep.subr.mxu0 0.0
          %6743 = vmatpush1.msra.mxu0 %v6631
          %6744 = vmatprep.subr.mxu0 0.0
          %6745 = vmatpush1.msra.mxu0 %v6632
          %6746 = vmatprep.subr.mxu0 0.0
          %6747 = vmatpush1.msra.mxu0 %v6633
          %6748 = vmatprep.subr.mxu0 0.0
          %6749 = vmatpush1.msra.mxu0 %v6634
          %6750 = vmatprep.subr.mxu0 0.0
          %6751 = vmatpush1.msra.mxu0 %v6635
          %6752 = vmatprep.subr.mxu0 0.0
          %6753 = vmatpush1.msra.mxu0 %v6636
          %6754 = vmatprep.subr.mxu0 0.0
          %6755 = vmatpush1.msra.mxu0 %v6637
          %6756 = vmatprep.subr.mxu0 0.0
          %6757 = vmatpush1.msra.mxu0 %v6638
          %6758 = vmatprep.subr.mxu0 0.0
          %6759 = vmatpush1.msra.mxu0 %v6639
          %6760 = vmatprep.subr.mxu0 0.0
          %6761 = vmatpush1.msra.mxu0 %v6640
          %6762 = vmatprep.subr.mxu0 0.0
          %6763 = vmatpush1.msra.mxu0 %v6641
          %6764 = vmatprep.subr.mxu0 0.0
          %6765 = vmatpush1.msra.mxu0 %v6642
          %6766 = vmatprep.subr.mxu0 0.0
          %6767 = vmatpush1.msra.mxu0 %v6643
          %6768 = vmatprep.subr.mxu0 0.0
          %6769 = vmatpush1.msra.mxu0 %v6644
          %6770 = vmatprep.mubr.f32.mxu0 %v6700
          %6771 = vmatmul.mubr.f32.gmra.mrb[0].mxu0 %v6692
          %v6772 = vpop.f32.mrb[0].mxu0
          %v6773 = vadd.f32 %v6682, %v6772
          %v6774 = vpop.f32.mrb[0].mxu0
          %6775 = vdwg.mxu0
          %6776 = vmatprep.subr.mxu0 0.0
          %6777 = vmatpush1.msra.mxu0 %v6645
          %6778 = vmatprep.subr.mxu0 0.0
          %6779 = vmatpush1.msra.mxu0 %v6646
          %6780 = vmatprep.subr.mxu0 0.0
          %6781 = vmatpush1.msra.mxu0 %v6647
          %6782 = vmatprep.subr.mxu0 0.0
          %6783 = vmatpush1.msra.mxu0 %v6648
          %6784 = vmatprep.subr.mxu0 0.0
          %6785 = vmatpush1.msra.mxu0 %v6649
          %6786 = vmatprep.subr.mxu0 0.0
          %6787 = vmatpush1.msra.mxu0 %v6650
          %6788 = vmatprep.subr.mxu0 0.0
          %6789 = vmatpush1.msra.mxu0 %v6651
          %6790 = vmatprep.subr.mxu0 0.0
          %6791 = vmatpush1.msra.mxu0 %v6652
          %6792 = vmatprep.subr.mxu0 0.0
          %6793 = vmatpush1.msra.mxu0 %v6653
          %6794 = vmatprep.subr.mxu0 0.0
          %6795 = vmatpush1.msra.mxu0 %v6654
          %6796 = vmatprep.subr.mxu0 0.0
          %6797 = vmatpush1.msra.mxu0 %v6655
          %6798 = vmatprep.subr.mxu0 0.0
          %6799 = vmatpush1.msra.mxu0 %v6656
          %6800 = vmatprep.subr.mxu0 0.0
          %6801 = vmatpush1.msra.mxu0 %v6657
          %6802 = vmatprep.subr.mxu0 0.0
          %6803 = vmatpush1.msra.mxu0 %v6658
          %6804 = vmatprep.subr.mxu0 0.0
          %6805 = vmatpush1.msra.mxu0 %v6659
          %6806 = vmatprep.subr.mxu0 0.0
          %6807 = vmatpush1.msra.mxu0 %v6660
          %6808 = vmatprep.subr.mxu0 0.0
          %6809 = vmatpush1.msra.mxu0 %v6661
          %6810 = vmatprep.subr.mxu0 0.0
          %6811 = vmatpush1.msra.mxu0 %v6662
          %6812 = vmatprep.subr.mxu0 0.0
          %6813 = vmatpush1.msra.mxu0 %v6663
          %6814 = vmatprep.subr.mxu0 0.0
          %6815 = vmatpush1.msra.mxu0 %v6664
          %6816 = vmatprep.subr.mxu0 0.0
          %6817 = vmatpush1.msra.mxu0 %v6665
          %6818 = vmatprep.subr.mxu0 0.0
          %6819 = vmatpush1.msra.mxu0 %v6666
          %6820 = vmatprep.subr.mxu0 0.0
          %6821 = vmatpush1.msra.mxu0 %v6667
          %6822 = vmatprep.subr.mxu0 0.0
          %6823 = vmatpush1.msra.mxu0 %v6668
          %6824 = vmatprep.subr.mxu0 0.0
          %6825 = vmatpush1.msra.mxu0 %v6669
          %6826 = vmatprep.subr.mxu0 0.0
          %6827 = vmatpush1.msra.mxu0 %v6670
          %6828 = vmatprep.subr.mxu0 0.0
          %6829 = vmatpush1.msra.mxu0 %v6671
          %6830 = vmatprep.subr.mxu0 0.0
          %6831 = vmatpush1.msra.mxu0 %v6672
          %6832 = vmatprep.subr.mxu0 0.0
          %6833 = vmatpush1.msra.mxu0 %v6673
          %6834 = vmatprep.subr.mxu0 0.0
          %6835 = vmatpush1.msra.mxu0 %v6674
          %6836 = vmatprep.subr.mxu0 0.0
          %6837 = vmatpush1.msra.mxu0 %v6675
          %6838 = vmatprep.subr.mxu0 0.0
          %6839 = vmatpush1.msra.mxu0 %v6676
          %6840 = vmatprep.mubr.f32.mxu0 %v6701
          %6841 = vmatmul.mubr.f32.gmra.mrb[0].mxu0 %v6699
          %v6842 = vpop.f32.mrb[0].mxu0
          %v6843 = vadd.f32 %v6773, %v6842
          %v6844 = vpop.f32.mrb[0].mxu0
          %6845 = vdwg.mxu0
          %6846 = vst [vmem:[#allocation22] sm:$0x3] %v6843
        $region116: #{tpu_custom_call.1} parent=63 // pred_fallthru
          _
        // Predicated region
        $region117: #{tpu_custom_call.1} parent=63 // pred_check
          %p6847 = pneg %p279
        $region118: #{tpu_custom_call.1} parent=63 // pred_check_branch
          %6849 = sbr.rel (%p6847) target = $region120
        $region119: #{tpu_custom_call.1} parent=63 // pred_region
          %s6851 = ssub.s32 32, 32
          %6852 = vsyncadd [#allocation5], %s6851
          %s6854 = sshll.u32 [#allocation22], 4
          %s6855 = int_to_ptr.vmem [resolvable:$true] %s6854
          %6857 = dma.vmem_to_hbm [thread:$0]  %s6855, 32, %s11, [#allocation5]
        $region120: #{tpu_custom_call.1} parent=63 // pred_fallthru
          _
        // Predicated region
        $region121: #{tpu_custom_call.1} parent=63 // pred_check
          %p6858 = pneg %p279
        $region122: #{tpu_custom_call.1} parent=63 // pred_check_branch
          %6860 = sbr.rel (%p6858) target = $region124
        $region123: #{tpu_custom_call.1} parent=63 // pred_region
          %6861 = dma.done [#allocation5], 32
        $region124: #{tpu_custom_call.1} parent=63 // pred_fallthru
          _
      $region64: #{tpu_custom_call.1} parent=5 // pred_fallthru
        _
      %p6862 = scmp.le.s32.totalorder 2, %s25
      // Predicated region
      $region125: #{tpu_custom_call.1} parent=5 // pred_check
        %p6863 = pneg %p6862
      $region126: #{tpu_custom_call.1} parent=5 // pred_check_branch
        %6865 = sbr.rel (%p6863) target = $region128
      $region127: #{tpu_custom_call.1} parent=5 // pred_region
        %s6866 = ssub.s32 %s25, 2
      $region128: #{tpu_custom_call.1} parent=5 // pred_fallthru
        _
    $region6: #{tpu_custom_call.1} parent=1 // loop_footer
      %s29 = sadd.s32 1, %s25
    $region7: #{tpu_custom_call.1} parent=1 // loop_footer_branch
      %24 = sbr.rel target = $region3
    $region8: #{tpu_custom_call.1} parent=1 // loop_exit
      _
    %6867 = vsyncpa [#allocation4], 1
    %s6868 = scalar_lea.sflag [#allocation4], 1
    %6869 = vsyncpa %s6868, 1
    %6870 = vsyncpa [#allocation9], 1
    %6871 = vsyncpa [#allocation12], 1
    %6872 = vsyncpa [#allocation21], 1
    %6873 = vsyncpa [#allocation5], 1
    %s6874 = scalar_lea.sflag [#allocation5], 1
    %6875 = vsyncpa %s6874, 1
    %6876 = vsyncpa [#allocation6], 1
    %s6877 = scalar_lea.sflag [#allocation6], 1
    %6878 = vsyncpa %s6877, 1
    %6879 = vsyncpa [#allocation16], 1
    %6880 = vsyncpa [#allocation7], 1
    %s6881 = scalar_lea.sflag [#allocation7], 1
    %6882 = vsyncpa %s6881, 1

</llo_original>
